<compile_context>
chip_gen: v7x
topology: tpu7x:2x2x1
jax: 0.10.0
libtpu: 0.0.40
codegen_flags: <defaults>
</compile_context>

<pallas_src>
import functools

import jax
import jax.numpy as jnp
import numpy as np
from jax.experimental import pallas as pl
from jax.experimental.pallas import tpu as pltpu


def _sigmoid(x):
    # sigmoid(x) == 0.5*tanh(x/2) + 0.5 exactly; tanh lowers to the EUP slot
    # (its own bundle slot) instead of exp + VPU divide on the serial chain.
    return 0.5 * jnp.tanh(0.5 * x) + 0.5


def _lstm_seq_kernel(y_ref, wx_ref, wh_ref, lcif_ref, lco_ref, lw_ref, lb_ref,
                     out_ref, *, b_rows, t_steps, hidden, gate_pad):
    H = hidden
    GP = gate_pad  # 128-lane-aligned per-gate column block

    # (1) Hoisted input projections: all B*T timesteps in one matmul (off the
    #     serial chain).  wx is lane-padded so every gate slab starts at a
    #     128-aligned lane offset; slabs are extracted ONCE before the loop.
    gx = jnp.dot(y_ref[...], wx_ref[...],
                 preferred_element_type=jnp.float32)              # (B*T, 4*GP)
    gx_i = gx[:, 0 * GP:0 * GP + H]
    gx_f = gx[:, 1 * GP:1 * GP + H]
    gx_g = gx[:, 2 * GP:2 * GP + H]
    gx_o = gx[:, 3 * GP:3 * GP + H]

    # Constant recurrent weights, loaded once; bf16 for single-pass MXU.
    w_h = wh_ref[...]       # (H, 4*GP) bf16: [Wh_i | Wh_f | Wh_g | Wh_o] lane-padded
    w_cif = lcif_ref[...]   # (H, 2*GP) bf16: [Lc_i | Lc_f]               lane-padded
    w_co = lco_ref[...]     # (H, H)    bf16: Lc_o (peephole on NEW cell state)

    h = jnp.zeros((1, H), jnp.float32)
    c = jnp.zeros((1, H), jnp.float32)

    h_last = []
    # (2) Fully-unrolled serial recurrence; h/c carry across batch rows,
    #     exactly like the PyTorch forward (which never resets them).
    for b in range(b_rows):
        for t in range(t_steps):
            idx = b * t_steps + t

            # Two independent MXU pushes (no lane-axis concat on the chain):
            # everything depending on h (all 4 gates) and on old c (i, f).
            ph = jnp.dot(h.astype(jnp.bfloat16), w_h,
                         preferred_element_type=jnp.float32)      # (1, 4*GP)
            pc = jnp.dot(c.astype(jnp.bfloat16), w_cif,
                         preferred_element_type=jnp.float32)      # (1, 2*GP)

            # Gate slices are at 128-aligned lane offsets -> no XLU rotates.
            i_g = _sigmoid(gx_i[idx:idx + 1, :] + ph[:, 0:H] + pc[:, 0:H])
            f_g = _sigmoid(gx_f[idx:idx + 1, :] + ph[:, GP:GP + H]
                           + pc[:, GP:GP + H])
            k_g = jnp.tanh(gx_g[idx:idx + 1, :] + ph[:, 2 * GP:2 * GP + H])
            c = k_g * i_g + f_g * c

            # Only the o-gate peephole must wait for c_new: one small tail dot.
            po = jnp.dot(c.astype(jnp.bfloat16), w_co,
                         preferred_element_type=jnp.float32)      # (1, H)
            o_g = _sigmoid(gx_o[idx:idx + 1, :] + ph[:, 3 * GP:3 * GP + H] + po)
            h = o_g * jnp.tanh(c)
        h_last.append(h)

    # (3) Deferred classifier: one (B, H) @ (H, C) matmul + bias, single store.
    h_fin = jnp.concatenate(h_last, axis=0)                       # (B, H)
    out_ref[...] = (jnp.dot(h_fin, lw_ref[...],
                            preferred_element_type=jnp.float32)
                    + lb_ref[...])


def sequence_forward(x, params):
    """Pallas equivalent of Sequence.forward(x, future=0) -> (B, num_classes)."""
    B, T, _ = x.shape
    wx, wh, lc, wo, bo = (params["wx"], params["wh"], params["lc"],
                          params["wo"], params["bo"])
    f_in = wx.shape[1]
    H = wx.shape[2]
    C = wo.shape[1]
    GP = ((H + 127) // 128) * 128   # per-gate column block, 128-lane aligned

    # Wrapper-side layout plumbing (one-time XLA ops, off the serial chain):
    # keep only the first F_IN features of each timestep and flatten to (B*T, F_IN).
    y2d = x[:, :, :f_in].reshape(B * T, f_in).astype(jnp.float32)

    def pad_cols(w):
        # (In, H) -> (In, GP): gate weights in lanes [0:H], zeros in [H:GP].
        return jnp.pad(w, ((0, 0), (0, GP - H)))

    # Input-projection weights, lane-padded per gate: (F_IN, 4*GP), order [i|f|g|o].
    wx_pad = jnp.concatenate([pad_cols(wx[k]) for k in range(4)],
                             axis=1).astype(jnp.float32)

    # Recurrent weights (h-dependent part of ALL four gates, incl. o): (H, 4*GP), bf16.
    wh_pad = jnp.concatenate([pad_cols(wh[k]) for k in range(4)],
                             axis=1).astype(jnp.bfloat16)

    # Peepholes on the OLD cell state (i, f): (H, 2*GP), bf16.
    lcif_pad = jnp.concatenate([pad_cols(lc[0]), pad_cols(lc[1])],
                               axis=1).astype(jnp.bfloat16)

    # Peephole on the NEW cell state (o): (H, H), bf16 — the only c_new-dependent dot.
    lco = lc[2].astype(jnp.bfloat16)

    kernel = functools.partial(_lstm_seq_kernel, b_rows=B, t_steps=T,
                               hidden=H, gate_pad=GP)

    return pl.pallas_call(
        kernel,
        out_shape=jax.ShapeDtypeStruct((B, C), jnp.float32),
        grid_spec=pltpu.PrefetchScalarGridSpec(
            num_scalar_prefetch=0,
            grid=(1,),  # strictly sequential recurrence -> single invocation
            in_specs=[
                pl.BlockSpec((B * T, f_in), lambda i: (0, 0)),    # flattened inputs
                pl.BlockSpec(wx_pad.shape, lambda i: (0, 0)),     # Wx  (F_IN, 4*GP)
                pl.BlockSpec(wh_pad.shape, lambda i: (0, 0)),     # Wh  (H, 4*GP)
                pl.BlockSpec(lcif_pad.shape, lambda i: (0, 0)),   # Lc_if (H, 2*GP)
                pl.BlockSpec(lco.shape, lambda i: (0, 0)),        # Lc_o  (H, H)
                pl.BlockSpec(wo.shape, lambda i: (0, 0)),         # classifier W (H, C)
                pl.BlockSpec(bo.shape, lambda i: (0, 0)),         # classifier b (1, C)
            ],
            out_specs=pl.BlockSpec((B, C), lambda i: (0, 0)),
        ),
        compiler_params=pltpu.CompilerParams(
            dimension_semantics=("arbitrary",)),
    )(y2d, wx_pad, wh_pad, lcif_pad, lco, wo, bo)


def init_params(key, f_in, hidden, num_classes):
    """Deterministic params, mirroring nn.Linear default init U(-1/sqrt(in), 1/sqrt(in))."""
    ks = jax.random.split(key, 13)

    def lin(k, fan_in, shape):
        bound = 1.0 / np.sqrt(fan_in)
        return jax.random.uniform(k, shape, jnp.float32, -bound, bound)

    wx = jnp.stack([lin(ks[0], f_in, (f_in, hidden)),
                    lin(ks[1], f_in, (f_in, hidden)),
                    lin(ks[2], f_in, (f_in, hidden)),
                    lin(ks[3], f_in, (f_in, hidden))])          # (4, F_IN, H) [i,f,g,o]
    wh = jnp.stack([lin(ks[4], hidden, (hidden, hidden)),
                    lin(ks[5], hidden, (hidden, hidden)),
                    lin(ks[6], hidden, (hidden, hidden)),
                    lin(ks[7], hidden, (hidden, hidden))])      # (4, H, H)    [i,f,g,o]
    lc = jnp.stack([lin(ks[8], hidden, (hidden, hidden)),
                    lin(ks[9], hidden, (hidden, hidden)),
                    lin(ks[10], hidden, (hidden, hidden))])     # (3, H, H)    [i,f,o]
    wo = lin(ks[11], hidden, (hidden, num_classes))             # (H, C)
    bo = lin(ks[12], hidden, (1, num_classes))                  # (1, C)
    return dict(wx=wx, wh=wh, lc=lc, wo=wo, bo=bo)


def sequence_forward_ref(x, params):
    """Pure-JAX reference matching the PyTorch forward (regLSTM, future=0)."""
    B, T, _ = x.shape
    wx, wh, lc, wo, bo = (params["wx"], params["wh"], params["lc"],
                          params["wo"], params["bo"])
    f_in = wx.shape[1]
    H = wx.shape[2]
    h = jnp.zeros((1, H), jnp.float32)
    c = jnp.zeros((1, H), jnp.float32)
    outs = []
    for b in range(B):
        for t in range(T):
            y = x[b, t, :f_in][None, :]
            i_g = jax.nn.sigmoid(y @ wx[0] + h @ wh[0] + c @ lc[0])
            f_g = jax.nn.sigmoid(y @ wx[1] + h @ wh[1] + c @ lc[1])
            k_g = jnp.tanh(y @ wx[2] + h @ wh[2])
            c = k_g * i_g + f_g * c
            o_g = jax.nn.sigmoid(y @ wx[3] + h @ wh[3] + c @ lc[2])
            h = o_g * jnp.tanh(c)
        outs.append(h @ wo + bo)
    return jnp.concatenate(outs, axis=0)


if __name__ == "__main__":
    # small, self-consistent hyperparameters
    inputvar = ["u", "v", "w"]          # len(inputvar) = 3
    nk = 2
    stshy = 1
    B = 2                                # number of outer "rows" in input
    T = 8                                # seq_length (inner timesteps)
    F = len(inputvar) * nk + 1 + stshy   # 8  (full feature row width)
    F_IN = len(inputvar) + stshy         # 4  (= input_size used by the cell)
    HIDDEN = 32
    NUM_CLASSES = 3

    key = jax.random.PRNGKey(0)
    kx, kp = jax.random.split(key)
    x = jax.random.normal(kx, (B, T, F), dtype=jnp.float32)
    params = init_params(kp, F_IN, HIDDEN, NUM_CLASSES)

    out = sequence_forward(x, params)
    out = jax.block_until_ready(out)

    ref = sequence_forward_ref(x, params)
    # Tolerance accounts for bf16 single-pass MXU operands on the recurrent dots
    # (state and elementwise math stay f32).
    np.testing.assert_allclose(np.asarray(out), np.asarray(ref),
                               rtol=1e-2, atol=1e-2)

    # TODO(synk): mgate='mLSTM(tanh)' branch and future>0 autoregressive rollout
    # are not implemented (regLSTM, future=0 semantics only).
    print("KERNEL_OK")
</pallas_src>

<mosaic_0001>
module attributes {stable_mosaic.version = 11 : i64} {
  func.func @_lstm_seq_kernel(%arg0: i32, %arg1: memref<16x4xf32, #tpu.memory_space<vmem>>, %arg2: memref<4x512xf32, #tpu.memory_space<vmem>>, %arg3: memref<32x512xbf16, #tpu.memory_space<vmem>>, %arg4: memref<32x256xbf16, #tpu.memory_space<vmem>>, %arg5: memref<32x32xbf16, #tpu.memory_space<vmem>>, %arg6: memref<32x3xf32, #tpu.memory_space<vmem>>, %arg7: memref<1x3xf32, #tpu.memory_space<vmem>>, %arg8: memref<2x3xf32, #tpu.memory_space<vmem>>) attributes {dimension_semantics = [#tpu.dimension_semantics<arbitrary>], iteration_bounds = array<i64: 1>, scalar_prefetch = 0 : i64, scratch_operands = 0 : i64, tpu.core_type = #tpu.core_type<tc>, window_params = [{pipeline_mode = #tpu.pipeline_mode<synchronous>, transform_indices = @transform_0, window_bounds = array<i64: 16, 4>}, {pipeline_mode = #tpu.pipeline_mode<synchronous>, transform_indices = @transform_1, window_bounds = array<i64: 4, 512>}, {pipeline_mode = #tpu.pipeline_mode<synchronous>, transform_indices = @transform_2, window_bounds = array<i64: 32, 512>}, {pipeline_mode = #tpu.pipeline_mode<synchronous>, transform_indices = @transform_3, window_bounds = array<i64: 32, 256>}, {pipeline_mode = #tpu.pipeline_mode<synchronous>, transform_indices = @transform_4, window_bounds = array<i64: 32, 32>}, {pipeline_mode = #tpu.pipeline_mode<synchronous>, transform_indices = @transform_5, window_bounds = array<i64: 32, 3>}, {pipeline_mode = #tpu.pipeline_mode<synchronous>, transform_indices = @transform_6, window_bounds = array<i64: 1, 3>}, {pipeline_mode = #tpu.pipeline_mode<synchronous>, transform_indices = @transform_7, window_bounds = array<i64: 2, 3>}]} {
    %c0 = arith.constant 0 : index
    %c0_0 = arith.constant 0 : index
    %0 = vector.load %arg1[%c0, %c0_0] : memref<16x4xf32, #tpu.memory_space<vmem>>, vector<16x4xf32>
    %c0_1 = arith.constant 0 : index
    %c0_2 = arith.constant 0 : index
    %1 = vector.load %arg2[%c0_1, %c0_2] : memref<4x512xf32, #tpu.memory_space<vmem>>, vector<4x512xf32>
    %cst = arith.constant dense<0.000000e+00> : vector<16x512xf32>
    %2 = tpu.matmul %0, %1, %cst {dimension_numbers = #tpu.dot_dimension_numbers<[1], [0], [0], [1], [0, 0, 1, 1], [], []>} : vector<16x4xf32>, vector<4x512xf32>, vector<16x512xf32> -> vector<16x512xf32>
    %3 = vector.extract_strided_slice %2 {offsets = [0, 0], sizes = [16, 32], strides = [1, 1]} : vector<16x512xf32> to vector<16x32xf32>
    %4 = vector.extract_strided_slice %2 {offsets = [0, 128], sizes = [16, 32], strides = [1, 1]} : vector<16x512xf32> to vector<16x32xf32>
    %5 = vector.extract_strided_slice %2 {offsets = [0, 256], sizes = [16, 32], strides = [1, 1]} : vector<16x512xf32> to vector<16x32xf32>
    %6 = vector.extract_strided_slice %2 {offsets = [0, 384], sizes = [16, 32], strides = [1, 1]} : vector<16x512xf32> to vector<16x32xf32>
    %c0_3 = arith.constant 0 : index
    %c0_4 = arith.constant 0 : index
    %7 = vector.load %arg3[%c0_3, %c0_4] : memref<32x512xbf16, #tpu.memory_space<vmem>>, vector<32x512xbf16>
    %c0_5 = arith.constant 0 : index
    %c0_6 = arith.constant 0 : index
    %8 = vector.load %arg4[%c0_5, %c0_6] : memref<32x256xbf16, #tpu.memory_space<vmem>>, vector<32x256xbf16>
    %c0_7 = arith.constant 0 : index
    %c0_8 = arith.constant 0 : index
    %9 = vector.load %arg5[%c0_7, %c0_8] : memref<32x32xbf16, #tpu.memory_space<vmem>>, vector<32x32xbf16>
    %cst_9 = arith.constant 0.000000e+00 : f32
    %10 = vector.broadcast %cst_9 : f32 to vector<1x32xf32>
    %cst_10 = arith.constant 0.000000e+00 : f32
    %11 = vector.broadcast %cst_10 : f32 to vector<1x32xf32>
    %12 = arith.truncf %10 : vector<1x32xf32> to vector<1x32xbf16>
    %cst_11 = arith.constant dense<0.000000e+00> : vector<1x512xf32>
    %13 = tpu.matmul %12, %7, %cst_11 {dimension_numbers = #tpu.dot_dimension_numbers<[1], [0], [0], [1], [0, 0, 1, 1], [], []>} : vector<1x32xbf16>, vector<32x512xbf16>, vector<1x512xf32> -> vector<1x512xf32>
    %14 = arith.truncf %11 : vector<1x32xf32> to vector<1x32xbf16>
    %cst_12 = arith.constant dense<0.000000e+00> : vector<1x256xf32>
    %15 = tpu.matmul %14, %8, %cst_12 {dimension_numbers = #tpu.dot_dimension_numbers<[1], [0], [0], [1], [0, 0, 1, 1], [], []>} : vector<1x32xbf16>, vector<32x256xbf16>, vector<1x256xf32> -> vector<1x256xf32>
    %16 = vector.extract_strided_slice %3 {offsets = [0, 0], sizes = [1, 32], strides = [1, 1]} : vector<16x32xf32> to vector<1x32xf32>
    %17 = vector.extract_strided_slice %13 {offsets = [0, 0], sizes = [1, 32], strides = [1, 1]} : vector<1x512xf32> to vector<1x32xf32>
    %18 = arith.addf %16, %17 : vector<1x32xf32>
    %19 = vector.extract_strided_slice %15 {offsets = [0, 0], sizes = [1, 32], strides = [1, 1]} : vector<1x256xf32> to vector<1x32xf32>
    %20 = arith.addf %18, %19 : vector<1x32xf32>
    %cst_13 = arith.constant 5.000000e-01 : f32
    %21 = vector.broadcast %cst_13 : f32 to vector<1x32xf32>
    %22 = arith.mulf %21, %20 : vector<1x32xf32>
    %23 = math.tanh %22 : vector<1x32xf32>
    %cst_14 = arith.constant 5.000000e-01 : f32
    %24 = vector.broadcast %cst_14 : f32 to vector<1x32xf32>
    %25 = arith.mulf %24, %23 : vector<1x32xf32>
    %cst_15 = arith.constant 5.000000e-01 : f32
    %26 = vector.broadcast %cst_15 : f32 to vector<1x32xf32>
    %27 = arith.addf %25, %26 : vector<1x32xf32>
    %28 = vector.extract_strided_slice %4 {offsets = [0, 0], sizes = [1, 32], strides = [1, 1]} : vector<16x32xf32> to vector<1x32xf32>
    %29 = vector.extract_strided_slice %13 {offsets = [0, 128], sizes = [1, 32], strides = [1, 1]} : vector<1x512xf32> to vector<1x32xf32>
    %30 = arith.addf %28, %29 : vector<1x32xf32>
    %31 = vector.extract_strided_slice %15 {offsets = [0, 128], sizes = [1, 32], strides = [1, 1]} : vector<1x256xf32> to vector<1x32xf32>
    %32 = arith.addf %30, %31 : vector<1x32xf32>
    %cst_16 = arith.constant 5.000000e-01 : f32
    %33 = vector.broadcast %cst_16 : f32 to vector<1x32xf32>
    %34 = arith.mulf %33, %32 : vector<1x32xf32>
    %35 = math.tanh %34 : vector<1x32xf32>
    %cst_17 = arith.constant 5.000000e-01 : f32
    %36 = vector.broadcast %cst_17 : f32 to vector<1x32xf32>
    %37 = arith.mulf %36, %35 : vector<1x32xf32>
    %cst_18 = arith.constant 5.000000e-01 : f32
    %38 = vector.broadcast %cst_18 : f32 to vector<1x32xf32>
    %39 = arith.addf %37, %38 : vector<1x32xf32>
    %40 = vector.extract_strided_slice %5 {offsets = [0, 0], sizes = [1, 32], strides = [1, 1]} : vector<16x32xf32> to vector<1x32xf32>
    %41 = vector.extract_strided_slice %13 {offsets = [0, 256], sizes = [1, 32], strides = [1, 1]} : vector<1x512xf32> to vector<1x32xf32>
    %42 = arith.addf %40, %41 : vector<1x32xf32>
    %43 = math.tanh %42 : vector<1x32xf32>
    %44 = arith.mulf %43, %27 : vector<1x32xf32>
    %45 = arith.mulf %39, %11 : vector<1x32xf32>
    %46 = arith.addf %44, %45 : vector<1x32xf32>
    %47 = arith.truncf %46 : vector<1x32xf32> to vector<1x32xbf16>
    %cst_19 = arith.constant dense<0.000000e+00> : vector<1x32xf32>
    %48 = tpu.matmul %47, %9, %cst_19 {dimension_numbers = #tpu.dot_dimension_numbers<[1], [0], [0], [1], [0, 0, 1, 1], [], []>} : vector<1x32xbf16>, vector<32x32xbf16>, vector<1x32xf32> -> vector<1x32xf32>
    %49 = vector.extract_strided_slice %6 {offsets = [0, 0], sizes = [1, 32], strides = [1, 1]} : vector<16x32xf32> to vector<1x32xf32>
    %50 = vector.extract_strided_slice %13 {offsets = [0, 384], sizes = [1, 32], strides = [1, 1]} : vector<1x512xf32> to vector<1x32xf32>
    %51 = arith.addf %49, %50 : vector<1x32xf32>
    %52 = arith.addf %51, %48 : vector<1x32xf32>
    %cst_20 = arith.constant 5.000000e-01 : f32
    %53 = vector.broadcast %cst_20 : f32 to vector<1x32xf32>
    %54 = arith.mulf %53, %52 : vector<1x32xf32>
    %55 = math.tanh %54 : vector<1x32xf32>
    %cst_21 = arith.constant 5.000000e-01 : f32
    %56 = vector.broadcast %cst_21 : f32 to vector<1x32xf32>
    %57 = arith.mulf %56, %55 : vector<1x32xf32>
    %cst_22 = arith.constant 5.000000e-01 : f32
    %58 = vector.broadcast %cst_22 : f32 to vector<1x32xf32>
    %59 = arith.addf %57, %58 : vector<1x32xf32>
    %60 = math.tanh %46 : vector<1x32xf32>
    %61 = arith.mulf %59, %60 : vector<1x32xf32>
    %62 = arith.truncf %61 : vector<1x32xf32> to vector<1x32xbf16>
    %cst_23 = arith.constant dense<0.000000e+00> : vector<1x512xf32>
    %63 = tpu.matmul %62, %7, %cst_23 {dimension_numbers = #tpu.dot_dimension_numbers<[1], [0], [0], [1], [0, 0, 1, 1], [], []>} : vector<1x32xbf16>, vector<32x512xbf16>, vector<1x512xf32> -> vector<1x512xf32>
    %64 = arith.truncf %46 : vector<1x32xf32> to vector<1x32xbf16>
    %cst_24 = arith.constant dense<0.000000e+00> : vector<1x256xf32>
    %65 = tpu.matmul %64, %8, %cst_24 {dimension_numbers = #tpu.dot_dimension_numbers<[1], [0], [0], [1], [0, 0, 1, 1], [], []>} : vector<1x32xbf16>, vector<32x256xbf16>, vector<1x256xf32> -> vector<1x256xf32>
    %66 = vector.extract_strided_slice %3 {offsets = [1, 0], sizes = [1, 32], strides = [1, 1]} : vector<16x32xf32> to vector<1x32xf32>
    %67 = vector.extract_strided_slice %63 {offsets = [0, 0], sizes = [1, 32], strides = [1, 1]} : vector<1x512xf32> to vector<1x32xf32>
    %68 = arith.addf %66, %67 : vector<1x32xf32>
    %69 = vector.extract_strided_slice %65 {offsets = [0, 0], sizes = [1, 32], strides = [1, 1]} : vector<1x256xf32> to vector<1x32xf32>
    %70 = arith.addf %68, %69 : vector<1x32xf32>
    %cst_25 = arith.constant 5.000000e-01 : f32
    %71 = vector.broadcast %cst_25 : f32 to vector<1x32xf32>
    %72 = arith.mulf %71, %70 : vector<1x32xf32>
    %73 = math.tanh %72 : vector<1x32xf32>
    %cst_26 = arith.constant 5.000000e-01 : f32
    %74 = vector.broadcast %cst_26 : f32 to vector<1x32xf32>
    %75 = arith.mulf %74, %73 : vector<1x32xf32>
    %cst_27 = arith.constant 5.000000e-01 : f32
    %76 = vector.broadcast %cst_27 : f32 to vector<1x32xf32>
    %77 = arith.addf %75, %76 : vector<1x32xf32>
    %78 = vector.extract_strided_slice %4 {offsets = [1, 0], sizes = [1, 32], strides = [1, 1]} : vector<16x32xf32> to vector<1x32xf32>
    %79 = vector.extract_strided_slice %63 {offsets = [0, 128], sizes = [1, 32], strides = [1, 1]} : vector<1x512xf32> to vector<1x32xf32>
    %80 = arith.addf %78, %79 : vector<1x32xf32>
    %81 = vector.extract_strided_slice %65 {offsets = [0, 128], sizes = [1, 32], strides = [1, 1]} : vector<1x256xf32> to vector<1x32xf32>
    %82 = arith.addf %80, %81 : vector<1x32xf32>
    %cst_28 = arith.constant 5.000000e-01 : f32
    %83 = vector.broadcast %cst_28 : f32 to vector<1x32xf32>
    %84 = arith.mulf %83, %82 : vector<1x32xf32>
    %85 = math.tanh %84 : vector<1x32xf32>
    %cst_29 = arith.constant 5.000000e-01 : f32
    %86 = vector.broadcast %cst_29 : f32 to vector<1x32xf32>
    %87 = arith.mulf %86, %85 : vector<1x32xf32>
    %cst_30 = arith.constant 5.000000e-01 : f32
    %88 = vector.broadcast %cst_30 : f32 to vector<1x32xf32>
    %89 = arith.addf %87, %88 : vector<1x32xf32>
    %90 = vector.extract_strided_slice %5 {offsets = [1, 0], sizes = [1, 32], strides = [1, 1]} : vector<16x32xf32> to vector<1x32xf32>
    %91 = vector.extract_strided_slice %63 {offsets = [0, 256], sizes = [1, 32], strides = [1, 1]} : vector<1x512xf32> to vector<1x32xf32>
    %92 = arith.addf %90, %91 : vector<1x32xf32>
    %93 = math.tanh %92 : vector<1x32xf32>
    %94 = arith.mulf %93, %77 : vector<1x32xf32>
    %95 = arith.mulf %89, %46 : vector<1x32xf32>
    %96 = arith.addf %94, %95 : vector<1x32xf32>
    %97 = arith.truncf %96 : vector<1x32xf32> to vector<1x32xbf16>
    %cst_31 = arith.constant dense<0.000000e+00> : vector<1x32xf32>
    %98 = tpu.matmul %97, %9, %cst_31 {dimension_numbers = #tpu.dot_dimension_numbers<[1], [0], [0], [1], [0, 0, 1, 1], [], []>} : vector<1x32xbf16>, vector<32x32xbf16>, vector<1x32xf32> -> vector<1x32xf32>
    %99 = vector.extract_strided_slice %6 {offsets = [1, 0], sizes = [1, 32], strides = [1, 1]} : vector<16x32xf32> to vector<1x32xf32>
    %100 = vector.extract_strided_slice %63 {offsets = [0, 384], sizes = [1, 32], strides = [1, 1]} : vector<1x512xf32> to vector<1x32xf32>
    %101 = arith.addf %99, %100 : vector<1x32xf32>
    %102 = arith.addf %101, %98 : vector<1x32xf32>
    %cst_32 = arith.constant 5.000000e-01 : f32
    %103 = vector.broadcast %cst_32 : f32 to vector<1x32xf32>
    %104 = arith.mulf %103, %102 : vector<1x32xf32>
    %105 = math.tanh %104 : vector<1x32xf32>
    %cst_33 = arith.constant 5.000000e-01 : f32
    %106 = vector.broadcast %cst_33 : f32 to vector<1x32xf32>
    %107 = arith.mulf %106, %105 : vector<1x32xf32>
    %cst_34 = arith.constant 5.000000e-01 : f32
    %108 = vector.broadcast %cst_34 : f32 to vector<1x32xf32>
    %109 = arith.addf %107, %108 : vector<1x32xf32>
    %110 = math.tanh %96 : vector<1x32xf32>
    %111 = arith.mulf %109, %110 : vector<1x32xf32>
    %112 = arith.truncf %111 : vector<1x32xf32> to vector<1x32xbf16>
    %cst_35 = arith.constant dense<0.000000e+00> : vector<1x512xf32>
    %113 = tpu.matmul %112, %7, %cst_35 {dimension_numbers = #tpu.dot_dimension_numbers<[1], [0], [0], [1], [0, 0, 1, 1], [], []>} : vector<1x32xbf16>, vector<32x512xbf16>, vector<1x512xf32> -> vector<1x512xf32>
    %114 = arith.truncf %96 : vector<1x32xf32> to vector<1x32xbf16>
    %cst_36 = arith.constant dense<0.000000e+00> : vector<1x256xf32>
    %115 = tpu.matmul %114, %8, %cst_36 {dimension_numbers = #tpu.dot_dimension_numbers<[1], [0], [0], [1], [0, 0, 1, 1], [], []>} : vector<1x32xbf16>, vector<32x256xbf16>, vector<1x256xf32> -> vector<1x256xf32>
    %116 = vector.extract_strided_slice %3 {offsets = [2, 0], sizes = [1, 32], strides = [1, 1]} : vector<16x32xf32> to vector<1x32xf32>
    %117 = vector.extract_strided_slice %113 {offsets = [0, 0], sizes = [1, 32], strides = [1, 1]} : vector<1x512xf32> to vector<1x32xf32>
    %118 = arith.addf %116, %117 : vector<1x32xf32>
    %119 = vector.extract_strided_slice %115 {offsets = [0, 0], sizes = [1, 32], strides = [1, 1]} : vector<1x256xf32> to vector<1x32xf32>
    %120 = arith.addf %118, %119 : vector<1x32xf32>
    %cst_37 = arith.constant 5.000000e-01 : f32
    %121 = vector.broadcast %cst_37 : f32 to vector<1x32xf32>
    %122 = arith.mulf %121, %120 : vector<1x32xf32>
    %123 = math.tanh %122 : vector<1x32xf32>
    %cst_38 = arith.constant 5.000000e-01 : f32
    %124 = vector.broadcast %cst_38 : f32 to vector<1x32xf32>
    %125 = arith.mulf %124, %123 : vector<1x32xf32>
    %cst_39 = arith.constant 5.000000e-01 : f32
    %126 = vector.broadcast %cst_39 : f32 to vector<1x32xf32>
    %127 = arith.addf %125, %126 : vector<1x32xf32>
    %128 = vector.extract_strided_slice %4 {offsets = [2, 0], sizes = [1, 32], strides = [1, 1]} : vector<16x32xf32> to vector<1x32xf32>
    %129 = vector.extract_strided_slice %113 {offsets = [0, 128], sizes = [1, 32], strides = [1, 1]} : vector<1x512xf32> to vector<1x32xf32>
    %130 = arith.addf %128, %129 : vector<1x32xf32>
    %131 = vector.extract_strided_slice %115 {offsets = [0, 128], sizes = [1, 32], strides = [1, 1]} : vector<1x256xf32> to vector<1x32xf32>
    %132 = arith.addf %130, %131 : vector<1x32xf32>
    %cst_40 = arith.constant 5.000000e-01 : f32
    %133 = vector.broadcast %cst_40 : f32 to vector<1x32xf32>
    %134 = arith.mulf %133, %132 : vector<1x32xf32>
    %135 = math.tanh %134 : vector<1x32xf32>
    %cst_41 = arith.constant 5.000000e-01 : f32
    %136 = vector.broadcast %cst_41 : f32 to vector<1x32xf32>
    %137 = arith.mulf %136, %135 : vector<1x32xf32>
    %cst_42 = arith.constant 5.000000e-01 : f32
    %138 = vector.broadcast %cst_42 : f32 to vector<1x32xf32>
    %139 = arith.addf %137, %138 : vector<1x32xf32>
    %140 = vector.extract_strided_slice %5 {offsets = [2, 0], sizes = [1, 32], strides = [1, 1]} : vector<16x32xf32> to vector<1x32xf32>
    %141 = vector.extract_strided_slice %113 {offsets = [0, 256], sizes = [1, 32], strides = [1, 1]} : vector<1x512xf32> to vector<1x32xf32>
    %142 = arith.addf %140, %141 : vector<1x32xf32>
    %143 = math.tanh %142 : vector<1x32xf32>
    %144 = arith.mulf %143, %127 : vector<1x32xf32>
    %145 = arith.mulf %139, %96 : vector<1x32xf32>
    %146 = arith.addf %144, %145 : vector<1x32xf32>
    %147 = arith.truncf %146 : vector<1x32xf32> to vector<1x32xbf16>
    %cst_43 = arith.constant dense<0.000000e+00> : vector<1x32xf32>
    %148 = tpu.matmul %147, %9, %cst_43 {dimension_numbers = #tpu.dot_dimension_numbers<[1], [0], [0], [1], [0, 0, 1, 1], [], []>} : vector<1x32xbf16>, vector<32x32xbf16>, vector<1x32xf32> -> vector<1x32xf32>
    %149 = vector.extract_strided_slice %6 {offsets = [2, 0], sizes = [1, 32], strides = [1, 1]} : vector<16x32xf32> to vector<1x32xf32>
    %150 = vector.extract_strided_slice %113 {offsets = [0, 384], sizes = [1, 32], strides = [1, 1]} : vector<1x512xf32> to vector<1x32xf32>
    %151 = arith.addf %149, %150 : vector<1x32xf32>
    %152 = arith.addf %151, %148 : vector<1x32xf32>
    %cst_44 = arith.constant 5.000000e-01 : f32
    %153 = vector.broadcast %cst_44 : f32 to vector<1x32xf32>
    %154 = arith.mulf %153, %152 : vector<1x32xf32>
    %155 = math.tanh %154 : vector<1x32xf32>
    %cst_45 = arith.constant 5.000000e-01 : f32
    %156 = vector.broadcast %cst_45 : f32 to vector<1x32xf32>
    %157 = arith.mulf %156, %155 : vector<1x32xf32>
    %cst_46 = arith.constant 5.000000e-01 : f32
    %158 = vector.broadcast %cst_46 : f32 to vector<1x32xf32>
    %159 = arith.addf %157, %158 : vector<1x32xf32>
    %160 = math.tanh %146 : vector<1x32xf32>
    %161 = arith.mulf %159, %160 : vector<1x32xf32>
    %162 = arith.truncf %161 : vector<1x32xf32> to vector<1x32xbf16>
    %cst_47 = arith.constant dense<0.000000e+00> : vector<1x512xf32>
    %163 = tpu.matmul %162, %7, %cst_47 {dimension_numbers = #tpu.dot_dimension_numbers<[1], [0], [0], [1], [0, 0, 1, 1], [], []>} : vector<1x32xbf16>, vector<32x512xbf16>, vector<1x512xf32> -> vector<1x512xf32>
    %164 = arith.truncf %146 : vector<1x32xf32> to vector<1x32xbf16>
    %cst_48 = arith.constant dense<0.000000e+00> : vector<1x256xf32>
    %165 = tpu.matmul %164, %8, %cst_48 {dimension_numbers = #tpu.dot_dimension_numbers<[1], [0], [0], [1], [0, 0, 1, 1], [], []>} : vector<1x32xbf16>, vector<32x256xbf16>, vector<1x256xf32> -> vector<1x256xf32>
    %166 = vector.extract_strided_slice %3 {offsets = [3, 0], sizes = [1, 32], strides = [1, 1]} : vector<16x32xf32> to vector<1x32xf32>
    %167 = vector.extract_strided_slice %163 {offsets = [0, 0], sizes = [1, 32], strides = [1, 1]} : vector<1x512xf32> to vector<1x32xf32>
    %168 = arith.addf %166, %167 : vector<1x32xf32>
    %169 = vector.extract_strided_slice %165 {offsets = [0, 0], sizes = [1, 32], strides = [1, 1]} : vector<1x256xf32> to vector<1x32xf32>
    %170 = arith.addf %168, %169 : vector<1x32xf32>
    %cst_49 = arith.constant 5.000000e-01 : f32
    %171 = vector.broadcast %cst_49 : f32 to vector<1x32xf32>
    %172 = arith.mulf %171, %170 : vector<1x32xf32>
    %173 = math.tanh %172 : vector<1x32xf32>
    %cst_50 = arith.constant 5.000000e-01 : f32
    %174 = vector.broadcast %cst_50 : f32 to vector<1x32xf32>
    %175 = arith.mulf %174, %173 : vector<1x32xf32>
    %cst_51 = arith.constant 5.000000e-01 : f32
    %176 = vector.broadcast %cst_51 : f32 to vector<1x32xf32>
    %177 = arith.addf %175, %176 : vector<1x32xf32>
    %178 = vector.extract_strided_slice %4 {offsets = [3, 0], sizes = [1, 32], strides = [1, 1]} : vector<16x32xf32> to vector<1x32xf32>
    %179 = vector.extract_strided_slice %163 {offsets = [0, 128], sizes = [1, 32], strides = [1, 1]} : vector<1x512xf32> to vector<1x32xf32>
    %180 = arith.addf %178, %179 : vector<1x32xf32>
    %181 = vector.extract_strided_slice %165 {offsets = [0, 128], sizes = [1, 32], strides = [1, 1]} : vector<1x256xf32> to vector<1x32xf32>
    %182 = arith.addf %180, %181 : vector<1x32xf32>
    %cst_52 = arith.constant 5.000000e-01 : f32
    %183 = vector.broadcast %cst_52 : f32 to vector<1x32xf32>
    %184 = arith.mulf %183, %182 : vector<1x32xf32>
    %185 = math.tanh %184 : vector<1x32xf32>
    %cst_53 = arith.constant 5.000000e-01 : f32
    %186 = vector.broadcast %cst_53 : f32 to vector<1x32xf32>
    %187 = arith.mulf %186, %185 : vector<1x32xf32>
    %cst_54 = arith.constant 5.000000e-01 : f32
    %188 = vector.broadcast %cst_54 : f32 to vector<1x32xf32>
    %189 = arith.addf %187, %188 : vector<1x32xf32>
    %190 = vector.extract_strided_slice %5 {offsets = [3, 0], sizes = [1, 32], strides = [1, 1]} : vector<16x32xf32> to vector<1x32xf32>
    %191 = vector.extract_strided_slice %163 {offsets = [0, 256], sizes = [1, 32], strides = [1, 1]} : vector<1x512xf32> to vector<1x32xf32>
    %192 = arith.addf %190, %191 : vector<1x32xf32>
    %193 = math.tanh %192 : vector<1x32xf32>
    %194 = arith.mulf %193, %177 : vector<1x32xf32>
    %195 = arith.mulf %189, %146 : vector<1x32xf32>
    %196 = arith.addf %194, %195 : vector<1x32xf32>
    %197 = arith.truncf %196 : vector<1x32xf32> to vector<1x32xbf16>
    %cst_55 = arith.constant dense<0.000000e+00> : vector<1x32xf32>
    %198 = tpu.matmul %197, %9, %cst_55 {dimension_numbers = #tpu.dot_dimension_numbers<[1], [0], [0], [1], [0, 0, 1, 1], [], []>} : vector<1x32xbf16>, vector<32x32xbf16>, vector<1x32xf32> -> vector<1x32xf32>
    %199 = vector.extract_strided_slice %6 {offsets = [3, 0], sizes = [1, 32], strides = [1, 1]} : vector<16x32xf32> to vector<1x32xf32>
    %200 = vector.extract_strided_slice %163 {offsets = [0, 384], sizes = [1, 32], strides = [1, 1]} : vector<1x512xf32> to vector<1x32xf32>
    %201 = arith.addf %199, %200 : vector<1x32xf32>
    %202 = arith.addf %201, %198 : vector<1x32xf32>
    %cst_56 = arith.constant 5.000000e-01 : f32
    %203 = vector.broadcast %cst_56 : f32 to vector<1x32xf32>
    %204 = arith.mulf %203, %202 : vector<1x32xf32>
    %205 = math.tanh %204 : vector<1x32xf32>
    %cst_57 = arith.constant 5.000000e-01 : f32
    %206 = vector.broadcast %cst_57 : f32 to vector<1x32xf32>
    %207 = arith.mulf %206, %205 : vector<1x32xf32>
    %cst_58 = arith.constant 5.000000e-01 : f32
    %208 = vector.broadcast %cst_58 : f32 to vector<1x32xf32>
    %209 = arith.addf %207, %208 : vector<1x32xf32>
    %210 = math.tanh %196 : vector<1x32xf32>
    %211 = arith.mulf %209, %210 : vector<1x32xf32>
    %212 = arith.truncf %211 : vector<1x32xf32> to vector<1x32xbf16>
    %cst_59 = arith.constant dense<0.000000e+00> : vector<1x512xf32>
    %213 = tpu.matmul %212, %7, %cst_59 {dimension_numbers = #tpu.dot_dimension_numbers<[1], [0], [0], [1], [0, 0, 1, 1], [], []>} : vector<1x32xbf16>, vector<32x512xbf16>, vector<1x512xf32> -> vector<1x512xf32>
    %214 = arith.truncf %196 : vector<1x32xf32> to vector<1x32xbf16>
    %cst_60 = arith.constant dense<0.000000e+00> : vector<1x256xf32>
    %215 = tpu.matmul %214, %8, %cst_60 {dimension_numbers = #tpu.dot_dimension_numbers<[1], [0], [0], [1], [0, 0, 1, 1], [], []>} : vector<1x32xbf16>, vector<32x256xbf16>, vector<1x256xf32> -> vector<1x256xf32>
    %216 = vector.extract_strided_slice %3 {offsets = [4, 0], sizes = [1, 32], strides = [1, 1]} : vector<16x32xf32> to vector<1x32xf32>
    %217 = vector.extract_strided_slice %213 {offsets = [0, 0], sizes = [1, 32], strides = [1, 1]} : vector<1x512xf32> to vector<1x32xf32>
    %218 = arith.addf %216, %217 : vector<1x32xf32>
    %219 = vector.extract_strided_slice %215 {offsets = [0, 0], sizes = [1, 32], strides = [1, 1]} : vector<1x256xf32> to vector<1x32xf32>
    %220 = arith.addf %218, %219 : vector<1x32xf32>
    %cst_61 = arith.constant 5.000000e-01 : f32
    %221 = vector.broadcast %cst_61 : f32 to vector<1x32xf32>
    %222 = arith.mulf %221, %220 : vector<1x32xf32>
    %223 = math.tanh %222 : vector<1x32xf32>
    %cst_62 = arith.constant 5.000000e-01 : f32
    %224 = vector.broadcast %cst_62 : f32 to vector<1x32xf32>
    %225 = arith.mulf %224, %223 : vector<1x32xf32>
    %cst_63 = arith.constant 5.000000e-01 : f32
    %226 = vector.broadcast %cst_63 : f32 to vector<1x32xf32>
    %227 = arith.addf %225, %226 : vector<1x32xf32>
    %228 = vector.extract_strided_slice %4 {offsets = [4, 0], sizes = [1, 32], strides = [1, 1]} : vector<16x32xf32> to vector<1x32xf32>
    %229 = vector.extract_strided_slice %213 {offsets = [0, 128], sizes = [1, 32], strides = [1, 1]} : vector<1x512xf32> to vector<1x32xf32>
    %230 = arith.addf %228, %229 : vector<1x32xf32>
    %231 = vector.extract_strided_slice %215 {offsets = [0, 128], sizes = [1, 32], strides = [1, 1]} : vector<1x256xf32> to vector<1x32xf32>
    %232 = arith.addf %230, %231 : vector<1x32xf32>
    %cst_64 = arith.constant 5.000000e-01 : f32
    %233 = vector.broadcast %cst_64 : f32 to vector<1x32xf32>
    %234 = arith.mulf %233, %232 : vector<1x32xf32>
    %235 = math.tanh %234 : vector<1x32xf32>
    %cst_65 = arith.constant 5.000000e-01 : f32
    %236 = vector.broadcast %cst_65 : f32 to vector<1x32xf32>
    %237 = arith.mulf %236, %235 : vector<1x32xf32>
    %cst_66 = arith.constant 5.000000e-01 : f32
    %238 = vector.broadcast %cst_66 : f32 to vector<1x32xf32>
    %239 = arith.addf %237, %238 : vector<1x32xf32>
    %240 = vector.extract_strided_slice %5 {offsets = [4, 0], sizes = [1, 32], strides = [1, 1]} : vector<16x32xf32> to vector<1x32xf32>
    %241 = vector.extract_strided_slice %213 {offsets = [0, 256], sizes = [1, 32], strides = [1, 1]} : vector<1x512xf32> to vector<1x32xf32>
    %242 = arith.addf %240, %241 : vector<1x32xf32>
    %243 = math.tanh %242 : vector<1x32xf32>
    %244 = arith.mulf %243, %227 : vector<1x32xf32>
    %245 = arith.mulf %239, %196 : vector<1x32xf32>
    %246 = arith.addf %244, %245 : vector<1x32xf32>
    %247 = arith.truncf %246 : vector<1x32xf32> to vector<1x32xbf16>
    %cst_67 = arith.constant dense<0.000000e+00> : vector<1x32xf32>
    %248 = tpu.matmul %247, %9, %cst_67 {dimension_numbers = #tpu.dot_dimension_numbers<[1], [0], [0], [1], [0, 0, 1, 1], [], []>} : vector<1x32xbf16>, vector<32x32xbf16>, vector<1x32xf32> -> vector<1x32xf32>
    %249 = vector.extract_strided_slice %6 {offsets = [4, 0], sizes = [1, 32], strides = [1, 1]} : vector<16x32xf32> to vector<1x32xf32>
    %250 = vector.extract_strided_slice %213 {offsets = [0, 384], sizes = [1, 32], strides = [1, 1]} : vector<1x512xf32> to vector<1x32xf32>
    %251 = arith.addf %249, %250 : vector<1x32xf32>
    %252 = arith.addf %251, %248 : vector<1x32xf32>
    %cst_68 = arith.constant 5.000000e-01 : f32
    %253 = vector.broadcast %cst_68 : f32 to vector<1x32xf32>
    %254 = arith.mulf %253, %252 : vector<1x32xf32>
    %255 = math.tanh %254 : vector<1x32xf32>
    %cst_69 = arith.constant 5.000000e-01 : f32
    %256 = vector.broadcast %cst_69 : f32 to vector<1x32xf32>
    %257 = arith.mulf %256, %255 : vector<1x32xf32>
    %cst_70 = arith.constant 5.000000e-01 : f32
    %258 = vector.broadcast %cst_70 : f32 to vector<1x32xf32>
    %259 = arith.addf %257, %258 : vector<1x32xf32>
    %260 = math.tanh %246 : vector<1x32xf32>
    %261 = arith.mulf %259, %260 : vector<1x32xf32>
    %262 = arith.truncf %261 : vector<1x32xf32> to vector<1x32xbf16>
    %cst_71 = arith.constant dense<0.000000e+00> : vector<1x512xf32>
    %263 = tpu.matmul %262, %7, %cst_71 {dimension_numbers = #tpu.dot_dimension_numbers<[1], [0], [0], [1], [0, 0, 1, 1], [], []>} : vector<1x32xbf16>, vector<32x512xbf16>, vector<1x512xf32> -> vector<1x512xf32>
    %264 = arith.truncf %246 : vector<1x32xf32> to vector<1x32xbf16>
    %cst_72 = arith.constant dense<0.000000e+00> : vector<1x256xf32>
    %265 = tpu.matmul %264, %8, %cst_72 {dimension_numbers = #tpu.dot_dimension_numbers<[1], [0], [0], [1], [0, 0, 1, 1], [], []>} : vector<1x32xbf16>, vector<32x256xbf16>, vector<1x256xf32> -> vector<1x256xf32>
    %266 = vector.extract_strided_slice %3 {offsets = [5, 0], sizes = [1, 32], strides = [1, 1]} : vector<16x32xf32> to vector<1x32xf32>
    %267 = vector.extract_strided_slice %263 {offsets = [0, 0], sizes = [1, 32], strides = [1, 1]} : vector<1x512xf32> to vector<1x32xf32>
    %268 = arith.addf %266, %267 : vector<1x32xf32>
    %269 = vector.extract_strided_slice %265 {offsets = [0, 0], sizes = [1, 32], strides = [1, 1]} : vector<1x256xf32> to vector<1x32xf32>
    %270 = arith.addf %268, %269 : vector<1x32xf32>
    %cst_73 = arith.constant 5.000000e-01 : f32
    %271 = vector.broadcast %cst_73 : f32 to vector<1x32xf32>
    %272 = arith.mulf %271, %270 : vector<1x32xf32>
    %273 = math.tanh %272 : vector<1x32xf32>
    %cst_74 = arith.constant 5.000000e-01 : f32
    %274 = vector.broadcast %cst_74 : f32 to vector<1x32xf32>
    %275 = arith.mulf %274, %273 : vector<1x32xf32>
    %cst_75 = arith.constant 5.000000e-01 : f32
    %276 = vector.broadcast %cst_75 : f32 to vector<1x32xf32>
    %277 = arith.addf %275, %276 : vector<1x32xf32>
    %278 = vector.extract_strided_slice %4 {offsets = [5, 0], sizes = [1, 32], strides = [1, 1]} : vector<16x32xf32> to vector<1x32xf32>
    %279 = vector.extract_strided_slice %263 {offsets = [0, 128], sizes = [1, 32], strides = [1, 1]} : vector<1x512xf32> to vector<1x32xf32>
    %280 = arith.addf %278, %279 : vector<1x32xf32>
    %281 = vector.extract_strided_slice %265 {offsets = [0, 128], sizes = [1, 32], strides = [1, 1]} : vector<1x256xf32> to vector<1x32xf32>
    %282 = arith.addf %280, %281 : vector<1x32xf32>
    %cst_76 = arith.constant 5.000000e-01 : f32
    %283 = vector.broadcast %cst_76 : f32 to vector<1x32xf32>
    %284 = arith.mulf %283, %282 : vector<1x32xf32>
    %285 = math.tanh %284 : vector<1x32xf32>
    %cst_77 = arith.constant 5.000000e-01 : f32
    %286 = vector.broadcast %cst_77 : f32 to vector<1x32xf32>
    %287 = arith.mulf %286, %285 : vector<1x32xf32>
    %cst_78 = arith.constant 5.000000e-01 : f32
    %288 = vector.broadcast %cst_78 : f32 to vector<1x32xf32>
    %289 = arith.addf %287, %288 : vector<1x32xf32>
    %290 = vector.extract_strided_slice %5 {offsets = [5, 0], sizes = [1, 32], strides = [1, 1]} : vector<16x32xf32> to vector<1x32xf32>
    %291 = vector.extract_strided_slice %263 {offsets = [0, 256], sizes = [1, 32], strides = [1, 1]} : vector<1x512xf32> to vector<1x32xf32>
    %292 = arith.addf %290, %291 : vector<1x32xf32>
    %293 = math.tanh %292 : vector<1x32xf32>
    %294 = arith.mulf %293, %277 : vector<1x32xf32>
    %295 = arith.mulf %289, %246 : vector<1x32xf32>
    %296 = arith.addf %294, %295 : vector<1x32xf32>
    %297 = arith.truncf %296 : vector<1x32xf32> to vector<1x32xbf16>
    %cst_79 = arith.constant dense<0.000000e+00> : vector<1x32xf32>
    %298 = tpu.matmul %297, %9, %cst_79 {dimension_numbers = #tpu.dot_dimension_numbers<[1], [0], [0], [1], [0, 0, 1, 1], [], []>} : vector<1x32xbf16>, vector<32x32xbf16>, vector<1x32xf32> -> vector<1x32xf32>
    %299 = vector.extract_strided_slice %6 {offsets = [5, 0], sizes = [1, 32], strides = [1, 1]} : vector<16x32xf32> to vector<1x32xf32>
    %300 = vector.extract_strided_slice %263 {offsets = [0, 384], sizes = [1, 32], strides = [1, 1]} : vector<1x512xf32> to vector<1x32xf32>
    %301 = arith.addf %299, %300 : vector<1x32xf32>
    %302 = arith.addf %301, %298 : vector<1x32xf32>
    %cst_80 = arith.constant 5.000000e-01 : f32
    %303 = vector.broadcast %cst_80 : f32 to vector<1x32xf32>
    %304 = arith.mulf %303, %302 : vector<1x32xf32>
    %305 = math.tanh %304 : vector<1x32xf32>
    %cst_81 = arith.constant 5.000000e-01 : f32
    %306 = vector.broadcast %cst_81 : f32 to vector<1x32xf32>
    %307 = arith.mulf %306, %305 : vector<1x32xf32>
    %cst_82 = arith.constant 5.000000e-01 : f32
    %308 = vector.broadcast %cst_82 : f32 to vector<1x32xf32>
    %309 = arith.addf %307, %308 : vector<1x32xf32>
    %310 = math.tanh %296 : vector<1x32xf32>
    %311 = arith.mulf %309, %310 : vector<1x32xf32>
    %312 = arith.truncf %311 : vector<1x32xf32> to vector<1x32xbf16>
    %cst_83 = arith.constant dense<0.000000e+00> : vector<1x512xf32>
    %313 = tpu.matmul %312, %7, %cst_83 {dimension_numbers = #tpu.dot_dimension_numbers<[1], [0], [0], [1], [0, 0, 1, 1], [], []>} : vector<1x32xbf16>, vector<32x512xbf16>, vector<1x512xf32> -> vector<1x512xf32>
    %314 = arith.truncf %296 : vector<1x32xf32> to vector<1x32xbf16>
    %cst_84 = arith.constant dense<0.000000e+00> : vector<1x256xf32>
    %315 = tpu.matmul %314, %8, %cst_84 {dimension_numbers = #tpu.dot_dimension_numbers<[1], [0], [0], [1], [0, 0, 1, 1], [], []>} : vector<1x32xbf16>, vector<32x256xbf16>, vector<1x256xf32> -> vector<1x256xf32>
    %316 = vector.extract_strided_slice %3 {offsets = [6, 0], sizes = [1, 32], strides = [1, 1]} : vector<16x32xf32> to vector<1x32xf32>
    %317 = vector.extract_strided_slice %313 {offsets = [0, 0], sizes = [1, 32], strides = [1, 1]} : vector<1x512xf32> to vector<1x32xf32>
    %318 = arith.addf %316, %317 : vector<1x32xf32>
    %319 = vector.extract_strided_slice %315 {offsets = [0, 0], sizes = [1, 32], strides = [1, 1]} : vector<1x256xf32> to vector<1x32xf32>
    %320 = arith.addf %318, %319 : vector<1x32xf32>
    %cst_85 = arith.constant 5.000000e-01 : f32
    %321 = vector.broadcast %cst_85 : f32 to vector<1x32xf32>
    %322 = arith.mulf %321, %320 : vector<1x32xf32>
    %323 = math.tanh %322 : vector<1x32xf32>
    %cst_86 = arith.constant 5.000000e-01 : f32
    %324 = vector.broadcast %cst_86 : f32 to vector<1x32xf32>
    %325 = arith.mulf %324, %323 : vector<1x32xf32>
    %cst_87 = arith.constant 5.000000e-01 : f32
    %326 = vector.broadcast %cst_87 : f32 to vector<1x32xf32>
    %327 = arith.addf %325, %326 : vector<1x32xf32>
    %328 = vector.extract_strided_slice %4 {offsets = [6, 0], sizes = [1, 32], strides = [1, 1]} : vector<16x32xf32> to vector<1x32xf32>
    %329 = vector.extract_strided_slice %313 {offsets = [0, 128], sizes = [1, 32], strides = [1, 1]} : vector<1x512xf32> to vector<1x32xf32>
    %330 = arith.addf %328, %329 : vector<1x32xf32>
    %331 = vector.extract_strided_slice %315 {offsets = [0, 128], sizes = [1, 32], strides = [1, 1]} : vector<1x256xf32> to vector<1x32xf32>
    %332 = arith.addf %330, %331 : vector<1x32xf32>
    %cst_88 = arith.constant 5.000000e-01 : f32
    %333 = vector.broadcast %cst_88 : f32 to vector<1x32xf32>
    %334 = arith.mulf %333, %332 : vector<1x32xf32>
    %335 = math.tanh %334 : vector<1x32xf32>
    %cst_89 = arith.constant 5.000000e-01 : f32
    %336 = vector.broadcast %cst_89 : f32 to vector<1x32xf32>
    %337 = arith.mulf %336, %335 : vector<1x32xf32>
    %cst_90 = arith.constant 5.000000e-01 : f32
    %338 = vector.broadcast %cst_90 : f32 to vector<1x32xf32>
    %339 = arith.addf %337, %338 : vector<1x32xf32>
    %340 = vector.extract_strided_slice %5 {offsets = [6, 0], sizes = [1, 32], strides = [1, 1]} : vector<16x32xf32> to vector<1x32xf32>
    %341 = vector.extract_strided_slice %313 {offsets = [0, 256], sizes = [1, 32], strides = [1, 1]} : vector<1x512xf32> to vector<1x32xf32>
    %342 = arith.addf %340, %341 : vector<1x32xf32>
    %343 = math.tanh %342 : vector<1x32xf32>
    %344 = arith.mulf %343, %327 : vector<1x32xf32>
    %345 = arith.mulf %339, %296 : vector<1x32xf32>
    %346 = arith.addf %344, %345 : vector<1x32xf32>
    %347 = arith.truncf %346 : vector<1x32xf32> to vector<1x32xbf16>
    %cst_91 = arith.constant dense<0.000000e+00> : vector<1x32xf32>
    %348 = tpu.matmul %347, %9, %cst_91 {dimension_numbers = #tpu.dot_dimension_numbers<[1], [0], [0], [1], [0, 0, 1, 1], [], []>} : vector<1x32xbf16>, vector<32x32xbf16>, vector<1x32xf32> -> vector<1x32xf32>
    %349 = vector.extract_strided_slice %6 {offsets = [6, 0], sizes = [1, 32], strides = [1, 1]} : vector<16x32xf32> to vector<1x32xf32>
    %350 = vector.extract_strided_slice %313 {offsets = [0, 384], sizes = [1, 32], strides = [1, 1]} : vector<1x512xf32> to vector<1x32xf32>
    %351 = arith.addf %349, %350 : vector<1x32xf32>
    %352 = arith.addf %351, %348 : vector<1x32xf32>
    %cst_92 = arith.constant 5.000000e-01 : f32
    %353 = vector.broadcast %cst_92 : f32 to vector<1x32xf32>
    %354 = arith.mulf %353, %352 : vector<1x32xf32>
    %355 = math.tanh %354 : vector<1x32xf32>
    %cst_93 = arith.constant 5.000000e-01 : f32
    %356 = vector.broadcast %cst_93 : f32 to vector<1x32xf32>
    %357 = arith.mulf %356, %355 : vector<1x32xf32>
    %cst_94 = arith.constant 5.000000e-01 : f32
    %358 = vector.broadcast %cst_94 : f32 to vector<1x32xf32>
    %359 = arith.addf %357, %358 : vector<1x32xf32>
    %360 = math.tanh %346 : vector<1x32xf32>
    %361 = arith.mulf %359, %360 : vector<1x32xf32>
    %362 = arith.truncf %361 : vector<1x32xf32> to vector<1x32xbf16>
    %cst_95 = arith.constant dense<0.000000e+00> : vector<1x512xf32>
    %363 = tpu.matmul %362, %7, %cst_95 {dimension_numbers = #tpu.dot_dimension_numbers<[1], [0], [0], [1], [0, 0, 1, 1], [], []>} : vector<1x32xbf16>, vector<32x512xbf16>, vector<1x512xf32> -> vector<1x512xf32>
    %364 = arith.truncf %346 : vector<1x32xf32> to vector<1x32xbf16>
    %cst_96 = arith.constant dense<0.000000e+00> : vector<1x256xf32>
    %365 = tpu.matmul %364, %8, %cst_96 {dimension_numbers = #tpu.dot_dimension_numbers<[1], [0], [0], [1], [0, 0, 1, 1], [], []>} : vector<1x32xbf16>, vector<32x256xbf16>, vector<1x256xf32> -> vector<1x256xf32>
    %366 = vector.extract_strided_slice %3 {offsets = [7, 0], sizes = [1, 32], strides = [1, 1]} : vector<16x32xf32> to vector<1x32xf32>
    %367 = vector.extract_strided_slice %363 {offsets = [0, 0], sizes = [1, 32], strides = [1, 1]} : vector<1x512xf32> to vector<1x32xf32>
    %368 = arith.addf %366, %367 : vector<1x32xf32>
    %369 = vector.extract_strided_slice %365 {offsets = [0, 0], sizes = [1, 32], strides = [1, 1]} : vector<1x256xf32> to vector<1x32xf32>
    %370 = arith.addf %368, %369 : vector<1x32xf32>
    %cst_97 = arith.constant 5.000000e-01 : f32
    %371 = vector.broadcast %cst_97 : f32 to vector<1x32xf32>
    %372 = arith.mulf %371, %370 : vector<1x32xf32>
    %373 = math.tanh %372 : vector<1x32xf32>
    %cst_98 = arith.constant 5.000000e-01 : f32
    %374 = vector.broadcast %cst_98 : f32 to vector<1x32xf32>
    %375 = arith.mulf %374, %373 : vector<1x32xf32>
    %cst_99 = arith.constant 5.000000e-01 : f32
    %376 = vector.broadcast %cst_99 : f32 to vector<1x32xf32>
    %377 = arith.addf %375, %376 : vector<1x32xf32>
    %378 = vector.extract_strided_slice %4 {offsets = [7, 0], sizes = [1, 32], strides = [1, 1]} : vector<16x32xf32> to vector<1x32xf32>
    %379 = vector.extract_strided_slice %363 {offsets = [0, 128], sizes = [1, 32], strides = [1, 1]} : vector<1x512xf32> to vector<1x32xf32>
    %380 = arith.addf %378, %379 : vector<1x32xf32>
    %381 = vector.extract_strided_slice %365 {offsets = [0, 128], sizes = [1, 32], strides = [1, 1]} : vector<1x256xf32> to vector<1x32xf32>
    %382 = arith.addf %380, %381 : vector<1x32xf32>
    %cst_100 = arith.constant 5.000000e-01 : f32
    %383 = vector.broadcast %cst_100 : f32 to vector<1x32xf32>
    %384 = arith.mulf %383, %382 : vector<1x32xf32>
    %385 = math.tanh %384 : vector<1x32xf32>
    %cst_101 = arith.constant 5.000000e-01 : f32
    %386 = vector.broadcast %cst_101 : f32 to vector<1x32xf32>
    %387 = arith.mulf %386, %385 : vector<1x32xf32>
    %cst_102 = arith.constant 5.000000e-01 : f32
    %388 = vector.broadcast %cst_102 : f32 to vector<1x32xf32>
    %389 = arith.addf %387, %388 : vector<1x32xf32>
    %390 = vector.extract_strided_slice %5 {offsets = [7, 0], sizes = [1, 32], strides = [1, 1]} : vector<16x32xf32> to vector<1x32xf32>
    %391 = vector.extract_strided_slice %363 {offsets = [0, 256], sizes = [1, 32], strides = [1, 1]} : vector<1x512xf32> to vector<1x32xf32>
    %392 = arith.addf %390, %391 : vector<1x32xf32>
    %393 = math.tanh %392 : vector<1x32xf32>
    %394 = arith.mulf %393, %377 : vector<1x32xf32>
    %395 = arith.mulf %389, %346 : vector<1x32xf32>
    %396 = arith.addf %394, %395 : vector<1x32xf32>
    %397 = arith.truncf %396 : vector<1x32xf32> to vector<1x32xbf16>
    %cst_103 = arith.constant dense<0.000000e+00> : vector<1x32xf32>
    %398 = tpu.matmul %397, %9, %cst_103 {dimension_numbers = #tpu.dot_dimension_numbers<[1], [0], [0], [1], [0, 0, 1, 1], [], []>} : vector<1x32xbf16>, vector<32x32xbf16>, vector<1x32xf32> -> vector<1x32xf32>
    %399 = vector.extract_strided_slice %6 {offsets = [7, 0], sizes = [1, 32], strides = [1, 1]} : vector<16x32xf32> to vector<1x32xf32>
    %400 = vector.extract_strided_slice %363 {offsets = [0, 384], sizes = [1, 32], strides = [1, 1]} : vector<1x512xf32> to vector<1x32xf32>
    %401 = arith.addf %399, %400 : vector<1x32xf32>
    %402 = arith.addf %401, %398 : vector<1x32xf32>
    %cst_104 = arith.constant 5.000000e-01 : f32
    %403 = vector.broadcast %cst_104 : f32 to vector<1x32xf32>
    %404 = arith.mulf %403, %402 : vector<1x32xf32>
    %405 = math.tanh %404 : vector<1x32xf32>
    %cst_105 = arith.constant 5.000000e-01 : f32
    %406 = vector.broadcast %cst_105 : f32 to vector<1x32xf32>
    %407 = arith.mulf %406, %405 : vector<1x32xf32>
    %cst_106 = arith.constant 5.000000e-01 : f32
    %408 = vector.broadcast %cst_106 : f32 to vector<1x32xf32>
    %409 = arith.addf %407, %408 : vector<1x32xf32>
    %410 = math.tanh %396 : vector<1x32xf32>
    %411 = arith.mulf %409, %410 : vector<1x32xf32>
    %412 = arith.truncf %411 : vector<1x32xf32> to vector<1x32xbf16>
    %cst_107 = arith.constant dense<0.000000e+00> : vector<1x512xf32>
    %413 = tpu.matmul %412, %7, %cst_107 {dimension_numbers = #tpu.dot_dimension_numbers<[1], [0], [0], [1], [0, 0, 1, 1], [], []>} : vector<1x32xbf16>, vector<32x512xbf16>, vector<1x512xf32> -> vector<1x512xf32>
    %414 = arith.truncf %396 : vector<1x32xf32> to vector<1x32xbf16>
    %cst_108 = arith.constant dense<0.000000e+00> : vector<1x256xf32>
    %415 = tpu.matmul %414, %8, %cst_108 {dimension_numbers = #tpu.dot_dimension_numbers<[1], [0], [0], [1], [0, 0, 1, 1], [], []>} : vector<1x32xbf16>, vector<32x256xbf16>, vector<1x256xf32> -> vector<1x256xf32>
    %416 = vector.extract_strided_slice %3 {offsets = [8, 0], sizes = [1, 32], strides = [1, 1]} : vector<16x32xf32> to vector<1x32xf32>
    %417 = vector.extract_strided_slice %413 {offsets = [0, 0], sizes = [1, 32], strides = [1, 1]} : vector<1x512xf32> to vector<1x32xf32>
    %418 = arith.addf %416, %417 : vector<1x32xf32>
    %419 = vector.extract_strided_slice %415 {offsets = [0, 0], sizes = [1, 32], strides = [1, 1]} : vector<1x256xf32> to vector<1x32xf32>
    %420 = arith.addf %418, %419 : vector<1x32xf32>
    %cst_109 = arith.constant 5.000000e-01 : f32
    %421 = vector.broadcast %cst_109 : f32 to vector<1x32xf32>
    %422 = arith.mulf %421, %420 : vector<1x32xf32>
    %423 = math.tanh %422 : vector<1x32xf32>
    %cst_110 = arith.constant 5.000000e-01 : f32
    %424 = vector.broadcast %cst_110 : f32 to vector<1x32xf32>
    %425 = arith.mulf %424, %423 : vector<1x32xf32>
    %cst_111 = arith.constant 5.000000e-01 : f32
    %426 = vector.broadcast %cst_111 : f32 to vector<1x32xf32>
    %427 = arith.addf %425, %426 : vector<1x32xf32>
    %428 = vector.extract_strided_slice %4 {offsets = [8, 0], sizes = [1, 32], strides = [1, 1]} : vector<16x32xf32> to vector<1x32xf32>
    %429 = vector.extract_strided_slice %413 {offsets = [0, 128], sizes = [1, 32], strides = [1, 1]} : vector<1x512xf32> to vector<1x32xf32>
    %430 = arith.addf %428, %429 : vector<1x32xf32>
    %431 = vector.extract_strided_slice %415 {offsets = [0, 128], sizes = [1, 32], strides = [1, 1]} : vector<1x256xf32> to vector<1x32xf32>
    %432 = arith.addf %430, %431 : vector<1x32xf32>
    %cst_112 = arith.constant 5.000000e-01 : f32
    %433 = vector.broadcast %cst_112 : f32 to vector<1x32xf32>
    %434 = arith.mulf %433, %432 : vector<1x32xf32>
    %435 = math.tanh %434 : vector<1x32xf32>
    %cst_113 = arith.constant 5.000000e-01 : f32
    %436 = vector.broadcast %cst_113 : f32 to vector<1x32xf32>
    %437 = arith.mulf %436, %435 : vector<1x32xf32>
    %cst_114 = arith.constant 5.000000e-01 : f32
    %438 = vector.broadcast %cst_114 : f32 to vector<1x32xf32>
    %439 = arith.addf %437, %438 : vector<1x32xf32>
    %440 = vector.extract_strided_slice %5 {offsets = [8, 0], sizes = [1, 32], strides = [1, 1]} : vector<16x32xf32> to vector<1x32xf32>
    %441 = vector.extract_strided_slice %413 {offsets = [0, 256], sizes = [1, 32], strides = [1, 1]} : vector<1x512xf32> to vector<1x32xf32>
    %442 = arith.addf %440, %441 : vector<1x32xf32>
    %443 = math.tanh %442 : vector<1x32xf32>
    %444 = arith.mulf %443, %427 : vector<1x32xf32>
    %445 = arith.mulf %439, %396 : vector<1x32xf32>
    %446 = arith.addf %444, %445 : vector<1x32xf32>
    %447 = arith.truncf %446 : vector<1x32xf32> to vector<1x32xbf16>
    %cst_115 = arith.constant dense<0.000000e+00> : vector<1x32xf32>
    %448 = tpu.matmul %447, %9, %cst_115 {dimension_numbers = #tpu.dot_dimension_numbers<[1], [0], [0], [1], [0, 0, 1, 1], [], []>} : vector<1x32xbf16>, vector<32x32xbf16>, vector<1x32xf32> -> vector<1x32xf32>
    %449 = vector.extract_strided_slice %6 {offsets = [8, 0], sizes = [1, 32], strides = [1, 1]} : vector<16x32xf32> to vector<1x32xf32>
    %450 = vector.extract_strided_slice %413 {offsets = [0, 384], sizes = [1, 32], strides = [1, 1]} : vector<1x512xf32> to vector<1x32xf32>
    %451 = arith.addf %449, %450 : vector<1x32xf32>
    %452 = arith.addf %451, %448 : vector<1x32xf32>
    %cst_116 = arith.constant 5.000000e-01 : f32
    %453 = vector.broadcast %cst_116 : f32 to vector<1x32xf32>
    %454 = arith.mulf %453, %452 : vector<1x32xf32>
    %455 = math.tanh %454 : vector<1x32xf32>
    %cst_117 = arith.constant 5.000000e-01 : f32
    %456 = vector.broadcast %cst_117 : f32 to vector<1x32xf32>
    %457 = arith.mulf %456, %455 : vector<1x32xf32>
    %cst_118 = arith.constant 5.000000e-01 : f32
    %458 = vector.broadcast %cst_118 : f32 to vector<1x32xf32>
    %459 = arith.addf %457, %458 : vector<1x32xf32>
    %460 = math.tanh %446 : vector<1x32xf32>
    %461 = arith.mulf %459, %460 : vector<1x32xf32>
    %462 = arith.truncf %461 : vector<1x32xf32> to vector<1x32xbf16>
    %cst_119 = arith.constant dense<0.000000e+00> : vector<1x512xf32>
    %463 = tpu.matmul %462, %7, %cst_119 {dimension_numbers = #tpu.dot_dimension_numbers<[1], [0], [0], [1], [0, 0, 1, 1], [], []>} : vector<1x32xbf16>, vector<32x512xbf16>, vector<1x512xf32> -> vector<1x512xf32>
    %464 = arith.truncf %446 : vector<1x32xf32> to vector<1x32xbf16>
    %cst_120 = arith.constant dense<0.000000e+00> : vector<1x256xf32>
    %465 = tpu.matmul %464, %8, %cst_120 {dimension_numbers = #tpu.dot_dimension_numbers<[1], [0], [0], [1], [0, 0, 1, 1], [], []>} : vector<1x32xbf16>, vector<32x256xbf16>, vector<1x256xf32> -> vector<1x256xf32>
    %466 = vector.extract_strided_slice %3 {offsets = [9, 0], sizes = [1, 32], strides = [1, 1]} : vector<16x32xf32> to vector<1x32xf32>
    %467 = vector.extract_strided_slice %463 {offsets = [0, 0], sizes = [1, 32], strides = [1, 1]} : vector<1x512xf32> to vector<1x32xf32>
    %468 = arith.addf %466, %467 : vector<1x32xf32>
    %469 = vector.extract_strided_slice %465 {offsets = [0, 0], sizes = [1, 32], strides = [1, 1]} : vector<1x256xf32> to vector<1x32xf32>
    %470 = arith.addf %468, %469 : vector<1x32xf32>
    %cst_121 = arith.constant 5.000000e-01 : f32
    %471 = vector.broadcast %cst_121 : f32 to vector<1x32xf32>
    %472 = arith.mulf %471, %470 : vector<1x32xf32>
    %473 = math.tanh %472 : vector<1x32xf32>
    %cst_122 = arith.constant 5.000000e-01 : f32
    %474 = vector.broadcast %cst_122 : f32 to vector<1x32xf32>
    %475 = arith.mulf %474, %473 : vector<1x32xf32>
    %cst_123 = arith.constant 5.000000e-01 : f32
    %476 = vector.broadcast %cst_123 : f32 to vector<1x32xf32>
    %477 = arith.addf %475, %476 : vector<1x32xf32>
    %478 = vector.extract_strided_slice %4 {offsets = [9, 0], sizes = [1, 32], strides = [1, 1]} : vector<16x32xf32> to vector<1x32xf32>
    %479 = vector.extract_strided_slice %463 {offsets = [0, 128], sizes = [1, 32], strides = [1, 1]} : vector<1x512xf32> to vector<1x32xf32>
    %480 = arith.addf %478, %479 : vector<1x32xf32>
    %481 = vector.extract_strided_slice %465 {offsets = [0, 128], sizes = [1, 32], strides = [1, 1]} : vector<1x256xf32> to vector<1x32xf32>
    %482 = arith.addf %480, %481 : vector<1x32xf32>
    %cst_124 = arith.constant 5.000000e-01 : f32
    %483 = vector.broadcast %cst_124 : f32 to vector<1x32xf32>
    %484 = arith.mulf %483, %482 : vector<1x32xf32>
    %485 = math.tanh %484 : vector<1x32xf32>
    %cst_125 = arith.constant 5.000000e-01 : f32
    %486 = vector.broadcast %cst_125 : f32 to vector<1x32xf32>
    %487 = arith.mulf %486, %485 : vector<1x32xf32>
    %cst_126 = arith.constant 5.000000e-01 : f32
    %488 = vector.broadcast %cst_126 : f32 to vector<1x32xf32>
    %489 = arith.addf %487, %488 : vector<1x32xf32>
    %490 = vector.extract_strided_slice %5 {offsets = [9, 0], sizes = [1, 32], strides = [1, 1]} : vector<16x32xf32> to vector<1x32xf32>
    %491 = vector.extract_strided_slice %463 {offsets = [0, 256], sizes = [1, 32], strides = [1, 1]} : vector<1x512xf32> to vector<1x32xf32>
    %492 = arith.addf %490, %491 : vector<1x32xf32>
    %493 = math.tanh %492 : vector<1x32xf32>
    %494 = arith.mulf %493, %477 : vector<1x32xf32>
    %495 = arith.mulf %489, %446 : vector<1x32xf32>
    %496 = arith.addf %494, %495 : vector<1x32xf32>
    %497 = arith.truncf %496 : vector<1x32xf32> to vector<1x32xbf16>
    %cst_127 = arith.constant dense<0.000000e+00> : vector<1x32xf32>
    %498 = tpu.matmul %497, %9, %cst_127 {dimension_numbers = #tpu.dot_dimension_numbers<[1], [0], [0], [1], [0, 0, 1, 1], [], []>} : vector<1x32xbf16>, vector<32x32xbf16>, vector<1x32xf32> -> vector<1x32xf32>
    %499 = vector.extract_strided_slice %6 {offsets = [9, 0], sizes = [1, 32], strides = [1, 1]} : vector<16x32xf32> to vector<1x32xf32>
    %500 = vector.extract_strided_slice %463 {offsets = [0, 384], sizes = [1, 32], strides = [1, 1]} : vector<1x512xf32> to vector<1x32xf32>
    %501 = arith.addf %499, %500 : vector<1x32xf32>
    %502 = arith.addf %501, %498 : vector<1x32xf32>
    %cst_128 = arith.constant 5.000000e-01 : f32
    %503 = vector.broadcast %cst_128 : f32 to vector<1x32xf32>
    %504 = arith.mulf %503, %502 : vector<1x32xf32>
    %505 = math.tanh %504 : vector<1x32xf32>
    %cst_129 = arith.constant 5.000000e-01 : f32
    %506 = vector.broadcast %cst_129 : f32 to vector<1x32xf32>
    %507 = arith.mulf %506, %505 : vector<1x32xf32>
    %cst_130 = arith.constant 5.000000e-01 : f32
    %508 = vector.broadcast %cst_130 : f32 to vector<1x32xf32>
    %509 = arith.addf %507, %508 : vector<1x32xf32>
    %510 = math.tanh %496 : vector<1x32xf32>
    %511 = arith.mulf %509, %510 : vector<1x32xf32>
    %512 = arith.truncf %511 : vector<1x32xf32> to vector<1x32xbf16>
    %cst_131 = arith.constant dense<0.000000e+00> : vector<1x512xf32>
    %513 = tpu.matmul %512, %7, %cst_131 {dimension_numbers = #tpu.dot_dimension_numbers<[1], [0], [0], [1], [0, 0, 1, 1], [], []>} : vector<1x32xbf16>, vector<32x512xbf16>, vector<1x512xf32> -> vector<1x512xf32>
    %514 = arith.truncf %496 : vector<1x32xf32> to vector<1x32xbf16>
    %cst_132 = arith.constant dense<0.000000e+00> : vector<1x256xf32>
    %515 = tpu.matmul %514, %8, %cst_132 {dimension_numbers = #tpu.dot_dimension_numbers<[1], [0], [0], [1], [0, 0, 1, 1], [], []>} : vector<1x32xbf16>, vector<32x256xbf16>, vector<1x256xf32> -> vector<1x256xf32>
    %516 = vector.extract_strided_slice %3 {offsets = [10, 0], sizes = [1, 32], strides = [1, 1]} : vector<16x32xf32> to vector<1x32xf32>
    %517 = vector.extract_strided_slice %513 {offsets = [0, 0], sizes = [1, 32], strides = [1, 1]} : vector<1x512xf32> to vector<1x32xf32>
    %518 = arith.addf %516, %517 : vector<1x32xf32>
    %519 = vector.extract_strided_slice %515 {offsets = [0, 0], sizes = [1, 32], strides = [1, 1]} : vector<1x256xf32> to vector<1x32xf32>
    %520 = arith.addf %518, %519 : vector<1x32xf32>
    %cst_133 = arith.constant 5.000000e-01 : f32
    %521 = vector.broadcast %cst_133 : f32 to vector<1x32xf32>
    %522 = arith.mulf %521, %520 : vector<1x32xf32>
    %523 = math.tanh %522 : vector<1x32xf32>
    %cst_134 = arith.constant 5.000000e-01 : f32
    %524 = vector.broadcast %cst_134 : f32 to vector<1x32xf32>
    %525 = arith.mulf %524, %523 : vector<1x32xf32>
    %cst_135 = arith.constant 5.000000e-01 : f32
    %526 = vector.broadcast %cst_135 : f32 to vector<1x32xf32>
    %527 = arith.addf %525, %526 : vector<1x32xf32>
    %528 = vector.extract_strided_slice %4 {offsets = [10, 0], sizes = [1, 32], strides = [1, 1]} : vector<16x32xf32> to vector<1x32xf32>
    %529 = vector.extract_strided_slice %513 {offsets = [0, 128], sizes = [1, 32], strides = [1, 1]} : vector<1x512xf32> to vector<1x32xf32>
    %530 = arith.addf %528, %529 : vector<1x32xf32>
    %531 = vector.extract_strided_slice %515 {offsets = [0, 128], sizes = [1, 32], strides = [1, 1]} : vector<1x256xf32> to vector<1x32xf32>
    %532 = arith.addf %530, %531 : vector<1x32xf32>
    %cst_136 = arith.constant 5.000000e-01 : f32
    %533 = vector.broadcast %cst_136 : f32 to vector<1x32xf32>
    %534 = arith.mulf %533, %532 : vector<1x32xf32>
    %535 = math.tanh %534 : vector<1x32xf32>
    %cst_137 = arith.constant 5.000000e-01 : f32
    %536 = vector.broadcast %cst_137 : f32 to vector<1x32xf32>
    %537 = arith.mulf %536, %535 : vector<1x32xf32>
    %cst_138 = arith.constant 5.000000e-01 : f32
    %538 = vector.broadcast %cst_138 : f32 to vector<1x32xf32>
    %539 = arith.addf %537, %538 : vector<1x32xf32>
    %540 = vector.extract_strided_slice %5 {offsets = [10, 0], sizes = [1, 32], strides = [1, 1]} : vector<16x32xf32> to vector<1x32xf32>
    %541 = vector.extract_strided_slice %513 {offsets = [0, 256], sizes = [1, 32], strides = [1, 1]} : vector<1x512xf32> to vector<1x32xf32>
    %542 = arith.addf %540, %541 : vector<1x32xf32>
    %543 = math.tanh %542 : vector<1x32xf32>
    %544 = arith.mulf %543, %527 : vector<1x32xf32>
    %545 = arith.mulf %539, %496 : vector<1x32xf32>
    %546 = arith.addf %544, %545 : vector<1x32xf32>
    %547 = arith.truncf %546 : vector<1x32xf32> to vector<1x32xbf16>
    %cst_139 = arith.constant dense<0.000000e+00> : vector<1x32xf32>
    %548 = tpu.matmul %547, %9, %cst_139 {dimension_numbers = #tpu.dot_dimension_numbers<[1], [0], [0], [1], [0, 0, 1, 1], [], []>} : vector<1x32xbf16>, vector<32x32xbf16>, vector<1x32xf32> -> vector<1x32xf32>
    %549 = vector.extract_strided_slice %6 {offsets = [10, 0], sizes = [1, 32], strides = [1, 1]} : vector<16x32xf32> to vector<1x32xf32>
    %550 = vector.extract_strided_slice %513 {offsets = [0, 384], sizes = [1, 32], strides = [1, 1]} : vector<1x512xf32> to vector<1x32xf32>
    %551 = arith.addf %549, %550 : vector<1x32xf32>
    %552 = arith.addf %551, %548 : vector<1x32xf32>
    %cst_140 = arith.constant 5.000000e-01 : f32
    %553 = vector.broadcast %cst_140 : f32 to vector<1x32xf32>
    %554 = arith.mulf %553, %552 : vector<1x32xf32>
    %555 = math.tanh %554 : vector<1x32xf32>
    %cst_141 = arith.constant 5.000000e-01 : f32
    %556 = vector.broadcast %cst_141 : f32 to vector<1x32xf32>
    %557 = arith.mulf %556, %555 : vector<1x32xf32>
    %cst_142 = arith.constant 5.000000e-01 : f32
    %558 = vector.broadcast %cst_142 : f32 to vector<1x32xf32>
    %559 = arith.addf %557, %558 : vector<1x32xf32>
    %560 = math.tanh %546 : vector<1x32xf32>
    %561 = arith.mulf %559, %560 : vector<1x32xf32>
    %562 = arith.truncf %561 : vector<1x32xf32> to vector<1x32xbf16>
    %cst_143 = arith.constant dense<0.000000e+00> : vector<1x512xf32>
    %563 = tpu.matmul %562, %7, %cst_143 {dimension_numbers = #tpu.dot_dimension_numbers<[1], [0], [0], [1], [0, 0, 1, 1], [], []>} : vector<1x32xbf16>, vector<32x512xbf16>, vector<1x512xf32> -> vector<1x512xf32>
    %564 = arith.truncf %546 : vector<1x32xf32> to vector<1x32xbf16>
    %cst_144 = arith.constant dense<0.000000e+00> : vector<1x256xf32>
    %565 = tpu.matmul %564, %8, %cst_144 {dimension_numbers = #tpu.dot_dimension_numbers<[1], [0], [0], [1], [0, 0, 1, 1], [], []>} : vector<1x32xbf16>, vector<32x256xbf16>, vector<1x256xf32> -> vector<1x256xf32>
    %566 = vector.extract_strided_slice %3 {offsets = [11, 0], sizes = [1, 32], strides = [1, 1]} : vector<16x32xf32> to vector<1x32xf32>
    %567 = vector.extract_strided_slice %563 {offsets = [0, 0], sizes = [1, 32], strides = [1, 1]} : vector<1x512xf32> to vector<1x32xf32>
    %568 = arith.addf %566, %567 : vector<1x32xf32>
    %569 = vector.extract_strided_slice %565 {offsets = [0, 0], sizes = [1, 32], strides = [1, 1]} : vector<1x256xf32> to vector<1x32xf32>
    %570 = arith.addf %568, %569 : vector<1x32xf32>
    %cst_145 = arith.constant 5.000000e-01 : f32
    %571 = vector.broadcast %cst_145 : f32 to vector<1x32xf32>
    %572 = arith.mulf %571, %570 : vector<1x32xf32>
    %573 = math.tanh %572 : vector<1x32xf32>
    %cst_146 = arith.constant 5.000000e-01 : f32
    %574 = vector.broadcast %cst_146 : f32 to vector<1x32xf32>
    %575 = arith.mulf %574, %573 : vector<1x32xf32>
    %cst_147 = arith.constant 5.000000e-01 : f32
    %576 = vector.broadcast %cst_147 : f32 to vector<1x32xf32>
    %577 = arith.addf %575, %576 : vector<1x32xf32>
    %578 = vector.extract_strided_slice %4 {offsets = [11, 0], sizes = [1, 32], strides = [1, 1]} : vector<16x32xf32> to vector<1x32xf32>
    %579 = vector.extract_strided_slice %563 {offsets = [0, 128], sizes = [1, 32], strides = [1, 1]} : vector<1x512xf32> to vector<1x32xf32>
    %580 = arith.addf %578, %579 : vector<1x32xf32>
    %581 = vector.extract_strided_slice %565 {offsets = [0, 128], sizes = [1, 32], strides = [1, 1]} : vector<1x256xf32> to vector<1x32xf32>
    %582 = arith.addf %580, %581 : vector<1x32xf32>
    %cst_148 = arith.constant 5.000000e-01 : f32
    %583 = vector.broadcast %cst_148 : f32 to vector<1x32xf32>
    %584 = arith.mulf %583, %582 : vector<1x32xf32>
    %585 = math.tanh %584 : vector<1x32xf32>
    %cst_149 = arith.constant 5.000000e-01 : f32
    %586 = vector.broadcast %cst_149 : f32 to vector<1x32xf32>
    %587 = arith.mulf %586, %585 : vector<1x32xf32>
    %cst_150 = arith.constant 5.000000e-01 : f32
    %588 = vector.broadcast %cst_150 : f32 to vector<1x32xf32>
    %589 = arith.addf %587, %588 : vector<1x32xf32>
    %590 = vector.extract_strided_slice %5 {offsets = [11, 0], sizes = [1, 32], strides = [1, 1]} : vector<16x32xf32> to vector<1x32xf32>
    %591 = vector.extract_strided_slice %563 {offsets = [0, 256], sizes = [1, 32], strides = [1, 1]} : vector<1x512xf32> to vector<1x32xf32>
    %592 = arith.addf %590, %591 : vector<1x32xf32>
    %593 = math.tanh %592 : vector<1x32xf32>
    %594 = arith.mulf %593, %577 : vector<1x32xf32>
    %595 = arith.mulf %589, %546 : vector<1x32xf32>
    %596 = arith.addf %594, %595 : vector<1x32xf32>
    %597 = arith.truncf %596 : vector<1x32xf32> to vector<1x32xbf16>
    %cst_151 = arith.constant dense<0.000000e+00> : vector<1x32xf32>
    %598 = tpu.matmul %597, %9, %cst_151 {dimension_numbers = #tpu.dot_dimension_numbers<[1], [0], [0], [1], [0, 0, 1, 1], [], []>} : vector<1x32xbf16>, vector<32x32xbf16>, vector<1x32xf32> -> vector<1x32xf32>
    %599 = vector.extract_strided_slice %6 {offsets = [11, 0], sizes = [1, 32], strides = [1, 1]} : vector<16x32xf32> to vector<1x32xf32>
    %600 = vector.extract_strided_slice %563 {offsets = [0, 384], sizes = [1, 32], strides = [1, 1]} : vector<1x512xf32> to vector<1x32xf32>
    %601 = arith.addf %599, %600 : vector<1x32xf32>
    %602 = arith.addf %601, %598 : vector<1x32xf32>
    %cst_152 = arith.constant 5.000000e-01 : f32
    %603 = vector.broadcast %cst_152 : f32 to vector<1x32xf32>
    %604 = arith.mulf %603, %602 : vector<1x32xf32>
    %605 = math.tanh %604 : vector<1x32xf32>
    %cst_153 = arith.constant 5.000000e-01 : f32
    %606 = vector.broadcast %cst_153 : f32 to vector<1x32xf32>
    %607 = arith.mulf %606, %605 : vector<1x32xf32>
    %cst_154 = arith.constant 5.000000e-01 : f32
    %608 = vector.broadcast %cst_154 : f32 to vector<1x32xf32>
    %609 = arith.addf %607, %608 : vector<1x32xf32>
    %610 = math.tanh %596 : vector<1x32xf32>
    %611 = arith.mulf %609, %610 : vector<1x32xf32>
    %612 = arith.truncf %611 : vector<1x32xf32> to vector<1x32xbf16>
    %cst_155 = arith.constant dense<0.000000e+00> : vector<1x512xf32>
    %613 = tpu.matmul %612, %7, %cst_155 {dimension_numbers = #tpu.dot_dimension_numbers<[1], [0], [0], [1], [0, 0, 1, 1], [], []>} : vector<1x32xbf16>, vector<32x512xbf16>, vector<1x512xf32> -> vector<1x512xf32>
    %614 = arith.truncf %596 : vector<1x32xf32> to vector<1x32xbf16>
    %cst_156 = arith.constant dense<0.000000e+00> : vector<1x256xf32>
    %615 = tpu.matmul %614, %8, %cst_156 {dimension_numbers = #tpu.dot_dimension_numbers<[1], [0], [0], [1], [0, 0, 1, 1], [], []>} : vector<1x32xbf16>, vector<32x256xbf16>, vector<1x256xf32> -> vector<1x256xf32>
    %616 = vector.extract_strided_slice %3 {offsets = [12, 0], sizes = [1, 32], strides = [1, 1]} : vector<16x32xf32> to vector<1x32xf32>
    %617 = vector.extract_strided_slice %613 {offsets = [0, 0], sizes = [1, 32], strides = [1, 1]} : vector<1x512xf32> to vector<1x32xf32>
    %618 = arith.addf %616, %617 : vector<1x32xf32>
    %619 = vector.extract_strided_slice %615 {offsets = [0, 0], sizes = [1, 32], strides = [1, 1]} : vector<1x256xf32> to vector<1x32xf32>
    %620 = arith.addf %618, %619 : vector<1x32xf32>
    %cst_157 = arith.constant 5.000000e-01 : f32
    %621 = vector.broadcast %cst_157 : f32 to vector<1x32xf32>
    %622 = arith.mulf %621, %620 : vector<1x32xf32>
    %623 = math.tanh %622 : vector<1x32xf32>
    %cst_158 = arith.constant 5.000000e-01 : f32
    %624 = vector.broadcast %cst_158 : f32 to vector<1x32xf32>
    %625 = arith.mulf %624, %623 : vector<1x32xf32>
    %cst_159 = arith.constant 5.000000e-01 : f32
    %626 = vector.broadcast %cst_159 : f32 to vector<1x32xf32>
    %627 = arith.addf %625, %626 : vector<1x32xf32>
    %628 = vector.extract_strided_slice %4 {offsets = [12, 0], sizes = [1, 32], strides = [1, 1]} : vector<16x32xf32> to vector<1x32xf32>
    %629 = vector.extract_strided_slice %613 {offsets = [0, 128], sizes = [1, 32], strides = [1, 1]} : vector<1x512xf32> to vector<1x32xf32>
    %630 = arith.addf %628, %629 : vector<1x32xf32>
    %631 = vector.extract_strided_slice %615 {offsets = [0, 128], sizes = [1, 32], strides = [1, 1]} : vector<1x256xf32> to vector<1x32xf32>
    %632 = arith.addf %630, %631 : vector<1x32xf32>
    %cst_160 = arith.constant 5.000000e-01 : f32
    %633 = vector.broadcast %cst_160 : f32 to vector<1x32xf32>
    %634 = arith.mulf %633, %632 : vector<1x32xf32>
    %635 = math.tanh %634 : vector<1x32xf32>
    %cst_161 = arith.constant 5.000000e-01 : f32
    %636 = vector.broadcast %cst_161 : f32 to vector<1x32xf32>
    %637 = arith.mulf %636, %635 : vector<1x32xf32>
    %cst_162 = arith.constant 5.000000e-01 : f32
    %638 = vector.broadcast %cst_162 : f32 to vector<1x32xf32>
    %639 = arith.addf %637, %638 : vector<1x32xf32>
    %640 = vector.extract_strided_slice %5 {offsets = [12, 0], sizes = [1, 32], strides = [1, 1]} : vector<16x32xf32> to vector<1x32xf32>
    %641 = vector.extract_strided_slice %613 {offsets = [0, 256], sizes = [1, 32], strides = [1, 1]} : vector<1x512xf32> to vector<1x32xf32>
    %642 = arith.addf %640, %641 : vector<1x32xf32>
    %643 = math.tanh %642 : vector<1x32xf32>
    %644 = arith.mulf %643, %627 : vector<1x32xf32>
    %645 = arith.mulf %639, %596 : vector<1x32xf32>
    %646 = arith.addf %644, %645 : vector<1x32xf32>
    %647 = arith.truncf %646 : vector<1x32xf32> to vector<1x32xbf16>
    %cst_163 = arith.constant dense<0.000000e+00> : vector<1x32xf32>
    %648 = tpu.matmul %647, %9, %cst_163 {dimension_numbers = #tpu.dot_dimension_numbers<[1], [0], [0], [1], [0, 0, 1, 1], [], []>} : vector<1x32xbf16>, vector<32x32xbf16>, vector<1x32xf32> -> vector<1x32xf32>
    %649 = vector.extract_strided_slice %6 {offsets = [12, 0], sizes = [1, 32], strides = [1, 1]} : vector<16x32xf32> to vector<1x32xf32>
    %650 = vector.extract_strided_slice %613 {offsets = [0, 384], sizes = [1, 32], strides = [1, 1]} : vector<1x512xf32> to vector<1x32xf32>
    %651 = arith.addf %649, %650 : vector<1x32xf32>
    %652 = arith.addf %651, %648 : vector<1x32xf32>
    %cst_164 = arith.constant 5.000000e-01 : f32
    %653 = vector.broadcast %cst_164 : f32 to vector<1x32xf32>
    %654 = arith.mulf %653, %652 : vector<1x32xf32>
    %655 = math.tanh %654 : vector<1x32xf32>
    %cst_165 = arith.constant 5.000000e-01 : f32
    %656 = vector.broadcast %cst_165 : f32 to vector<1x32xf32>
    %657 = arith.mulf %656, %655 : vector<1x32xf32>
    %cst_166 = arith.constant 5.000000e-01 : f32
    %658 = vector.broadcast %cst_166 : f32 to vector<1x32xf32>
    %659 = arith.addf %657, %658 : vector<1x32xf32>
    %660 = math.tanh %646 : vector<1x32xf32>
    %661 = arith.mulf %659, %660 : vector<1x32xf32>
    %662 = arith.truncf %661 : vector<1x32xf32> to vector<1x32xbf16>
    %cst_167 = arith.constant dense<0.000000e+00> : vector<1x512xf32>
    %663 = tpu.matmul %662, %7, %cst_167 {dimension_numbers = #tpu.dot_dimension_numbers<[1], [0], [0], [1], [0, 0, 1, 1], [], []>} : vector<1x32xbf16>, vector<32x512xbf16>, vector<1x512xf32> -> vector<1x512xf32>
    %664 = arith.truncf %646 : vector<1x32xf32> to vector<1x32xbf16>
    %cst_168 = arith.constant dense<0.000000e+00> : vector<1x256xf32>
    %665 = tpu.matmul %664, %8, %cst_168 {dimension_numbers = #tpu.dot_dimension_numbers<[1], [0], [0], [1], [0, 0, 1, 1], [], []>} : vector<1x32xbf16>, vector<32x256xbf16>, vector<1x256xf32> -> vector<1x256xf32>
    %666 = vector.extract_strided_slice %3 {offsets = [13, 0], sizes = [1, 32], strides = [1, 1]} : vector<16x32xf32> to vector<1x32xf32>
    %667 = vector.extract_strided_slice %663 {offsets = [0, 0], sizes = [1, 32], strides = [1, 1]} : vector<1x512xf32> to vector<1x32xf32>
    %668 = arith.addf %666, %667 : vector<1x32xf32>
    %669 = vector.extract_strided_slice %665 {offsets = [0, 0], sizes = [1, 32], strides = [1, 1]} : vector<1x256xf32> to vector<1x32xf32>
    %670 = arith.addf %668, %669 : vector<1x32xf32>
    %cst_169 = arith.constant 5.000000e-01 : f32
    %671 = vector.broadcast %cst_169 : f32 to vector<1x32xf32>
    %672 = arith.mulf %671, %670 : vector<1x32xf32>
    %673 = math.tanh %672 : vector<1x32xf32>
    %cst_170 = arith.constant 5.000000e-01 : f32
    %674 = vector.broadcast %cst_170 : f32 to vector<1x32xf32>
    %675 = arith.mulf %674, %673 : vector<1x32xf32>
    %cst_171 = arith.constant 5.000000e-01 : f32
    %676 = vector.broadcast %cst_171 : f32 to vector<1x32xf32>
    %677 = arith.addf %675, %676 : vector<1x32xf32>
    %678 = vector.extract_strided_slice %4 {offsets = [13, 0], sizes = [1, 32], strides = [1, 1]} : vector<16x32xf32> to vector<1x32xf32>
    %679 = vector.extract_strided_slice %663 {offsets = [0, 128], sizes = [1, 32], strides = [1, 1]} : vector<1x512xf32> to vector<1x32xf32>
    %680 = arith.addf %678, %679 : vector<1x32xf32>
    %681 = vector.extract_strided_slice %665 {offsets = [0, 128], sizes = [1, 32], strides = [1, 1]} : vector<1x256xf32> to vector<1x32xf32>
    %682 = arith.addf %680, %681 : vector<1x32xf32>
    %cst_172 = arith.constant 5.000000e-01 : f32
    %683 = vector.broadcast %cst_172 : f32 to vector<1x32xf32>
    %684 = arith.mulf %683, %682 : vector<1x32xf32>
    %685 = math.tanh %684 : vector<1x32xf32>
    %cst_173 = arith.constant 5.000000e-01 : f32
    %686 = vector.broadcast %cst_173 : f32 to vector<1x32xf32>
    %687 = arith.mulf %686, %685 : vector<1x32xf32>
    %cst_174 = arith.constant 5.000000e-01 : f32
    %688 = vector.broadcast %cst_174 : f32 to vector<1x32xf32>
    %689 = arith.addf %687, %688 : vector<1x32xf32>
    %690 = vector.extract_strided_slice %5 {offsets = [13, 0], sizes = [1, 32], strides = [1, 1]} : vector<16x32xf32> to vector<1x32xf32>
    %691 = vector.extract_strided_slice %663 {offsets = [0, 256], sizes = [1, 32], strides = [1, 1]} : vector<1x512xf32> to vector<1x32xf32>
    %692 = arith.addf %690, %691 : vector<1x32xf32>
    %693 = math.tanh %692 : vector<1x32xf32>
    %694 = arith.mulf %693, %677 : vector<1x32xf32>
    %695 = arith.mulf %689, %646 : vector<1x32xf32>
    %696 = arith.addf %694, %695 : vector<1x32xf32>
    %697 = arith.truncf %696 : vector<1x32xf32> to vector<1x32xbf16>
    %cst_175 = arith.constant dense<0.000000e+00> : vector<1x32xf32>
    %698 = tpu.matmul %697, %9, %cst_175 {dimension_numbers = #tpu.dot_dimension_numbers<[1], [0], [0], [1], [0, 0, 1, 1], [], []>} : vector<1x32xbf16>, vector<32x32xbf16>, vector<1x32xf32> -> vector<1x32xf32>
    %699 = vector.extract_strided_slice %6 {offsets = [13, 0], sizes = [1, 32], strides = [1, 1]} : vector<16x32xf32> to vector<1x32xf32>
    %700 = vector.extract_strided_slice %663 {offsets = [0, 384], sizes = [1, 32], strides = [1, 1]} : vector<1x512xf32> to vector<1x32xf32>
    %701 = arith.addf %699, %700 : vector<1x32xf32>
    %702 = arith.addf %701, %698 : vector<1x32xf32>
    %cst_176 = arith.constant 5.000000e-01 : f32
    %703 = vector.broadcast %cst_176 : f32 to vector<1x32xf32>
    %704 = arith.mulf %703, %702 : vector<1x32xf32>
    %705 = math.tanh %704 : vector<1x32xf32>
    %cst_177 = arith.constant 5.000000e-01 : f32
    %706 = vector.broadcast %cst_177 : f32 to vector<1x32xf32>
    %707 = arith.mulf %706, %705 : vector<1x32xf32>
    %cst_178 = arith.constant 5.000000e-01 : f32
    %708 = vector.broadcast %cst_178 : f32 to vector<1x32xf32>
    %709 = arith.addf %707, %708 : vector<1x32xf32>
    %710 = math.tanh %696 : vector<1x32xf32>
    %711 = arith.mulf %709, %710 : vector<1x32xf32>
    %712 = arith.truncf %711 : vector<1x32xf32> to vector<1x32xbf16>
    %cst_179 = arith.constant dense<0.000000e+00> : vector<1x512xf32>
    %713 = tpu.matmul %712, %7, %cst_179 {dimension_numbers = #tpu.dot_dimension_numbers<[1], [0], [0], [1], [0, 0, 1, 1], [], []>} : vector<1x32xbf16>, vector<32x512xbf16>, vector<1x512xf32> -> vector<1x512xf32>
    %714 = arith.truncf %696 : vector<1x32xf32> to vector<1x32xbf16>
    %cst_180 = arith.constant dense<0.000000e+00> : vector<1x256xf32>
    %715 = tpu.matmul %714, %8, %cst_180 {dimension_numbers = #tpu.dot_dimension_numbers<[1], [0], [0], [1], [0, 0, 1, 1], [], []>} : vector<1x32xbf16>, vector<32x256xbf16>, vector<1x256xf32> -> vector<1x256xf32>
    %716 = vector.extract_strided_slice %3 {offsets = [14, 0], sizes = [1, 32], strides = [1, 1]} : vector<16x32xf32> to vector<1x32xf32>
    %717 = vector.extract_strided_slice %713 {offsets = [0, 0], sizes = [1, 32], strides = [1, 1]} : vector<1x512xf32> to vector<1x32xf32>
    %718 = arith.addf %716, %717 : vector<1x32xf32>
    %719 = vector.extract_strided_slice %715 {offsets = [0, 0], sizes = [1, 32], strides = [1, 1]} : vector<1x256xf32> to vector<1x32xf32>
    %720 = arith.addf %718, %719 : vector<1x32xf32>
    %cst_181 = arith.constant 5.000000e-01 : f32
    %721 = vector.broadcast %cst_181 : f32 to vector<1x32xf32>
    %722 = arith.mulf %721, %720 : vector<1x32xf32>
    %723 = math.tanh %722 : vector<1x32xf32>
    %cst_182 = arith.constant 5.000000e-01 : f32
    %724 = vector.broadcast %cst_182 : f32 to vector<1x32xf32>
    %725 = arith.mulf %724, %723 : vector<1x32xf32>
    %cst_183 = arith.constant 5.000000e-01 : f32
    %726 = vector.broadcast %cst_183 : f32 to vector<1x32xf32>
    %727 = arith.addf %725, %726 : vector<1x32xf32>
    %728 = vector.extract_strided_slice %4 {offsets = [14, 0], sizes = [1, 32], strides = [1, 1]} : vector<16x32xf32> to vector<1x32xf32>
    %729 = vector.extract_strided_slice %713 {offsets = [0, 128], sizes = [1, 32], strides = [1, 1]} : vector<1x512xf32> to vector<1x32xf32>
    %730 = arith.addf %728, %729 : vector<1x32xf32>
    %731 = vector.extract_strided_slice %715 {offsets = [0, 128], sizes = [1, 32], strides = [1, 1]} : vector<1x256xf32> to vector<1x32xf32>
    %732 = arith.addf %730, %731 : vector<1x32xf32>
    %cst_184 = arith.constant 5.000000e-01 : f32
    %733 = vector.broadcast %cst_184 : f32 to vector<1x32xf32>
    %734 = arith.mulf %733, %732 : vector<1x32xf32>
    %735 = math.tanh %734 : vector<1x32xf32>
    %cst_185 = arith.constant 5.000000e-01 : f32
    %736 = vector.broadcast %cst_185 : f32 to vector<1x32xf32>
    %737 = arith.mulf %736, %735 : vector<1x32xf32>
    %cst_186 = arith.constant 5.000000e-01 : f32
    %738 = vector.broadcast %cst_186 : f32 to vector<1x32xf32>
    %739 = arith.addf %737, %738 : vector<1x32xf32>
    %740 = vector.extract_strided_slice %5 {offsets = [14, 0], sizes = [1, 32], strides = [1, 1]} : vector<16x32xf32> to vector<1x32xf32>
    %741 = vector.extract_strided_slice %713 {offsets = [0, 256], sizes = [1, 32], strides = [1, 1]} : vector<1x512xf32> to vector<1x32xf32>
    %742 = arith.addf %740, %741 : vector<1x32xf32>
    %743 = math.tanh %742 : vector<1x32xf32>
    %744 = arith.mulf %743, %727 : vector<1x32xf32>
    %745 = arith.mulf %739, %696 : vector<1x32xf32>
    %746 = arith.addf %744, %745 : vector<1x32xf32>
    %747 = arith.truncf %746 : vector<1x32xf32> to vector<1x32xbf16>
    %cst_187 = arith.constant dense<0.000000e+00> : vector<1x32xf32>
    %748 = tpu.matmul %747, %9, %cst_187 {dimension_numbers = #tpu.dot_dimension_numbers<[1], [0], [0], [1], [0, 0, 1, 1], [], []>} : vector<1x32xbf16>, vector<32x32xbf16>, vector<1x32xf32> -> vector<1x32xf32>
    %749 = vector.extract_strided_slice %6 {offsets = [14, 0], sizes = [1, 32], strides = [1, 1]} : vector<16x32xf32> to vector<1x32xf32>
    %750 = vector.extract_strided_slice %713 {offsets = [0, 384], sizes = [1, 32], strides = [1, 1]} : vector<1x512xf32> to vector<1x32xf32>
    %751 = arith.addf %749, %750 : vector<1x32xf32>
    %752 = arith.addf %751, %748 : vector<1x32xf32>
    %cst_188 = arith.constant 5.000000e-01 : f32
    %753 = vector.broadcast %cst_188 : f32 to vector<1x32xf32>
    %754 = arith.mulf %753, %752 : vector<1x32xf32>
    %755 = math.tanh %754 : vector<1x32xf32>
    %cst_189 = arith.constant 5.000000e-01 : f32
    %756 = vector.broadcast %cst_189 : f32 to vector<1x32xf32>
    %757 = arith.mulf %756, %755 : vector<1x32xf32>
    %cst_190 = arith.constant 5.000000e-01 : f32
    %758 = vector.broadcast %cst_190 : f32 to vector<1x32xf32>
    %759 = arith.addf %757, %758 : vector<1x32xf32>
    %760 = math.tanh %746 : vector<1x32xf32>
    %761 = arith.mulf %759, %760 : vector<1x32xf32>
    %762 = arith.truncf %761 : vector<1x32xf32> to vector<1x32xbf16>
    %cst_191 = arith.constant dense<0.000000e+00> : vector<1x512xf32>
    %763 = tpu.matmul %762, %7, %cst_191 {dimension_numbers = #tpu.dot_dimension_numbers<[1], [0], [0], [1], [0, 0, 1, 1], [], []>} : vector<1x32xbf16>, vector<32x512xbf16>, vector<1x512xf32> -> vector<1x512xf32>
    %764 = arith.truncf %746 : vector<1x32xf32> to vector<1x32xbf16>
    %cst_192 = arith.constant dense<0.000000e+00> : vector<1x256xf32>
    %765 = tpu.matmul %764, %8, %cst_192 {dimension_numbers = #tpu.dot_dimension_numbers<[1], [0], [0], [1], [0, 0, 1, 1], [], []>} : vector<1x32xbf16>, vector<32x256xbf16>, vector<1x256xf32> -> vector<1x256xf32>
    %766 = vector.extract_strided_slice %3 {offsets = [15, 0], sizes = [1, 32], strides = [1, 1]} : vector<16x32xf32> to vector<1x32xf32>
    %767 = vector.extract_strided_slice %763 {offsets = [0, 0], sizes = [1, 32], strides = [1, 1]} : vector<1x512xf32> to vector<1x32xf32>
    %768 = arith.addf %766, %767 : vector<1x32xf32>
    %769 = vector.extract_strided_slice %765 {offsets = [0, 0], sizes = [1, 32], strides = [1, 1]} : vector<1x256xf32> to vector<1x32xf32>
    %770 = arith.addf %768, %769 : vector<1x32xf32>
    %cst_193 = arith.constant 5.000000e-01 : f32
    %771 = vector.broadcast %cst_193 : f32 to vector<1x32xf32>
    %772 = arith.mulf %771, %770 : vector<1x32xf32>
    %773 = math.tanh %772 : vector<1x32xf32>
    %cst_194 = arith.constant 5.000000e-01 : f32
    %774 = vector.broadcast %cst_194 : f32 to vector<1x32xf32>
    %775 = arith.mulf %774, %773 : vector<1x32xf32>
    %cst_195 = arith.constant 5.000000e-01 : f32
    %776 = vector.broadcast %cst_195 : f32 to vector<1x32xf32>
    %777 = arith.addf %775, %776 : vector<1x32xf32>
    %778 = vector.extract_strided_slice %4 {offsets = [15, 0], sizes = [1, 32], strides = [1, 1]} : vector<16x32xf32> to vector<1x32xf32>
    %779 = vector.extract_strided_slice %763 {offsets = [0, 128], sizes = [1, 32], strides = [1, 1]} : vector<1x512xf32> to vector<1x32xf32>
    %780 = arith.addf %778, %779 : vector<1x32xf32>
    %781 = vector.extract_strided_slice %765 {offsets = [0, 128], sizes = [1, 32], strides = [1, 1]} : vector<1x256xf32> to vector<1x32xf32>
    %782 = arith.addf %780, %781 : vector<1x32xf32>
    %cst_196 = arith.constant 5.000000e-01 : f32
    %783 = vector.broadcast %cst_196 : f32 to vector<1x32xf32>
    %784 = arith.mulf %783, %782 : vector<1x32xf32>
    %785 = math.tanh %784 : vector<1x32xf32>
    %cst_197 = arith.constant 5.000000e-01 : f32
    %786 = vector.broadcast %cst_197 : f32 to vector<1x32xf32>
    %787 = arith.mulf %786, %785 : vector<1x32xf32>
    %cst_198 = arith.constant 5.000000e-01 : f32
    %788 = vector.broadcast %cst_198 : f32 to vector<1x32xf32>
    %789 = arith.addf %787, %788 : vector<1x32xf32>
    %790 = vector.extract_strided_slice %5 {offsets = [15, 0], sizes = [1, 32], strides = [1, 1]} : vector<16x32xf32> to vector<1x32xf32>
    %791 = vector.extract_strided_slice %763 {offsets = [0, 256], sizes = [1, 32], strides = [1, 1]} : vector<1x512xf32> to vector<1x32xf32>
    %792 = arith.addf %790, %791 : vector<1x32xf32>
    %793 = math.tanh %792 : vector<1x32xf32>
    %794 = arith.mulf %793, %777 : vector<1x32xf32>
    %795 = arith.mulf %789, %746 : vector<1x32xf32>
    %796 = arith.addf %794, %795 : vector<1x32xf32>
    %797 = arith.truncf %796 : vector<1x32xf32> to vector<1x32xbf16>
    %cst_199 = arith.constant dense<0.000000e+00> : vector<1x32xf32>
    %798 = tpu.matmul %797, %9, %cst_199 {dimension_numbers = #tpu.dot_dimension_numbers<[1], [0], [0], [1], [0, 0, 1, 1], [], []>} : vector<1x32xbf16>, vector<32x32xbf16>, vector<1x32xf32> -> vector<1x32xf32>
    %799 = vector.extract_strided_slice %6 {offsets = [15, 0], sizes = [1, 32], strides = [1, 1]} : vector<16x32xf32> to vector<1x32xf32>
    %800 = vector.extract_strided_slice %763 {offsets = [0, 384], sizes = [1, 32], strides = [1, 1]} : vector<1x512xf32> to vector<1x32xf32>
    %801 = arith.addf %799, %800 : vector<1x32xf32>
    %802 = arith.addf %801, %798 : vector<1x32xf32>
    %cst_200 = arith.constant 5.000000e-01 : f32
    %803 = vector.broadcast %cst_200 : f32 to vector<1x32xf32>
    %804 = arith.mulf %803, %802 : vector<1x32xf32>
    %805 = math.tanh %804 : vector<1x32xf32>
    %cst_201 = arith.constant 5.000000e-01 : f32
    %806 = vector.broadcast %cst_201 : f32 to vector<1x32xf32>
    %807 = arith.mulf %806, %805 : vector<1x32xf32>
    %cst_202 = arith.constant 5.000000e-01 : f32
    %808 = vector.broadcast %cst_202 : f32 to vector<1x32xf32>
    %809 = arith.addf %807, %808 : vector<1x32xf32>
    %810 = math.tanh %796 : vector<1x32xf32>
    %811 = arith.mulf %809, %810 : vector<1x32xf32>
    %812 = tpu.concatenate %411, %811 in 0 : vector<1x32xf32>, vector<1x32xf32> -> vector<2x32xf32>
    %c0_203 = arith.constant 0 : index
    %c0_204 = arith.constant 0 : index
    %813 = vector.load %arg6[%c0_203, %c0_204] : memref<32x3xf32, #tpu.memory_space<vmem>>, vector<32x3xf32>
    %cst_205 = arith.constant dense<0.000000e+00> : vector<2x3xf32>
    %814 = tpu.matmul %812, %813, %cst_205 {dimension_numbers = #tpu.dot_dimension_numbers<[1], [0], [0], [1], [0, 0, 1, 1], [], []>} : vector<2x32xf32>, vector<32x3xf32>, vector<2x3xf32> -> vector<2x3xf32>
    %c0_206 = arith.constant 0 : index
    %c0_207 = arith.constant 0 : index
    %815 = vector.load %arg7[%c0_206, %c0_207] : memref<1x3xf32, #tpu.memory_space<vmem>>, vector<1x3xf32>
    %816 = vector.broadcast %815 : vector<1x3xf32> to vector<2x3xf32>
    %817 = arith.addf %814, %816 : vector<2x3xf32>
    %c0_208 = arith.constant 0 : index
    %c0_209 = arith.constant 0 : index
    %818 = vector.load %arg8[%c0_208, %c0_209] : memref<2x3xf32, #tpu.memory_space<vmem>>, vector<2x3xf32>
    tpu.vector_store %arg8[%c0_208, %c0_209], %817 {strides = array<i32>} : memref<2x3xf32, #tpu.memory_space<vmem>>, vector<2x3xf32>,
    return
  }
  func.func @transform_0(%arg0: i32) -> (i32, i32) {
    %c0_i32 = arith.constant 0 : i32
    %c0_i32_0 = arith.constant 0 : i32
    %c0_i32_1 = arith.constant 0 : i32
    return %c0_i32, %c0_i32_0 : i32, i32
  }
  func.func @transform_1(%arg0: i32) -> (i32, i32) {
    %c0_i32 = arith.constant 0 : i32
    %c0_i32_0 = arith.constant 0 : i32
    %c0_i32_1 = arith.constant 0 : i32
    return %c0_i32, %c0_i32_0 : i32, i32
  }
  func.func @transform_2(%arg0: i32) -> (i32, i32) {
    %c0_i32 = arith.constant 0 : i32
    %c0_i32_0 = arith.constant 0 : i32
    %c0_i32_1 = arith.constant 0 : i32
    return %c0_i32, %c0_i32_0 : i32, i32
  }
  func.func @transform_3(%arg0: i32) -> (i32, i32) {
    %c0_i32 = arith.constant 0 : i32
    %c0_i32_0 = arith.constant 0 : i32
    %c0_i32_1 = arith.constant 0 : i32
    return %c0_i32, %c0_i32_0 : i32, i32
  }
  func.func @transform_4(%arg0: i32) -> (i32, i32) {
    %c0_i32 = arith.constant 0 : i32
    %c0_i32_0 = arith.constant 0 : i32
    %c0_i32_1 = arith.constant 0 : i32
    return %c0_i32, %c0_i32_0 : i32, i32
  }
  func.func @transform_5(%arg0: i32) -> (i32, i32) {
    %c0_i32 = arith.constant 0 : i32
    %c0_i32_0 = arith.constant 0 : i32
    %c0_i32_1 = arith.constant 0 : i32
    return %c0_i32, %c0_i32_0 : i32, i32
  }
  func.func @transform_6(%arg0: i32) -> (i32, i32) {
    %c0_i32 = arith.constant 0 : i32
    %c0_i32_0 = arith.constant 0 : i32
    %c0_i32_1 = arith.constant 0 : i32
    return %c0_i32, %c0_i32_0 : i32, i32
  }
  func.func @transform_7(%arg0: i32) -> (i32, i32) {
    %c0_i32 = arith.constant 0 : i32
    %c0_i32_0 = arith.constant 0 : i32
    %c0_i32_1 = arith.constant 0 : i32
    return %c0_i32, %c0_i32_0 : i32, i32
  }
}

</mosaic_0001>

<llo_original>
// kernel: tpu_custom_call.1
$region0: #{tpu_custom_call.1}
  #allocation0 [shape = 'u32[]', space=smem, size = 0x4, offset = 0x4, fixed_abs, tag = 'smem constant byte address 0x4 - core index']
  #allocation1 [shape = 'u32[144,128]{1,0:T(1,128)}', space=vmem, size = 0x12000, scoped, tag = 'internal scratch']
  %s0 = inlined_call_operand.vmem [shape: f32[16,4], index: 0, kind: input, shape index: {}]
  %s1 = inlined_call_operand.vmem [shape: f32[4,512], index: 1, kind: input, shape index: {}]
  %s2 = inlined_call_operand.hbm [shape: bf16[32,512], index: 2, kind: input, shape index: {}]
  %s3 = inlined_call_operand.vmem [shape: bf16[32,256], index: 3, kind: input, shape index: {}]
  %s4 = inlined_call_operand.vmem [shape: bf16[32,32], index: 4, kind: input, shape index: {}]
  %s5 = inlined_call_operand.vmem [shape: f32[32,3], index: 5, kind: input, shape index: {}]
  %s6 = inlined_call_operand.vmem [shape: f32[1,3], index: 6, kind: input, shape index: {}]
  %s7 = inlined_call_operand.hbm [shape: f32[2,3], index: 7, kind: output, shape index: {}]
  %s8 = sld [smem:[#allocation0]]
  $region42: #{tpu_custom_call.1} parent=0
    _
  %s10 = ssub.s32 1, %s8
  %s11 = scalar_select 0, %s10, %s8
  $region1: #{tpu_custom_call.1} parent=0
    #allocation2 [shape = 'u8[32768]{0}', space=vmem, size = 0x8000, scoped, tag = 'input window, operand 2, single buffered']
    #allocation3 [shape = 's32[1]{0}', space=sflag, size = 0x4, scoped, tag = 'scoped memory for tpu_custom_call.1']
    #allocation4 [shape = 's32[1]{0}', space=sflag, size = 0x4, scoped, tag = 'scoped memory for tpu_custom_call.1']
    #allocation5 [shape = 'u8[1024]{0}', space=vmem, size = 0x400, scoped, tag = 'output window, operand 0, single buffered']
    %12 = vsyncpa [#allocation3], 0
    %13 = vsyncpa [#allocation4], 0
    // Predicated region
    $region2: #{tpu_custom_call.1} parent=1 // pred_check
      _
    $region3: #{tpu_custom_call.1} parent=1 // pred_check_branch
      %15 = sbr.rel (0) target = $region5
    $region4: #{tpu_custom_call.1} parent=1 // pred_region
      _
    $region5: #{tpu_custom_call.1} parent=1 // pred_fallthru
      _
    // Predicated region
    $region6: #{tpu_custom_call.1} parent=1 // pred_check
      _
    $region7: #{tpu_custom_call.1} parent=1 // pred_check_branch
      %17 = sbr.rel (0) target = $region9
    $region8: #{tpu_custom_call.1} parent=1 // pred_region
      _
    $region9: #{tpu_custom_call.1} parent=1 // pred_fallthru
      _
    // Predicated region
    $region10: #{tpu_custom_call.1} parent=1 // pred_check
      _
    $region11: #{tpu_custom_call.1} parent=1 // pred_check_branch
      %19 = sbr.rel (0) target = $region13
    $region12: #{tpu_custom_call.1} parent=1 // pred_region
      %s21 = ssub.s32 1024, 1024
      %22 = vsyncadd [#allocation3], %s21
      %s23 = sshll.u32 [#allocation2], 4
      %s24 = int_to_ptr.vmem [resolvable:$true] %s23
      %29 = dma.hbm_to_vmem [thread:$0]  %s2, 1024, %s24, [#allocation3], 256, 256, 16
    $region13: #{tpu_custom_call.1} parent=1 // pred_fallthru
      _
    // Predicated region
    $region14: #{tpu_custom_call.1} parent=1 // pred_check
      _
    $region15: #{tpu_custom_call.1} parent=1 // pred_check_branch
      %31 = sbr.rel (0) target = $region17
    $region16: #{tpu_custom_call.1} parent=1 // pred_region
      _
    $region17: #{tpu_custom_call.1} parent=1 // pred_fallthru
      _
    // Predicated region
    $region18: #{tpu_custom_call.1} parent=1 // pred_check
      _
    $region19: #{tpu_custom_call.1} parent=1 // pred_check_branch
      %33 = sbr.rel (0) target = $region21
    $region20: #{tpu_custom_call.1} parent=1 // pred_region
      _
    $region21: #{tpu_custom_call.1} parent=1 // pred_fallthru
      _
    // Predicated region
    $region22: #{tpu_custom_call.1} parent=1 // pred_check
      _
    $region23: #{tpu_custom_call.1} parent=1 // pred_check_branch
      %35 = sbr.rel (0) target = $region25
    $region24: #{tpu_custom_call.1} parent=1 // pred_region
      _
    $region25: #{tpu_custom_call.1} parent=1 // pred_fallthru
      _
    // Predicated region
    $region26: #{tpu_custom_call.1} parent=1 // pred_check
      _
    $region27: #{tpu_custom_call.1} parent=1 // pred_check_branch
      %37 = sbr.rel (0) target = $region29
    $region28: #{tpu_custom_call.1} parent=1 // pred_region
      _
    $region29: #{tpu_custom_call.1} parent=1 // pred_fallthru
      _
    // Predicated region
    $region30: #{tpu_custom_call.1} parent=1 // pred_check
      _
    $region31: #{tpu_custom_call.1} parent=1 // pred_check_branch
      %39 = sbr.rel (0) target = $region33
    $region32: #{tpu_custom_call.1} parent=1 // pred_region
      %40 = dma.done [#allocation3], 1024
    $region33: #{tpu_custom_call.1} parent=1 // pred_fallthru
      _
    %v42 = vld [vmem:[%s0] sm:$0xff]
    %v43 = vld [vmem:[%s0 + $0x8] sm:$0xff]
    %v44 = vld [vmem:[%s1] sm:$0xff]
    %v45 = vld [vmem:[%s1 + $0x8] sm:$0xff]
    %v48 = vcombine.high %v44, %v44
    %v49 = vcombine.high %v45, %v45
    %vm50 = vcmask 31744
    %v52 = vsel %vm50, %v42, 0
    %v55 = vsel %vm50, %v43, 0
    %vm57 = vcmask 1043456
    %v58 = vsel %vm57, %v44, 0
    %v60 = vsel %vm57, %v48, 0
    %v62 = vsel %vm57, %v45, 0
    %v64 = vsel %vm57, %v49, 0
    %66 = vmatprep.subr.mxu0 %v60
    %67 = vmatpush1.msra.mxu0 %v58
    %68 = vmatprep.subr.mxu0 0.0
    %69 = vmatpush1.msra.mxu0 0.0
    %70 = vmatprep.subr.mxu0 0.0
    %71 = vmatpush1.msra.mxu0 0.0
    %72 = vmatprep.subr.mxu0 0.0
    %73 = vmatpush1.msra.mxu0 0.0
    %74 = vmatprep.subr.mxu0 0.0
    %75 = vmatpush1.msra.mxu0 0.0
    %76 = vmatprep.subr.mxu0 0.0
    %77 = vmatpush1.msra.mxu0 0.0
    %78 = vmatprep.subr.mxu0 0.0
    %79 = vmatpush1.msra.mxu0 0.0
    %80 = vmatprep.subr.mxu0 0.0
    %81 = vmatpush1.msra.mxu0 0.0
    %82 = vmatprep.subr.mxu0 0.0
    %83 = vmatpush1.msra.mxu0 0.0
    %84 = vmatprep.subr.mxu0 0.0
    %85 = vmatpush1.msra.mxu0 0.0
    %86 = vmatprep.subr.mxu0 0.0
    %87 = vmatpush1.msra.mxu0 0.0
    %88 = vmatprep.subr.mxu0 0.0
    %89 = vmatpush1.msra.mxu0 0.0
    %90 = vmatprep.subr.mxu0 0.0
    %91 = vmatpush1.msra.mxu0 0.0
    %92 = vmatprep.subr.mxu0 0.0
    %93 = vmatpush1.msra.mxu0 0.0
    %94 = vmatprep.subr.mxu0 0.0
    %95 = vmatpush1.msra.mxu0 0.0
    %96 = vmatprep.subr.mxu0 0.0
    %97 = vmatpush1.msra.mxu0 0.0
    %98 = vmatprep.subr.mxu0 0.0
    %99 = vmatpush1.msra.mxu0 0.0
    %100 = vmatprep.subr.mxu0 0.0
    %101 = vmatpush1.msra.mxu0 0.0
    %102 = vmatprep.subr.mxu0 0.0
    %103 = vmatpush1.msra.mxu0 0.0
    %104 = vmatprep.subr.mxu0 0.0
    %105 = vmatpush1.msra.mxu0 0.0
    %106 = vmatprep.subr.mxu0 0.0
    %107 = vmatpush1.msra.mxu0 0.0
    %108 = vmatprep.subr.mxu0 0.0
    %109 = vmatpush1.msra.mxu0 0.0
    %110 = vmatprep.subr.mxu0 0.0
    %111 = vmatpush1.msra.mxu0 0.0
    %112 = vmatprep.subr.mxu0 0.0
    %113 = vmatpush1.msra.mxu0 0.0
    %114 = vmatprep.subr.mxu0 0.0
    %115 = vmatpush1.msra.mxu0 0.0
    %116 = vmatprep.subr.mxu0 0.0
    %117 = vmatpush1.msra.mxu0 0.0
    %118 = vmatprep.subr.mxu0 0.0
    %119 = vmatpush1.msra.mxu0 0.0
    %120 = vmatprep.subr.mxu0 0.0
    %121 = vmatpush1.msra.mxu0 0.0
    %122 = vmatprep.subr.mxu0 0.0
    %123 = vmatpush1.msra.mxu0 0.0
    %124 = vmatprep.subr.mxu0 0.0
    %125 = vmatpush1.msra.mxu0 0.0
    %126 = vmatprep.subr.mxu0 0.0
    %127 = vmatpush1.msra.mxu0 0.0
    %128 = vmatprep.subr.mxu0 0.0
    %129 = vmatpush1.msra.mxu0 0.0
    %130 = vmatprep.mubr.f32.mxu0 0.0
    %131 = vmatmul.mubr.f32.gmra.mrb[0].mxu0 %v52
    %v132 = vpop.f32.mrb[0].mxu0
    %v133 = vadd.f32 0.0, %v132
    %v134 = vpop.f32.mrb[0].mxu0
    %v135 = vadd.f32 0.0, %v134
    %136 = vmatprep.mubr.f32.mxu0 0.0
    %137 = vmatmul.mubr.f32.gmra.mrb[0].mxu0 %v55
    %v138 = vpop.f32.mrb[0].mxu0
    %v139 = vadd.f32 0.0, %v138
    %v140 = vpop.f32.mrb[0].mxu0
    %v141 = vadd.f32 0.0, %v140
    %142 = vdwg.mxu0
    %143 = vmatprep.subr.mxu0 %v64
    %144 = vmatpush1.msra.mxu0 %v62
    %145 = vmatprep.subr.mxu0 0.0
    %146 = vmatpush1.msra.mxu0 0.0
    %147 = vmatprep.subr.mxu0 0.0
    %148 = vmatpush1.msra.mxu0 0.0
    %149 = vmatprep.subr.mxu0 0.0
    %150 = vmatpush1.msra.mxu0 0.0
    %151 = vmatprep.subr.mxu0 0.0
    %152 = vmatpush1.msra.mxu0 0.0
    %153 = vmatprep.subr.mxu0 0.0
    %154 = vmatpush1.msra.mxu0 0.0
    %155 = vmatprep.subr.mxu0 0.0
    %156 = vmatpush1.msra.mxu0 0.0
    %157 = vmatprep.subr.mxu0 0.0
    %158 = vmatpush1.msra.mxu0 0.0
    %159 = vmatprep.subr.mxu0 0.0
    %160 = vmatpush1.msra.mxu0 0.0
    %161 = vmatprep.subr.mxu0 0.0
    %162 = vmatpush1.msra.mxu0 0.0
    %163 = vmatprep.subr.mxu0 0.0
    %164 = vmatpush1.msra.mxu0 0.0
    %165 = vmatprep.subr.mxu0 0.0
    %166 = vmatpush1.msra.mxu0 0.0
    %167 = vmatprep.subr.mxu0 0.0
    %168 = vmatpush1.msra.mxu0 0.0
    %169 = vmatprep.subr.mxu0 0.0
    %170 = vmatpush1.msra.mxu0 0.0
    %171 = vmatprep.subr.mxu0 0.0
    %172 = vmatpush1.msra.mxu0 0.0
    %173 = vmatprep.subr.mxu0 0.0
    %174 = vmatpush1.msra.mxu0 0.0
    %175 = vmatprep.subr.mxu0 0.0
    %176 = vmatpush1.msra.mxu0 0.0
    %177 = vmatprep.subr.mxu0 0.0
    %178 = vmatpush1.msra.mxu0 0.0
    %179 = vmatprep.subr.mxu0 0.0
    %180 = vmatpush1.msra.mxu0 0.0
    %181 = vmatprep.subr.mxu0 0.0
    %182 = vmatpush1.msra.mxu0 0.0
    %183 = vmatprep.subr.mxu0 0.0
    %184 = vmatpush1.msra.mxu0 0.0
    %185 = vmatprep.subr.mxu0 0.0
    %186 = vmatpush1.msra.mxu0 0.0
    %187 = vmatprep.subr.mxu0 0.0
    %188 = vmatpush1.msra.mxu0 0.0
    %189 = vmatprep.subr.mxu0 0.0
    %190 = vmatpush1.msra.mxu0 0.0
    %191 = vmatprep.subr.mxu0 0.0
    %192 = vmatpush1.msra.mxu0 0.0
    %193 = vmatprep.subr.mxu0 0.0
    %194 = vmatpush1.msra.mxu0 0.0
    %195 = vmatprep.subr.mxu0 0.0
    %196 = vmatpush1.msra.mxu0 0.0
    %197 = vmatprep.subr.mxu0 0.0
    %198 = vmatpush1.msra.mxu0 0.0
    %199 = vmatprep.subr.mxu0 0.0
    %200 = vmatpush1.msra.mxu0 0.0
    %201 = vmatprep.subr.mxu0 0.0
    %202 = vmatpush1.msra.mxu0 0.0
    %203 = vmatprep.subr.mxu0 0.0
    %204 = vmatpush1.msra.mxu0 0.0
    %205 = vmatprep.subr.mxu0 0.0
    %206 = vmatpush1.msra.mxu0 0.0
    %207 = vmatprep.mubr.f32.mxu0 0.0
    %208 = vmatmul.mubr.f32.gmra.mrb[0].mxu0 %v52
    %v209 = vpop.f32.mrb[0].mxu0
    %v210 = vadd.f32 0.0, %v209
    %v211 = vpop.f32.mrb[0].mxu0
    %v212 = vadd.f32 0.0, %v211
    %213 = vmatprep.mubr.f32.mxu0 0.0
    %214 = vmatmul.mubr.f32.gmra.mrb[0].mxu0 %v55
    %v215 = vpop.f32.mrb[0].mxu0
    %v216 = vadd.f32 0.0, %v215
    %v217 = vpop.f32.mrb[0].mxu0
    %v218 = vadd.f32 0.0, %v217
    %219 = vdwg.mxu0
    %v220 = vld [vmem:[#allocation2] sm:$0xff]
    %v221 = vld [vmem:[#allocation2 + $0x8] sm:$0xff]
    %v222 = vld [vmem:[#allocation2 + $0x10] sm:$0xff]
    %v223 = vld [vmem:[#allocation2 + $0x18] sm:$0xff]
    %v224 = vld [vmem:[#allocation2 + $0x20] sm:$0xff]
    %v225 = vld [vmem:[#allocation2 + $0x28] sm:$0xff]
    %v226 = vld [vmem:[#allocation2 + $0x30] sm:$0xff]
    %v227 = vld [vmem:[#allocation2 + $0x38] sm:$0xff]
    %v228 = vld [vmem:[%s3] sm:$0xff]
    %v229 = vld [vmem:[%s3 + $0x8] sm:$0xff]
    %v230 = vld [vmem:[%s3 + $0x10] sm:$0xff]
    %v231 = vld [vmem:[%s3 + $0x18] sm:$0xff]
    %v232 = vld [vmem:[%s4] sm:$0xf]
    %v233 = vld [vmem:[%s4 + $0x4] sm:$0xf]
    %v234 = vld [vmem:[%s4 + $0x8] sm:$0xf]
    %v235 = vld [vmem:[%s4 + $0xc] sm:$0xf]
    %v244 = vunpack.c.l.b16 %v220
    %v245 = vunpack.c.h.b16 %v220
    %v246 = vunpack.c.l.b16 %v221
    %v247 = vunpack.c.h.b16 %v221
    %v248 = vunpack.c.l.b16 %v222
    %v249 = vunpack.c.h.b16 %v222
    %v250 = vunpack.c.l.b16 %v223
    %v251 = vunpack.c.h.b16 %v223
    %v252 = vunpack.c.l.b16 %v224
    %v253 = vunpack.c.h.b16 %v224
    %v254 = vunpack.c.l.b16 %v225
    %v255 = vunpack.c.h.b16 %v225
    %v256 = vunpack.c.l.b16 %v226
    %v257 = vunpack.c.h.b16 %v226
    %v258 = vunpack.c.l.b16 %v227
    %v259 = vunpack.c.h.b16 %v227
    %v260 = vpack.c.b16 %v248, %v244
    %v261 = vpack.c.b16 %v249, %v245
    %v262 = vpack.c.b16 %v250, %v246
    %v263 = vpack.c.b16 %v251, %v247
    %v264 = vpack.c.b16 %v256, %v252
    %v265 = vpack.c.b16 %v257, %v253
    %v266 = vpack.c.b16 %v258, %v254
    %v267 = vpack.c.b16 %v259, %v255
    %vm276 = vcmask 261120
    %v278 = vsel %vm276, 0, 0
    %280 = vmatprep.subr.bf16.mxu0 %v261
    %281 = vmatpush1.bf16.msra.mxu0 %v260
    %282 = vmatprep.subr.bf16.mxu0 %v265
    %283 = vmatpush1.bf16.msra.mxu0 %v264
    %284 = vmatprep.subr.bf16.mxu0 0
    %285 = vmatpush1.bf16.msra.mxu0 0
    %286 = vmatprep.subr.bf16.mxu0 0
    %287 = vmatpush1.bf16.msra.mxu0 0
    %288 = vmatprep.subr.bf16.mxu0 0
    %289 = vmatpush1.bf16.msra.mxu0 0
    %290 = vmatprep.subr.bf16.mxu0 0
    %291 = vmatpush1.bf16.msra.mxu0 0
    %292 = vmatprep.subr.bf16.mxu0 0
    %293 = vmatpush1.bf16.msra.mxu0 0
    %294 = vmatprep.subr.bf16.mxu0 0
    %295 = vmatpush1.bf16.msra.mxu0 0
    %296 = vmatprep.subr.bf16.mxu0 0
    %297 = vmatpush1.bf16.msra.mxu0 0
    %298 = vmatprep.subr.bf16.mxu0 0
    %299 = vmatpush1.bf16.msra.mxu0 0
    %300 = vmatprep.subr.bf16.mxu0 0
    %301 = vmatpush1.bf16.msra.mxu0 0
    %302 = vmatprep.subr.bf16.mxu0 0
    %303 = vmatpush1.bf16.msra.mxu0 0
    %304 = vmatprep.subr.bf16.mxu0 0
    %305 = vmatpush1.bf16.msra.mxu0 0
    %306 = vmatprep.subr.bf16.mxu0 0
    %307 = vmatpush1.bf16.msra.mxu0 0
    %308 = vmatprep.subr.bf16.mxu0 0
    %309 = vmatpush1.bf16.msra.mxu0 0
    %310 = vmatprep.subr.bf16.mxu0 0
    %311 = vmatpush1.bf16.msra.mxu0 0
    %312 = vmatprep.mubr.bf16.mxu0 0
    %313 = vmatmul.mubr.bf16.gmra.mrb[0].mxu0 %v278
    %v314 = vpop.f32.mrb[0].mxu0
    %v315 = vadd.f32 0.0, %v314
    %v316 = vpop.f32.mrb[0].mxu0
    %v317 = vadd.f32 0.0, %v316
    %v318 = vpop.f32.mrb[0].mxu0
    %v319 = vpop.f32.mrb[0].mxu0
    %320 = vdwg.mxu0
    %321 = vmatprep.subr.bf16.mxu0 %v263
    %322 = vmatpush1.bf16.msra.mxu0 %v262
    %323 = vmatprep.subr.bf16.mxu0 %v267
    %324 = vmatpush1.bf16.msra.mxu0 %v266
    %325 = vmatprep.subr.bf16.mxu0 0
    %326 = vmatpush1.bf16.msra.mxu0 0
    %327 = vmatprep.subr.bf16.mxu0 0
    %328 = vmatpush1.bf16.msra.mxu0 0
    %329 = vmatprep.subr.bf16.mxu0 0
    %330 = vmatpush1.bf16.msra.mxu0 0
    %331 = vmatprep.subr.bf16.mxu0 0
    %332 = vmatpush1.bf16.msra.mxu0 0
    %333 = vmatprep.subr.bf16.mxu0 0
    %334 = vmatpush1.bf16.msra.mxu0 0
    %335 = vmatprep.subr.bf16.mxu0 0
    %336 = vmatpush1.bf16.msra.mxu0 0
    %337 = vmatprep.subr.bf16.mxu0 0
    %338 = vmatpush1.bf16.msra.mxu0 0
    %339 = vmatprep.subr.bf16.mxu0 0
    %340 = vmatpush1.bf16.msra.mxu0 0
    %341 = vmatprep.subr.bf16.mxu0 0
    %342 = vmatpush1.bf16.msra.mxu0 0
    %343 = vmatprep.subr.bf16.mxu0 0
    %344 = vmatpush1.bf16.msra.mxu0 0
    %345 = vmatprep.subr.bf16.mxu0 0
    %346 = vmatpush1.bf16.msra.mxu0 0
    %347 = vmatprep.subr.bf16.mxu0 0
    %348 = vmatpush1.bf16.msra.mxu0 0
    %349 = vmatprep.subr.bf16.mxu0 0
    %350 = vmatpush1.bf16.msra.mxu0 0
    %351 = vmatprep.subr.bf16.mxu0 0
    %352 = vmatpush1.bf16.msra.mxu0 0
    %353 = vmatprep.mubr.bf16.mxu0 0
    %354 = vmatmul.mubr.bf16.gmra.mrb[0].mxu0 %v278
    %v355 = vpop.f32.mrb[0].mxu0
    %v356 = vadd.f32 0.0, %v355
    %v357 = vpop.f32.mrb[0].mxu0
    %v358 = vadd.f32 0.0, %v357
    %v359 = vpop.f32.mrb[0].mxu0
    %v360 = vpop.f32.mrb[0].mxu0
    %361 = vdwg.mxu0
    %v366 = vunpack.c.l.b16 %v228
    %v367 = vunpack.c.h.b16 %v228
    %v368 = vunpack.c.l.b16 %v229
    %v369 = vunpack.c.h.b16 %v229
    %v370 = vunpack.c.l.b16 %v230
    %v371 = vunpack.c.h.b16 %v230
    %v372 = vunpack.c.l.b16 %v231
    %v373 = vunpack.c.h.b16 %v231
    %v374 = vpack.c.b16 %v368, %v366
    %v375 = vpack.c.b16 %v369, %v367
    %v376 = vpack.c.b16 %v372, %v370
    %v377 = vpack.c.b16 %v373, %v371
    %382 = vmatprep.subr.bf16.mxu0 %v375
    %383 = vmatpush1.bf16.msra.mxu0 %v374
    %384 = vmatprep.subr.bf16.mxu0 %v377
    %385 = vmatpush1.bf16.msra.mxu0 %v376
    %386 = vmatprep.subr.bf16.mxu0 0
    %387 = vmatpush1.bf16.msra.mxu0 0
    %388 = vmatprep.subr.bf16.mxu0 0
    %389 = vmatpush1.bf16.msra.mxu0 0
    %390 = vmatprep.subr.bf16.mxu0 0
    %391 = vmatpush1.bf16.msra.mxu0 0
    %392 = vmatprep.subr.bf16.mxu0 0
    %393 = vmatpush1.bf16.msra.mxu0 0
    %394 = vmatprep.subr.bf16.mxu0 0
    %395 = vmatpush1.bf16.msra.mxu0 0
    %396 = vmatprep.subr.bf16.mxu0 0
    %397 = vmatpush1.bf16.msra.mxu0 0
    %398 = vmatprep.subr.bf16.mxu0 0
    %399 = vmatpush1.bf16.msra.mxu0 0
    %400 = vmatprep.subr.bf16.mxu0 0
    %401 = vmatpush1.bf16.msra.mxu0 0
    %402 = vmatprep.subr.bf16.mxu0 0
    %403 = vmatpush1.bf16.msra.mxu0 0
    %404 = vmatprep.subr.bf16.mxu0 0
    %405 = vmatpush1.bf16.msra.mxu0 0
    %406 = vmatprep.subr.bf16.mxu0 0
    %407 = vmatpush1.bf16.msra.mxu0 0
    %408 = vmatprep.subr.bf16.mxu0 0
    %409 = vmatpush1.bf16.msra.mxu0 0
    %410 = vmatprep.subr.bf16.mxu0 0
    %411 = vmatpush1.bf16.msra.mxu0 0
    %412 = vmatprep.subr.bf16.mxu0 0
    %413 = vmatpush1.bf16.msra.mxu0 0
    %414 = vmatprep.mubr.bf16.mxu0 0
    %415 = vmatmul.mubr.bf16.gmra.mrb[0].mxu0 %v278
    %v416 = vpop.f32.mrb[0].mxu0
    %v417 = vadd.f32 0.0, %v416
    %v418 = vpop.f32.mrb[0].mxu0
    %v419 = vadd.f32 0.0, %v418
    %v420 = vpop.f32.mrb[0].mxu0
    %v421 = vpop.f32.mrb[0].mxu0
    %422 = vdwg.mxu0
    %v423 = vadd.f32 %v133, %v315
    %v424 = vadd.f32 %v423, %v417
    %v425 = vmul.f32 %v424, 0.5
    %v426 = vtanh.pop %v425
    %v427 = vmul.f32 %v426, 0.5
    %v428 = vadd.f32 %v427, 0.5
    %v429 = vadd.f32 %v135, %v317
    %v430 = vadd.f32 %v429, %v419
    %v431 = vmul.f32 %v430, 0.5
    %v432 = vtanh.pop %v431
    %v433 = vmul.f32 %v432, 0.5
    %v434 = vadd.f32 %v433, 0.5
    %v435 = vadd.f32 %v210, %v356
    %v436 = vtanh.pop %v435
    %v437 = vmul.f32 %v436, %v428
    %v438 = vmul.f32 %v434, 0.0
    %v439 = vadd.f32 %v437, %v438
    %v440 = vpack.c.bf16 %v439, %v439
    %v445 = vunpack.c.l.b16 %v232
    %v446 = vunpack.c.l.b16 %v233
    %v447 = vunpack.c.l.b16 %v234
    %v448 = vunpack.c.l.b16 %v235
    %v449 = vpack.c.b16 %v446, %v445
    %v450 = vpack.c.b16 %v448, %v447
    %v454 = vsel %vm276, %v440, 0
    %456 = vmatprep.subr.bf16.mxu0 0
    %457 = vmatpush1.bf16.msra.mxu0 %v449
    %458 = vmatprep.subr.bf16.mxu0 0
    %459 = vmatpush1.bf16.msra.mxu0 %v450
    %460 = vmatprep.subr.bf16.mxu0 0
    %461 = vmatpush1.bf16.msra.mxu0 0
    %462 = vmatprep.subr.bf16.mxu0 0
    %463 = vmatpush1.bf16.msra.mxu0 0
    %464 = vmatprep.subr.bf16.mxu0 0
    %465 = vmatpush1.bf16.msra.mxu0 0
    %466 = vmatprep.subr.bf16.mxu0 0
    %467 = vmatpush1.bf16.msra.mxu0 0
    %468 = vmatprep.subr.bf16.mxu0 0
    %469 = vmatpush1.bf16.msra.mxu0 0
    %470 = vmatprep.subr.bf16.mxu0 0
    %471 = vmatpush1.bf16.msra.mxu0 0
    %472 = vmatprep.subr.bf16.mxu0 0
    %473 = vmatpush1.bf16.msra.mxu0 0
    %474 = vmatprep.subr.bf16.mxu0 0
    %475 = vmatpush1.bf16.msra.mxu0 0
    %476 = vmatprep.subr.bf16.mxu0 0
    %477 = vmatpush1.bf16.msra.mxu0 0
    %478 = vmatprep.subr.bf16.mxu0 0
    %479 = vmatpush1.bf16.msra.mxu0 0
    %480 = vmatprep.subr.bf16.mxu0 0
    %481 = vmatpush1.bf16.msra.mxu0 0
    %482 = vmatprep.subr.bf16.mxu0 0
    %483 = vmatpush1.bf16.msra.mxu0 0
    %484 = vmatprep.subr.bf16.mxu0 0
    %485 = vmatpush1.bf16.msra.mxu0 0
    %486 = vmatprep.subr.bf16.mxu0 0
    %487 = vmatpush1.bf16.msra.mxu0 0
    %488 = vmatprep.mubr.bf16.mxu0 0
    %489 = vmatmul.mubr.bf16.gmra.mrb[0].mxu0 %v454
    %v490 = vpop.f32.mrb[0].mxu0
    %v491 = vadd.f32 0.0, %v490
    %v492 = vpop.f32.mrb[0].mxu0
    %v493 = vpop.f32.mrb[0].mxu0
    %v494 = vpop.f32.mrb[0].mxu0
    %495 = vdwg.mxu0
    %v496 = vadd.f32 %v212, %v358
    %v497 = vadd.f32 %v496, %v491
    %v498 = vmul.f32 %v497, 0.5
    %v499 = vtanh.pop %v498
    %v500 = vmul.f32 %v499, 0.5
    %v501 = vadd.f32 %v500, 0.5
    %v502 = vtanh.pop %v439
    %v503 = vmul.f32 %v501, %v502
    %v504 = vpack.c.bf16 %v503, %v503
    %v506 = vsel %vm276, %v504, 0
    %508 = vmatprep.subr.bf16.mxu0 %v261
    %509 = vmatpush1.bf16.msra.mxu0 %v260
    %510 = vmatprep.subr.bf16.mxu0 %v265
    %511 = vmatpush1.bf16.msra.mxu0 %v264
    %512 = vmatprep.subr.bf16.mxu0 0
    %513 = vmatpush1.bf16.msra.mxu0 0
    %514 = vmatprep.subr.bf16.mxu0 0
    %515 = vmatpush1.bf16.msra.mxu0 0
    %516 = vmatprep.subr.bf16.mxu0 0
    %517 = vmatpush1.bf16.msra.mxu0 0
    %518 = vmatprep.subr.bf16.mxu0 0
    %519 = vmatpush1.bf16.msra.mxu0 0
    %520 = vmatprep.subr.bf16.mxu0 0
    %521 = vmatpush1.bf16.msra.mxu0 0
    %522 = vmatprep.subr.bf16.mxu0 0
    %523 = vmatpush1.bf16.msra.mxu0 0
    %524 = vmatprep.subr.bf16.mxu0 0
    %525 = vmatpush1.bf16.msra.mxu0 0
    %526 = vmatprep.subr.bf16.mxu0 0
    %527 = vmatpush1.bf16.msra.mxu0 0
    %528 = vmatprep.subr.bf16.mxu0 0
    %529 = vmatpush1.bf16.msra.mxu0 0
    %530 = vmatprep.subr.bf16.mxu0 0
    %531 = vmatpush1.bf16.msra.mxu0 0
    %532 = vmatprep.subr.bf16.mxu0 0
    %533 = vmatpush1.bf16.msra.mxu0 0
    %534 = vmatprep.subr.bf16.mxu0 0
    %535 = vmatpush1.bf16.msra.mxu0 0
    %536 = vmatprep.subr.bf16.mxu0 0
    %537 = vmatpush1.bf16.msra.mxu0 0
    %538 = vmatprep.subr.bf16.mxu0 0
    %539 = vmatpush1.bf16.msra.mxu0 0
    %540 = vmatprep.mubr.bf16.mxu0 0
    %541 = vmatmul.mubr.bf16.gmra.mrb[0].mxu0 %v506
    %v542 = vpop.f32.mrb[0].mxu0
    %v543 = vadd.f32 0.0, %v542
    %v544 = vpop.f32.mrb[0].mxu0
    %v545 = vadd.f32 0.0, %v544
    %v546 = vpop.f32.mrb[0].mxu0
    %v547 = vpop.f32.mrb[0].mxu0
    %548 = vdwg.mxu0
    %549 = vmatprep.subr.bf16.mxu0 %v263
    %550 = vmatpush1.bf16.msra.mxu0 %v262
    %551 = vmatprep.subr.bf16.mxu0 %v267
    %552 = vmatpush1.bf16.msra.mxu0 %v266
    %553 = vmatprep.subr.bf16.mxu0 0
    %554 = vmatpush1.bf16.msra.mxu0 0
    %555 = vmatprep.subr.bf16.mxu0 0
    %556 = vmatpush1.bf16.msra.mxu0 0
    %557 = vmatprep.subr.bf16.mxu0 0
    %558 = vmatpush1.bf16.msra.mxu0 0
    %559 = vmatprep.subr.bf16.mxu0 0
    %560 = vmatpush1.bf16.msra.mxu0 0
    %561 = vmatprep.subr.bf16.mxu0 0
    %562 = vmatpush1.bf16.msra.mxu0 0
    %563 = vmatprep.subr.bf16.mxu0 0
    %564 = vmatpush1.bf16.msra.mxu0 0
    %565 = vmatprep.subr.bf16.mxu0 0
    %566 = vmatpush1.bf16.msra.mxu0 0
    %567 = vmatprep.subr.bf16.mxu0 0
    %568 = vmatpush1.bf16.msra.mxu0 0
    %569 = vmatprep.subr.bf16.mxu0 0
    %570 = vmatpush1.bf16.msra.mxu0 0
    %571 = vmatprep.subr.bf16.mxu0 0
    %572 = vmatpush1.bf16.msra.mxu0 0
    %573 = vmatprep.subr.bf16.mxu0 0
    %574 = vmatpush1.bf16.msra.mxu0 0
    %575 = vmatprep.subr.bf16.mxu0 0
    %576 = vmatpush1.bf16.msra.mxu0 0
    %577 = vmatprep.subr.bf16.mxu0 0
    %578 = vmatpush1.bf16.msra.mxu0 0
    %579 = vmatprep.subr.bf16.mxu0 0
    %580 = vmatpush1.bf16.msra.mxu0 0
    %581 = vmatprep.mubr.bf16.mxu0 0
    %582 = vmatmul.mubr.bf16.gmra.mrb[0].mxu0 %v506
    %v583 = vpop.f32.mrb[0].mxu0
    %v584 = vadd.f32 0.0, %v583
    %v585 = vpop.f32.mrb[0].mxu0
    %v586 = vadd.f32 0.0, %v585
    %v587 = vpop.f32.mrb[0].mxu0
    %v588 = vpop.f32.mrb[0].mxu0
    %589 = vdwg.mxu0
    %590 = vmatprep.subr.bf16.mxu0 %v375
    %591 = vmatpush1.bf16.msra.mxu0 %v374
    %592 = vmatprep.subr.bf16.mxu0 %v377
    %593 = vmatpush1.bf16.msra.mxu0 %v376
    %594 = vmatprep.subr.bf16.mxu0 0
    %595 = vmatpush1.bf16.msra.mxu0 0
    %596 = vmatprep.subr.bf16.mxu0 0
    %597 = vmatpush1.bf16.msra.mxu0 0
    %598 = vmatprep.subr.bf16.mxu0 0
    %599 = vmatpush1.bf16.msra.mxu0 0
    %600 = vmatprep.subr.bf16.mxu0 0
    %601 = vmatpush1.bf16.msra.mxu0 0
    %602 = vmatprep.subr.bf16.mxu0 0
    %603 = vmatpush1.bf16.msra.mxu0 0
    %604 = vmatprep.subr.bf16.mxu0 0
    %605 = vmatpush1.bf16.msra.mxu0 0
    %606 = vmatprep.subr.bf16.mxu0 0
    %607 = vmatpush1.bf16.msra.mxu0 0
    %608 = vmatprep.subr.bf16.mxu0 0
    %609 = vmatpush1.bf16.msra.mxu0 0
    %610 = vmatprep.subr.bf16.mxu0 0
    %611 = vmatpush1.bf16.msra.mxu0 0
    %612 = vmatprep.subr.bf16.mxu0 0
    %613 = vmatpush1.bf16.msra.mxu0 0
    %614 = vmatprep.subr.bf16.mxu0 0
    %615 = vmatpush1.bf16.msra.mxu0 0
    %616 = vmatprep.subr.bf16.mxu0 0
    %617 = vmatpush1.bf16.msra.mxu0 0
    %618 = vmatprep.subr.bf16.mxu0 0
    %619 = vmatpush1.bf16.msra.mxu0 0
    %620 = vmatprep.subr.bf16.mxu0 0
    %621 = vmatpush1.bf16.msra.mxu0 0
    %622 = vmatprep.mubr.bf16.mxu0 0
    %623 = vmatmul.mubr.bf16.gmra.mrb[0].mxu0 %v454
    %v624 = vpop.f32.mrb[0].mxu0
    %v625 = vadd.f32 0.0, %v624
    %v626 = vpop.f32.mrb[0].mxu0
    %v627 = vadd.f32 0.0, %v626
    %v628 = vpop.f32.mrb[0].mxu0
    %v629 = vpop.f32.mrb[0].mxu0
    %630 = vdwg.mxu0
    %v632 = vrot.slane %v543, 7
    %v634 = vadd.f32 %v133, %v632
    %v636 = vrot.slane %v625, 7
    %v638 = vadd.f32 %v634, %v636
    %v639 = vmul.f32 %v638, 0.5
    %v640 = vtanh.pop %v639
    %v641 = vmul.f32 %v640, 0.5
    %v642 = vadd.f32 %v641, 0.5
    %v644 = vrot.slane %v545, 7
    %v646 = vadd.f32 %v135, %v644
    %v648 = vrot.slane %v627, 7
    %v650 = vadd.f32 %v646, %v648
    %v651 = vmul.f32 %v650, 0.5
    %v652 = vtanh.pop %v651
    %v653 = vmul.f32 %v652, 0.5
    %v654 = vadd.f32 %v653, 0.5
    %v656 = vrot.slane %v584, 7
    %v658 = vadd.f32 %v210, %v656
    %v659 = vtanh.pop %v658
    %v660 = vmul.f32 %v659, %v642
    %v662 = vrot.slane %v439, 7
    %v664 = vmul.f32 %v654, %v662
    %v665 = vadd.f32 %v660, %v664
    %v666 = vpack.c.bf16 %v665, %v665
    %v668 = vshrl.u32 %v666, 16
    %v671 = vsel %vm276, %v668, 0
    %673 = vmatprep.subr.bf16.mxu0 0
    %674 = vmatpush1.bf16.msra.mxu0 %v449
    %675 = vmatprep.subr.bf16.mxu0 0
    %676 = vmatpush1.bf16.msra.mxu0 %v450
    %677 = vmatprep.subr.bf16.mxu0 0
    %678 = vmatpush1.bf16.msra.mxu0 0
    %679 = vmatprep.subr.bf16.mxu0 0
    %680 = vmatpush1.bf16.msra.mxu0 0
    %681 = vmatprep.subr.bf16.mxu0 0
    %682 = vmatpush1.bf16.msra.mxu0 0
    %683 = vmatprep.subr.bf16.mxu0 0
    %684 = vmatpush1.bf16.msra.mxu0 0
    %685 = vmatprep.subr.bf16.mxu0 0
    %686 = vmatpush1.bf16.msra.mxu0 0
    %687 = vmatprep.subr.bf16.mxu0 0
    %688 = vmatpush1.bf16.msra.mxu0 0
    %689 = vmatprep.subr.bf16.mxu0 0
    %690 = vmatpush1.bf16.msra.mxu0 0
    %691 = vmatprep.subr.bf16.mxu0 0
    %692 = vmatpush1.bf16.msra.mxu0 0
    %693 = vmatprep.subr.bf16.mxu0 0
    %694 = vmatpush1.bf16.msra.mxu0 0
    %695 = vmatprep.subr.bf16.mxu0 0
    %696 = vmatpush1.bf16.msra.mxu0 0
    %697 = vmatprep.subr.bf16.mxu0 0
    %698 = vmatpush1.bf16.msra.mxu0 0
    %699 = vmatprep.subr.bf16.mxu0 0
    %700 = vmatpush1.bf16.msra.mxu0 0
    %701 = vmatprep.subr.bf16.mxu0 0
    %702 = vmatpush1.bf16.msra.mxu0 0
    %703 = vmatprep.subr.bf16.mxu0 0
    %704 = vmatpush1.bf16.msra.mxu0 0
    %705 = vmatprep.mubr.bf16.mxu0 0
    %706 = vmatmul.mubr.bf16.gmra.mrb[0].mxu0 %v671
    %v707 = vpop.f32.mrb[0].mxu0
    %v708 = vadd.f32 0.0, %v707
    %v709 = vpop.f32.mrb[0].mxu0
    %v710 = vpop.f32.mrb[0].mxu0
    %v711 = vpop.f32.mrb[0].mxu0
    %712 = vdwg.mxu0
    %v714 = vrot.slane %v586, 7
    %v716 = vadd.f32 %v212, %v714
    %v718 = vrot.slane %v708, 7
    %v720 = vadd.f32 %v716, %v718
    %v721 = vmul.f32 %v720, 0.5
    %v722 = vtanh.pop %v721
    %v723 = vmul.f32 %v722, 0.5
    %v724 = vadd.f32 %v723, 0.5
    %v725 = vtanh.pop %v665
    %v726 = vmul.f32 %v724, %v725
    %v727 = vpack.c.bf16 %v726, %v726
    %v729 = vshrl.u32 %v727, 16
    %v732 = vsel %vm276, %v729, 0
    %734 = vmatprep.subr.bf16.mxu0 %v261
    %735 = vmatpush1.bf16.msra.mxu0 %v260
    %736 = vmatprep.subr.bf16.mxu0 %v265
    %737 = vmatpush1.bf16.msra.mxu0 %v264
    %738 = vmatprep.subr.bf16.mxu0 0
    %739 = vmatpush1.bf16.msra.mxu0 0
    %740 = vmatprep.subr.bf16.mxu0 0
    %741 = vmatpush1.bf16.msra.mxu0 0
    %742 = vmatprep.subr.bf16.mxu0 0
    %743 = vmatpush1.bf16.msra.mxu0 0
    %744 = vmatprep.subr.bf16.mxu0 0
    %745 = vmatpush1.bf16.msra.mxu0 0
    %746 = vmatprep.subr.bf16.mxu0 0
    %747 = vmatpush1.bf16.msra.mxu0 0
    %748 = vmatprep.subr.bf16.mxu0 0
    %749 = vmatpush1.bf16.msra.mxu0 0
    %750 = vmatprep.subr.bf16.mxu0 0
    %751 = vmatpush1.bf16.msra.mxu0 0
    %752 = vmatprep.subr.bf16.mxu0 0
    %753 = vmatpush1.bf16.msra.mxu0 0
    %754 = vmatprep.subr.bf16.mxu0 0
    %755 = vmatpush1.bf16.msra.mxu0 0
    %756 = vmatprep.subr.bf16.mxu0 0
    %757 = vmatpush1.bf16.msra.mxu0 0
    %758 = vmatprep.subr.bf16.mxu0 0
    %759 = vmatpush1.bf16.msra.mxu0 0
    %760 = vmatprep.subr.bf16.mxu0 0
    %761 = vmatpush1.bf16.msra.mxu0 0
    %762 = vmatprep.subr.bf16.mxu0 0
    %763 = vmatpush1.bf16.msra.mxu0 0
    %764 = vmatprep.subr.bf16.mxu0 0
    %765 = vmatpush1.bf16.msra.mxu0 0
    %766 = vmatprep.mubr.bf16.mxu0 0
    %767 = vmatmul.mubr.bf16.gmra.mrb[0].mxu0 %v732
    %v768 = vpop.f32.mrb[0].mxu0
    %v769 = vadd.f32 0.0, %v768
    %v770 = vpop.f32.mrb[0].mxu0
    %v771 = vadd.f32 0.0, %v770
    %v772 = vpop.f32.mrb[0].mxu0
    %v773 = vpop.f32.mrb[0].mxu0
    %774 = vdwg.mxu0
    %775 = vmatprep.subr.bf16.mxu0 %v263
    %776 = vmatpush1.bf16.msra.mxu0 %v262
    %777 = vmatprep.subr.bf16.mxu0 %v267
    %778 = vmatpush1.bf16.msra.mxu0 %v266
    %779 = vmatprep.subr.bf16.mxu0 0
    %780 = vmatpush1.bf16.msra.mxu0 0
    %781 = vmatprep.subr.bf16.mxu0 0
    %782 = vmatpush1.bf16.msra.mxu0 0
    %783 = vmatprep.subr.bf16.mxu0 0
    %784 = vmatpush1.bf16.msra.mxu0 0
    %785 = vmatprep.subr.bf16.mxu0 0
    %786 = vmatpush1.bf16.msra.mxu0 0
    %787 = vmatprep.subr.bf16.mxu0 0
    %788 = vmatpush1.bf16.msra.mxu0 0
    %789 = vmatprep.subr.bf16.mxu0 0
    %790 = vmatpush1.bf16.msra.mxu0 0
    %791 = vmatprep.subr.bf16.mxu0 0
    %792 = vmatpush1.bf16.msra.mxu0 0
    %793 = vmatprep.subr.bf16.mxu0 0
    %794 = vmatpush1.bf16.msra.mxu0 0
    %795 = vmatprep.subr.bf16.mxu0 0
    %796 = vmatpush1.bf16.msra.mxu0 0
    %797 = vmatprep.subr.bf16.mxu0 0
    %798 = vmatpush1.bf16.msra.mxu0 0
    %799 = vmatprep.subr.bf16.mxu0 0
    %800 = vmatpush1.bf16.msra.mxu0 0
    %801 = vmatprep.subr.bf16.mxu0 0
    %802 = vmatpush1.bf16.msra.mxu0 0
    %803 = vmatprep.subr.bf16.mxu0 0
    %804 = vmatpush1.bf16.msra.mxu0 0
    %805 = vmatprep.subr.bf16.mxu0 0
    %806 = vmatpush1.bf16.msra.mxu0 0
    %807 = vmatprep.mubr.bf16.mxu0 0
    %808 = vmatmul.mubr.bf16.gmra.mrb[0].mxu0 %v732
    %v809 = vpop.f32.mrb[0].mxu0
    %v810 = vadd.f32 0.0, %v809
    %v811 = vpop.f32.mrb[0].mxu0
    %v812 = vadd.f32 0.0, %v811
    %v813 = vpop.f32.mrb[0].mxu0
    %v814 = vpop.f32.mrb[0].mxu0
    %815 = vdwg.mxu0
    %816 = vmatprep.subr.bf16.mxu0 %v375
    %817 = vmatpush1.bf16.msra.mxu0 %v374
    %818 = vmatprep.subr.bf16.mxu0 %v377
    %819 = vmatpush1.bf16.msra.mxu0 %v376
    %820 = vmatprep.subr.bf16.mxu0 0
    %821 = vmatpush1.bf16.msra.mxu0 0
    %822 = vmatprep.subr.bf16.mxu0 0
    %823 = vmatpush1.bf16.msra.mxu0 0
    %824 = vmatprep.subr.bf16.mxu0 0
    %825 = vmatpush1.bf16.msra.mxu0 0
    %826 = vmatprep.subr.bf16.mxu0 0
    %827 = vmatpush1.bf16.msra.mxu0 0
    %828 = vmatprep.subr.bf16.mxu0 0
    %829 = vmatpush1.bf16.msra.mxu0 0
    %830 = vmatprep.subr.bf16.mxu0 0
    %831 = vmatpush1.bf16.msra.mxu0 0
    %832 = vmatprep.subr.bf16.mxu0 0
    %833 = vmatpush1.bf16.msra.mxu0 0
    %834 = vmatprep.subr.bf16.mxu0 0
    %835 = vmatpush1.bf16.msra.mxu0 0
    %836 = vmatprep.subr.bf16.mxu0 0
    %837 = vmatpush1.bf16.msra.mxu0 0
    %838 = vmatprep.subr.bf16.mxu0 0
    %839 = vmatpush1.bf16.msra.mxu0 0
    %840 = vmatprep.subr.bf16.mxu0 0
    %841 = vmatpush1.bf16.msra.mxu0 0
    %842 = vmatprep.subr.bf16.mxu0 0
    %843 = vmatpush1.bf16.msra.mxu0 0
    %844 = vmatprep.subr.bf16.mxu0 0
    %845 = vmatpush1.bf16.msra.mxu0 0
    %846 = vmatprep.subr.bf16.mxu0 0
    %847 = vmatpush1.bf16.msra.mxu0 0
    %848 = vmatprep.mubr.bf16.mxu0 0
    %849 = vmatmul.mubr.bf16.gmra.mrb[0].mxu0 %v671
    %v850 = vpop.f32.mrb[0].mxu0
    %v851 = vadd.f32 0.0, %v850
    %v852 = vpop.f32.mrb[0].mxu0
    %v853 = vadd.f32 0.0, %v852
    %v854 = vpop.f32.mrb[0].mxu0
    %v855 = vpop.f32.mrb[0].mxu0
    %856 = vdwg.mxu0
    %v858 = vrot.slane %v769, 6
    %v860 = vadd.f32 %v133, %v858
    %v862 = vrot.slane %v851, 6
    %v864 = vadd.f32 %v860, %v862
    %v865 = vmul.f32 %v864, 0.5
    %v866 = vtanh.pop %v865
    %v867 = vmul.f32 %v866, 0.5
    %v868 = vadd.f32 %v867, 0.5
    %v870 = vrot.slane %v771, 6
    %v872 = vadd.f32 %v135, %v870
    %v874 = vrot.slane %v853, 6
    %v876 = vadd.f32 %v872, %v874
    %v877 = vmul.f32 %v876, 0.5
    %v878 = vtanh.pop %v877
    %v879 = vmul.f32 %v878, 0.5
    %v880 = vadd.f32 %v879, 0.5
    %v882 = vrot.slane %v810, 6
    %v884 = vadd.f32 %v210, %v882
    %v885 = vtanh.pop %v884
    %v886 = vmul.f32 %v885, %v868
    %v888 = vrot.slane %v665, 7
    %v890 = vmul.f32 %v880, %v888
    %v891 = vadd.f32 %v886, %v890
    %v892 = vpack.c.bf16 %v891, %v891
    %v894 = vrot.slane %v892, 1
    %v896 = vsel %vm276, %v894, 0
    %898 = vmatprep.subr.bf16.mxu0 0
    %899 = vmatpush1.bf16.msra.mxu0 %v449
    %900 = vmatprep.subr.bf16.mxu0 0
    %901 = vmatpush1.bf16.msra.mxu0 %v450
    %902 = vmatprep.subr.bf16.mxu0 0
    %903 = vmatpush1.bf16.msra.mxu0 0
    %904 = vmatprep.subr.bf16.mxu0 0
    %905 = vmatpush1.bf16.msra.mxu0 0
    %906 = vmatprep.subr.bf16.mxu0 0
    %907 = vmatpush1.bf16.msra.mxu0 0
    %908 = vmatprep.subr.bf16.mxu0 0
    %909 = vmatpush1.bf16.msra.mxu0 0
    %910 = vmatprep.subr.bf16.mxu0 0
    %911 = vmatpush1.bf16.msra.mxu0 0
    %912 = vmatprep.subr.bf16.mxu0 0
    %913 = vmatpush1.bf16.msra.mxu0 0
    %914 = vmatprep.subr.bf16.mxu0 0
    %915 = vmatpush1.bf16.msra.mxu0 0
    %916 = vmatprep.subr.bf16.mxu0 0
    %917 = vmatpush1.bf16.msra.mxu0 0
    %918 = vmatprep.subr.bf16.mxu0 0
    %919 = vmatpush1.bf16.msra.mxu0 0
    %920 = vmatprep.subr.bf16.mxu0 0
    %921 = vmatpush1.bf16.msra.mxu0 0
    %922 = vmatprep.subr.bf16.mxu0 0
    %923 = vmatpush1.bf16.msra.mxu0 0
    %924 = vmatprep.subr.bf16.mxu0 0
    %925 = vmatpush1.bf16.msra.mxu0 0
    %926 = vmatprep.subr.bf16.mxu0 0
    %927 = vmatpush1.bf16.msra.mxu0 0
    %928 = vmatprep.subr.bf16.mxu0 0
    %929 = vmatpush1.bf16.msra.mxu0 0
    %930 = vmatprep.mubr.bf16.mxu0 0
    %931 = vmatmul.mubr.bf16.gmra.mrb[0].mxu0 %v896
    %v932 = vpop.f32.mrb[0].mxu0
    %v933 = vadd.f32 0.0, %v932
    %v934 = vpop.f32.mrb[0].mxu0
    %v935 = vpop.f32.mrb[0].mxu0
    %v936 = vpop.f32.mrb[0].mxu0
    %937 = vdwg.mxu0
    %v939 = vrot.slane %v812, 6
    %v941 = vadd.f32 %v212, %v939
    %v943 = vrot.slane %v933, 6
    %v945 = vadd.f32 %v941, %v943
    %v946 = vmul.f32 %v945, 0.5
    %v947 = vtanh.pop %v946
    %v948 = vmul.f32 %v947, 0.5
    %v949 = vadd.f32 %v948, 0.5
    %v950 = vtanh.pop %v891
    %v951 = vmul.f32 %v949, %v950
    %v952 = vpack.c.bf16 %v951, %v951
    %v954 = vrot.slane %v952, 1
    %v956 = vsel %vm276, %v954, 0
    %958 = vmatprep.subr.bf16.mxu0 %v261
    %959 = vmatpush1.bf16.msra.mxu0 %v260
    %960 = vmatprep.subr.bf16.mxu0 %v265
    %961 = vmatpush1.bf16.msra.mxu0 %v264
    %962 = vmatprep.subr.bf16.mxu0 0
    %963 = vmatpush1.bf16.msra.mxu0 0
    %964 = vmatprep.subr.bf16.mxu0 0
    %965 = vmatpush1.bf16.msra.mxu0 0
    %966 = vmatprep.subr.bf16.mxu0 0
    %967 = vmatpush1.bf16.msra.mxu0 0
    %968 = vmatprep.subr.bf16.mxu0 0
    %969 = vmatpush1.bf16.msra.mxu0 0
    %970 = vmatprep.subr.bf16.mxu0 0
    %971 = vmatpush1.bf16.msra.mxu0 0
    %972 = vmatprep.subr.bf16.mxu0 0
    %973 = vmatpush1.bf16.msra.mxu0 0
    %974 = vmatprep.subr.bf16.mxu0 0
    %975 = vmatpush1.bf16.msra.mxu0 0
    %976 = vmatprep.subr.bf16.mxu0 0
    %977 = vmatpush1.bf16.msra.mxu0 0
    %978 = vmatprep.subr.bf16.mxu0 0
    %979 = vmatpush1.bf16.msra.mxu0 0
    %980 = vmatprep.subr.bf16.mxu0 0
    %981 = vmatpush1.bf16.msra.mxu0 0
    %982 = vmatprep.subr.bf16.mxu0 0
    %983 = vmatpush1.bf16.msra.mxu0 0
    %984 = vmatprep.subr.bf16.mxu0 0
    %985 = vmatpush1.bf16.msra.mxu0 0
    %986 = vmatprep.subr.bf16.mxu0 0
    %987 = vmatpush1.bf16.msra.mxu0 0
    %988 = vmatprep.subr.bf16.mxu0 0
    %989 = vmatpush1.bf16.msra.mxu0 0
    %990 = vmatprep.mubr.bf16.mxu0 0
    %991 = vmatmul.mubr.bf16.gmra.mrb[0].mxu0 %v956
    %v992 = vpop.f32.mrb[0].mxu0
    %v993 = vadd.f32 0.0, %v992
    %v994 = vpop.f32.mrb[0].mxu0
    %v995 = vadd.f32 0.0, %v994
    %v996 = vpop.f32.mrb[0].mxu0
    %v997 = vpop.f32.mrb[0].mxu0
    %998 = vdwg.mxu0
    %999 = vmatprep.subr.bf16.mxu0 %v263
    %1000 = vmatpush1.bf16.msra.mxu0 %v262
    %1001 = vmatprep.subr.bf16.mxu0 %v267
    %1002 = vmatpush1.bf16.msra.mxu0 %v266
    %1003 = vmatprep.subr.bf16.mxu0 0
    %1004 = vmatpush1.bf16.msra.mxu0 0
    %1005 = vmatprep.subr.bf16.mxu0 0
    %1006 = vmatpush1.bf16.msra.mxu0 0
    %1007 = vmatprep.subr.bf16.mxu0 0
    %1008 = vmatpush1.bf16.msra.mxu0 0
    %1009 = vmatprep.subr.bf16.mxu0 0
    %1010 = vmatpush1.bf16.msra.mxu0 0
    %1011 = vmatprep.subr.bf16.mxu0 0
    %1012 = vmatpush1.bf16.msra.mxu0 0
    %1013 = vmatprep.subr.bf16.mxu0 0
    %1014 = vmatpush1.bf16.msra.mxu0 0
    %1015 = vmatprep.subr.bf16.mxu0 0
    %1016 = vmatpush1.bf16.msra.mxu0 0
    %1017 = vmatprep.subr.bf16.mxu0 0
    %1018 = vmatpush1.bf16.msra.mxu0 0
    %1019 = vmatprep.subr.bf16.mxu0 0
    %1020 = vmatpush1.bf16.msra.mxu0 0
    %1021 = vmatprep.subr.bf16.mxu0 0
    %1022 = vmatpush1.bf16.msra.mxu0 0
    %1023 = vmatprep.subr.bf16.mxu0 0
    %1024 = vmatpush1.bf16.msra.mxu0 0
    %1025 = vmatprep.subr.bf16.mxu0 0
    %1026 = vmatpush1.bf16.msra.mxu0 0
    %1027 = vmatprep.subr.bf16.mxu0 0
    %1028 = vmatpush1.bf16.msra.mxu0 0
    %1029 = vmatprep.subr.bf16.mxu0 0
    %1030 = vmatpush1.bf16.msra.mxu0 0
    %1031 = vmatprep.mubr.bf16.mxu0 0
    %1032 = vmatmul.mubr.bf16.gmra.mrb[0].mxu0 %v956
    %v1033 = vpop.f32.mrb[0].mxu0
    %v1034 = vadd.f32 0.0, %v1033
    %v1035 = vpop.f32.mrb[0].mxu0
    %v1036 = vadd.f32 0.0, %v1035
    %v1037 = vpop.f32.mrb[0].mxu0
    %v1038 = vpop.f32.mrb[0].mxu0
    %1039 = vdwg.mxu0
    %1040 = vmatprep.subr.bf16.mxu0 %v375
    %1041 = vmatpush1.bf16.msra.mxu0 %v374
    %1042 = vmatprep.subr.bf16.mxu0 %v377
    %1043 = vmatpush1.bf16.msra.mxu0 %v376
    %1044 = vmatprep.subr.bf16.mxu0 0
    %1045 = vmatpush1.bf16.msra.mxu0 0
    %1046 = vmatprep.subr.bf16.mxu0 0
    %1047 = vmatpush1.bf16.msra.mxu0 0
    %1048 = vmatprep.subr.bf16.mxu0 0
    %1049 = vmatpush1.bf16.msra.mxu0 0
    %1050 = vmatprep.subr.bf16.mxu0 0
    %1051 = vmatpush1.bf16.msra.mxu0 0
    %1052 = vmatprep.subr.bf16.mxu0 0
    %1053 = vmatpush1.bf16.msra.mxu0 0
    %1054 = vmatprep.subr.bf16.mxu0 0
    %1055 = vmatpush1.bf16.msra.mxu0 0
    %1056 = vmatprep.subr.bf16.mxu0 0
    %1057 = vmatpush1.bf16.msra.mxu0 0
    %1058 = vmatprep.subr.bf16.mxu0 0
    %1059 = vmatpush1.bf16.msra.mxu0 0
    %1060 = vmatprep.subr.bf16.mxu0 0
    %1061 = vmatpush1.bf16.msra.mxu0 0
    %1062 = vmatprep.subr.bf16.mxu0 0
    %1063 = vmatpush1.bf16.msra.mxu0 0
    %1064 = vmatprep.subr.bf16.mxu0 0
    %1065 = vmatpush1.bf16.msra.mxu0 0
    %1066 = vmatprep.subr.bf16.mxu0 0
    %1067 = vmatpush1.bf16.msra.mxu0 0
    %1068 = vmatprep.subr.bf16.mxu0 0
    %1069 = vmatpush1.bf16.msra.mxu0 0
    %1070 = vmatprep.subr.bf16.mxu0 0
    %1071 = vmatpush1.bf16.msra.mxu0 0
    %1072 = vmatprep.mubr.bf16.mxu0 0
    %1073 = vmatmul.mubr.bf16.gmra.mrb[0].mxu0 %v896
    %v1074 = vpop.f32.mrb[0].mxu0
    %v1075 = vadd.f32 0.0, %v1074
    %v1076 = vpop.f32.mrb[0].mxu0
    %v1077 = vadd.f32 0.0, %v1076
    %v1078 = vpop.f32.mrb[0].mxu0
    %v1079 = vpop.f32.mrb[0].mxu0
    %1080 = vdwg.mxu0
    %v1082 = vrot.slane %v993, 5
    %v1084 = vadd.f32 %v133, %v1082
    %v1086 = vrot.slane %v1075, 5
    %v1088 = vadd.f32 %v1084, %v1086
    %v1089 = vmul.f32 %v1088, 0.5
    %v1090 = vtanh.pop %v1089
    %v1091 = vmul.f32 %v1090, 0.5
    %v1092 = vadd.f32 %v1091, 0.5
    %v1094 = vrot.slane %v995, 5
    %v1096 = vadd.f32 %v135, %v1094
    %v1098 = vrot.slane %v1077, 5
    %v1100 = vadd.f32 %v1096, %v1098
    %v1101 = vmul.f32 %v1100, 0.5
    %v1102 = vtanh.pop %v1101
    %v1103 = vmul.f32 %v1102, 0.5
    %v1104 = vadd.f32 %v1103, 0.5
    %v1106 = vrot.slane %v1034, 5
    %v1108 = vadd.f32 %v210, %v1106
    %v1109 = vtanh.pop %v1108
    %v1110 = vmul.f32 %v1109, %v1092
    %v1112 = vrot.slane %v891, 7
    %v1114 = vmul.f32 %v1104, %v1112
    %v1115 = vadd.f32 %v1110, %v1114
    %v1116 = vpack.c.bf16 %v1115, %v1115
    %v1118 = vshrl.u32 %v1116, 16
    %v1120 = vrot.slane %v1118, 1
    %v1122 = vsel %vm276, %v1120, 0
    %1124 = vmatprep.subr.bf16.mxu0 0
    %1125 = vmatpush1.bf16.msra.mxu0 %v449
    %1126 = vmatprep.subr.bf16.mxu0 0
    %1127 = vmatpush1.bf16.msra.mxu0 %v450
    %1128 = vmatprep.subr.bf16.mxu0 0
    %1129 = vmatpush1.bf16.msra.mxu0 0
    %1130 = vmatprep.subr.bf16.mxu0 0
    %1131 = vmatpush1.bf16.msra.mxu0 0
    %1132 = vmatprep.subr.bf16.mxu0 0
    %1133 = vmatpush1.bf16.msra.mxu0 0
    %1134 = vmatprep.subr.bf16.mxu0 0
    %1135 = vmatpush1.bf16.msra.mxu0 0
    %1136 = vmatprep.subr.bf16.mxu0 0
    %1137 = vmatpush1.bf16.msra.mxu0 0
    %1138 = vmatprep.subr.bf16.mxu0 0
    %1139 = vmatpush1.bf16.msra.mxu0 0
    %1140 = vmatprep.subr.bf16.mxu0 0
    %1141 = vmatpush1.bf16.msra.mxu0 0
    %1142 = vmatprep.subr.bf16.mxu0 0
    %1143 = vmatpush1.bf16.msra.mxu0 0
    %1144 = vmatprep.subr.bf16.mxu0 0
    %1145 = vmatpush1.bf16.msra.mxu0 0
    %1146 = vmatprep.subr.bf16.mxu0 0
    %1147 = vmatpush1.bf16.msra.mxu0 0
    %1148 = vmatprep.subr.bf16.mxu0 0
    %1149 = vmatpush1.bf16.msra.mxu0 0
    %1150 = vmatprep.subr.bf16.mxu0 0
    %1151 = vmatpush1.bf16.msra.mxu0 0
    %1152 = vmatprep.subr.bf16.mxu0 0
    %1153 = vmatpush1.bf16.msra.mxu0 0
    %1154 = vmatprep.subr.bf16.mxu0 0
    %1155 = vmatpush1.bf16.msra.mxu0 0
    %1156 = vmatprep.mubr.bf16.mxu0 0
    %1157 = vmatmul.mubr.bf16.gmra.mrb[0].mxu0 %v1122
    %v1158 = vpop.f32.mrb[0].mxu0
    %v1159 = vadd.f32 0.0, %v1158
    %v1160 = vpop.f32.mrb[0].mxu0
    %v1161 = vpop.f32.mrb[0].mxu0
    %v1162 = vpop.f32.mrb[0].mxu0
    %1163 = vdwg.mxu0
    %v1165 = vrot.slane %v1036, 5
    %v1167 = vadd.f32 %v212, %v1165
    %v1169 = vrot.slane %v1159, 5
    %v1171 = vadd.f32 %v1167, %v1169
    %v1172 = vmul.f32 %v1171, 0.5
    %v1173 = vtanh.pop %v1172
    %v1174 = vmul.f32 %v1173, 0.5
    %v1175 = vadd.f32 %v1174, 0.5
    %v1176 = vtanh.pop %v1115
    %v1177 = vmul.f32 %v1175, %v1176
    %v1178 = vpack.c.bf16 %v1177, %v1177
    %v1180 = vshrl.u32 %v1178, 16
    %v1182 = vrot.slane %v1180, 1
    %v1184 = vsel %vm276, %v1182, 0
    %1186 = vmatprep.subr.bf16.mxu0 %v261
    %1187 = vmatpush1.bf16.msra.mxu0 %v260
    %1188 = vmatprep.subr.bf16.mxu0 %v265
    %1189 = vmatpush1.bf16.msra.mxu0 %v264
    %1190 = vmatprep.subr.bf16.mxu0 0
    %1191 = vmatpush1.bf16.msra.mxu0 0
    %1192 = vmatprep.subr.bf16.mxu0 0
    %1193 = vmatpush1.bf16.msra.mxu0 0
    %1194 = vmatprep.subr.bf16.mxu0 0
    %1195 = vmatpush1.bf16.msra.mxu0 0
    %1196 = vmatprep.subr.bf16.mxu0 0
    %1197 = vmatpush1.bf16.msra.mxu0 0
    %1198 = vmatprep.subr.bf16.mxu0 0
    %1199 = vmatpush1.bf16.msra.mxu0 0
    %1200 = vmatprep.subr.bf16.mxu0 0
    %1201 = vmatpush1.bf16.msra.mxu0 0
    %1202 = vmatprep.subr.bf16.mxu0 0
    %1203 = vmatpush1.bf16.msra.mxu0 0
    %1204 = vmatprep.subr.bf16.mxu0 0
    %1205 = vmatpush1.bf16.msra.mxu0 0
    %1206 = vmatprep.subr.bf16.mxu0 0
    %1207 = vmatpush1.bf16.msra.mxu0 0
    %1208 = vmatprep.subr.bf16.mxu0 0
    %1209 = vmatpush1.bf16.msra.mxu0 0
    %1210 = vmatprep.subr.bf16.mxu0 0
    %1211 = vmatpush1.bf16.msra.mxu0 0
    %1212 = vmatprep.subr.bf16.mxu0 0
    %1213 = vmatpush1.bf16.msra.mxu0 0
    %1214 = vmatprep.subr.bf16.mxu0 0
    %1215 = vmatpush1.bf16.msra.mxu0 0
    %1216 = vmatprep.subr.bf16.mxu0 0
    %1217 = vmatpush1.bf16.msra.mxu0 0
    %1218 = vmatprep.mubr.bf16.mxu0 0
    %1219 = vmatmul.mubr.bf16.gmra.mrb[0].mxu0 %v1184
    %v1220 = vpop.f32.mrb[0].mxu0
    %v1221 = vadd.f32 0.0, %v1220
    %v1222 = vpop.f32.mrb[0].mxu0
    %v1223 = vadd.f32 0.0, %v1222
    %v1224 = vpop.f32.mrb[0].mxu0
    %v1225 = vpop.f32.mrb[0].mxu0
    %1226 = vdwg.mxu0
    %1227 = vmatprep.subr.bf16.mxu0 %v263
    %1228 = vmatpush1.bf16.msra.mxu0 %v262
    %1229 = vmatprep.subr.bf16.mxu0 %v267
    %1230 = vmatpush1.bf16.msra.mxu0 %v266
    %1231 = vmatprep.subr.bf16.mxu0 0
    %1232 = vmatpush1.bf16.msra.mxu0 0
    %1233 = vmatprep.subr.bf16.mxu0 0
    %1234 = vmatpush1.bf16.msra.mxu0 0
    %1235 = vmatprep.subr.bf16.mxu0 0
    %1236 = vmatpush1.bf16.msra.mxu0 0
    %1237 = vmatprep.subr.bf16.mxu0 0
    %1238 = vmatpush1.bf16.msra.mxu0 0
    %1239 = vmatprep.subr.bf16.mxu0 0
    %1240 = vmatpush1.bf16.msra.mxu0 0
    %1241 = vmatprep.subr.bf16.mxu0 0
    %1242 = vmatpush1.bf16.msra.mxu0 0
    %1243 = vmatprep.subr.bf16.mxu0 0
    %1244 = vmatpush1.bf16.msra.mxu0 0
    %1245 = vmatprep.subr.bf16.mxu0 0
    %1246 = vmatpush1.bf16.msra.mxu0 0
    %1247 = vmatprep.subr.bf16.mxu0 0
    %1248 = vmatpush1.bf16.msra.mxu0 0
    %1249 = vmatprep.subr.bf16.mxu0 0
    %1250 = vmatpush1.bf16.msra.mxu0 0
    %1251 = vmatprep.subr.bf16.mxu0 0
    %1252 = vmatpush1.bf16.msra.mxu0 0
    %1253 = vmatprep.subr.bf16.mxu0 0
    %1254 = vmatpush1.bf16.msra.mxu0 0
    %1255 = vmatprep.subr.bf16.mxu0 0
    %1256 = vmatpush1.bf16.msra.mxu0 0
    %1257 = vmatprep.subr.bf16.mxu0 0
    %1258 = vmatpush1.bf16.msra.mxu0 0
    %1259 = vmatprep.mubr.bf16.mxu0 0
    %1260 = vmatmul.mubr.bf16.gmra.mrb[0].mxu0 %v1184
    %v1261 = vpop.f32.mrb[0].mxu0
    %v1262 = vadd.f32 0.0, %v1261
    %v1263 = vpop.f32.mrb[0].mxu0
    %v1264 = vadd.f32 0.0, %v1263
    %v1265 = vpop.f32.mrb[0].mxu0
    %v1266 = vpop.f32.mrb[0].mxu0
    %1267 = vdwg.mxu0
    %1268 = vmatprep.subr.bf16.mxu0 %v375
    %1269 = vmatpush1.bf16.msra.mxu0 %v374
    %1270 = vmatprep.subr.bf16.mxu0 %v377
    %1271 = vmatpush1.bf16.msra.mxu0 %v376
    %1272 = vmatprep.subr.bf16.mxu0 0
    %1273 = vmatpush1.bf16.msra.mxu0 0
    %1274 = vmatprep.subr.bf16.mxu0 0
    %1275 = vmatpush1.bf16.msra.mxu0 0
    %1276 = vmatprep.subr.bf16.mxu0 0
    %1277 = vmatpush1.bf16.msra.mxu0 0
    %1278 = vmatprep.subr.bf16.mxu0 0
    %1279 = vmatpush1.bf16.msra.mxu0 0
    %1280 = vmatprep.subr.bf16.mxu0 0
    %1281 = vmatpush1.bf16.msra.mxu0 0
    %1282 = vmatprep.subr.bf16.mxu0 0
    %1283 = vmatpush1.bf16.msra.mxu0 0
    %1284 = vmatprep.subr.bf16.mxu0 0
    %1285 = vmatpush1.bf16.msra.mxu0 0
    %1286 = vmatprep.subr.bf16.mxu0 0
    %1287 = vmatpush1.bf16.msra.mxu0 0
    %1288 = vmatprep.subr.bf16.mxu0 0
    %1289 = vmatpush1.bf16.msra.mxu0 0
    %1290 = vmatprep.subr.bf16.mxu0 0
    %1291 = vmatpush1.bf16.msra.mxu0 0
    %1292 = vmatprep.subr.bf16.mxu0 0
    %1293 = vmatpush1.bf16.msra.mxu0 0
    %1294 = vmatprep.subr.bf16.mxu0 0
    %1295 = vmatpush1.bf16.msra.mxu0 0
    %1296 = vmatprep.subr.bf16.mxu0 0
    %1297 = vmatpush1.bf16.msra.mxu0 0
    %1298 = vmatprep.subr.bf16.mxu0 0
    %1299 = vmatpush1.bf16.msra.mxu0 0
    %1300 = vmatprep.mubr.bf16.mxu0 0
    %1301 = vmatmul.mubr.bf16.gmra.mrb[0].mxu0 %v1122
    %v1302 = vpop.f32.mrb[0].mxu0
    %v1303 = vadd.f32 0.0, %v1302
    %v1304 = vpop.f32.mrb[0].mxu0
    %v1305 = vadd.f32 0.0, %v1304
    %v1306 = vpop.f32.mrb[0].mxu0
    %v1307 = vpop.f32.mrb[0].mxu0
    %1308 = vdwg.mxu0
    %v1310 = vrot.slane %v1221, 4
    %v1312 = vadd.f32 %v133, %v1310
    %v1314 = vrot.slane %v1303, 4
    %v1316 = vadd.f32 %v1312, %v1314
    %v1317 = vmul.f32 %v1316, 0.5
    %v1318 = vtanh.pop %v1317
    %v1319 = vmul.f32 %v1318, 0.5
    %v1320 = vadd.f32 %v1319, 0.5
    %v1322 = vrot.slane %v1223, 4
    %v1324 = vadd.f32 %v135, %v1322
    %v1326 = vrot.slane %v1305, 4
    %v1328 = vadd.f32 %v1324, %v1326
    %v1329 = vmul.f32 %v1328, 0.5
    %v1330 = vtanh.pop %v1329
    %v1331 = vmul.f32 %v1330, 0.5
    %v1332 = vadd.f32 %v1331, 0.5
    %v1334 = vrot.slane %v1262, 4
    %v1336 = vadd.f32 %v210, %v1334
    %v1337 = vtanh.pop %v1336
    %v1338 = vmul.f32 %v1337, %v1320
    %v1340 = vrot.slane %v1115, 7
    %v1342 = vmul.f32 %v1332, %v1340
    %v1343 = vadd.f32 %v1338, %v1342
    %v1344 = vpack.c.bf16 %v1343, %v1343
    %v1346 = vrot.slane %v1344, 2
    %v1348 = vsel %vm276, %v1346, 0
    %1350 = vmatprep.subr.bf16.mxu0 0
    %1351 = vmatpush1.bf16.msra.mxu0 %v449
    %1352 = vmatprep.subr.bf16.mxu0 0
    %1353 = vmatpush1.bf16.msra.mxu0 %v450
    %1354 = vmatprep.subr.bf16.mxu0 0
    %1355 = vmatpush1.bf16.msra.mxu0 0
    %1356 = vmatprep.subr.bf16.mxu0 0
    %1357 = vmatpush1.bf16.msra.mxu0 0
    %1358 = vmatprep.subr.bf16.mxu0 0
    %1359 = vmatpush1.bf16.msra.mxu0 0
    %1360 = vmatprep.subr.bf16.mxu0 0
    %1361 = vmatpush1.bf16.msra.mxu0 0
    %1362 = vmatprep.subr.bf16.mxu0 0
    %1363 = vmatpush1.bf16.msra.mxu0 0
    %1364 = vmatprep.subr.bf16.mxu0 0
    %1365 = vmatpush1.bf16.msra.mxu0 0
    %1366 = vmatprep.subr.bf16.mxu0 0
    %1367 = vmatpush1.bf16.msra.mxu0 0
    %1368 = vmatprep.subr.bf16.mxu0 0
    %1369 = vmatpush1.bf16.msra.mxu0 0
    %1370 = vmatprep.subr.bf16.mxu0 0
    %1371 = vmatpush1.bf16.msra.mxu0 0
    %1372 = vmatprep.subr.bf16.mxu0 0
    %1373 = vmatpush1.bf16.msra.mxu0 0
    %1374 = vmatprep.subr.bf16.mxu0 0
    %1375 = vmatpush1.bf16.msra.mxu0 0
    %1376 = vmatprep.subr.bf16.mxu0 0
    %1377 = vmatpush1.bf16.msra.mxu0 0
    %1378 = vmatprep.subr.bf16.mxu0 0
    %1379 = vmatpush1.bf16.msra.mxu0 0
    %1380 = vmatprep.subr.bf16.mxu0 0
    %1381 = vmatpush1.bf16.msra.mxu0 0
    %1382 = vmatprep.mubr.bf16.mxu0 0
    %1383 = vmatmul.mubr.bf16.gmra.mrb[0].mxu0 %v1348
    %v1384 = vpop.f32.mrb[0].mxu0
    %v1385 = vadd.f32 0.0, %v1384
    %v1386 = vpop.f32.mrb[0].mxu0
    %v1387 = vpop.f32.mrb[0].mxu0
    %v1388 = vpop.f32.mrb[0].mxu0
    %1389 = vdwg.mxu0
    %v1391 = vrot.slane %v1264, 4
    %v1393 = vadd.f32 %v212, %v1391
    %v1395 = vrot.slane %v1385, 4
    %v1397 = vadd.f32 %v1393, %v1395
    %v1398 = vmul.f32 %v1397, 0.5
    %v1399 = vtanh.pop %v1398
    %v1400 = vmul.f32 %v1399, 0.5
    %v1401 = vadd.f32 %v1400, 0.5
    %v1402 = vtanh.pop %v1343
    %v1403 = vmul.f32 %v1401, %v1402
    %v1404 = vpack.c.bf16 %v1403, %v1403
    %v1406 = vrot.slane %v1404, 2
    %v1408 = vsel %vm276, %v1406, 0
    %1410 = vmatprep.subr.bf16.mxu0 %v261
    %1411 = vmatpush1.bf16.msra.mxu0 %v260
    %1412 = vmatprep.subr.bf16.mxu0 %v265
    %1413 = vmatpush1.bf16.msra.mxu0 %v264
    %1414 = vmatprep.subr.bf16.mxu0 0
    %1415 = vmatpush1.bf16.msra.mxu0 0
    %1416 = vmatprep.subr.bf16.mxu0 0
    %1417 = vmatpush1.bf16.msra.mxu0 0
    %1418 = vmatprep.subr.bf16.mxu0 0
    %1419 = vmatpush1.bf16.msra.mxu0 0
    %1420 = vmatprep.subr.bf16.mxu0 0
    %1421 = vmatpush1.bf16.msra.mxu0 0
    %1422 = vmatprep.subr.bf16.mxu0 0
    %1423 = vmatpush1.bf16.msra.mxu0 0
    %1424 = vmatprep.subr.bf16.mxu0 0
    %1425 = vmatpush1.bf16.msra.mxu0 0
    %1426 = vmatprep.subr.bf16.mxu0 0
    %1427 = vmatpush1.bf16.msra.mxu0 0
    %1428 = vmatprep.subr.bf16.mxu0 0
    %1429 = vmatpush1.bf16.msra.mxu0 0
    %1430 = vmatprep.subr.bf16.mxu0 0
    %1431 = vmatpush1.bf16.msra.mxu0 0
    %1432 = vmatprep.subr.bf16.mxu0 0
    %1433 = vmatpush1.bf16.msra.mxu0 0
    %1434 = vmatprep.subr.bf16.mxu0 0
    %1435 = vmatpush1.bf16.msra.mxu0 0
    %1436 = vmatprep.subr.bf16.mxu0 0
    %1437 = vmatpush1.bf16.msra.mxu0 0
    %1438 = vmatprep.subr.bf16.mxu0 0
    %1439 = vmatpush1.bf16.msra.mxu0 0
    %1440 = vmatprep.subr.bf16.mxu0 0
    %1441 = vmatpush1.bf16.msra.mxu0 0
    %1442 = vmatprep.mubr.bf16.mxu0 0
    %1443 = vmatmul.mubr.bf16.gmra.mrb[0].mxu0 %v1408
    %v1444 = vpop.f32.mrb[0].mxu0
    %v1445 = vadd.f32 0.0, %v1444
    %v1446 = vpop.f32.mrb[0].mxu0
    %v1447 = vadd.f32 0.0, %v1446
    %v1448 = vpop.f32.mrb[0].mxu0
    %v1449 = vpop.f32.mrb[0].mxu0
    %1450 = vdwg.mxu0
    %1451 = vmatprep.subr.bf16.mxu0 %v263
    %1452 = vmatpush1.bf16.msra.mxu0 %v262
    %1453 = vmatprep.subr.bf16.mxu0 %v267
    %1454 = vmatpush1.bf16.msra.mxu0 %v266
    %1455 = vmatprep.subr.bf16.mxu0 0
    %1456 = vmatpush1.bf16.msra.mxu0 0
    %1457 = vmatprep.subr.bf16.mxu0 0
    %1458 = vmatpush1.bf16.msra.mxu0 0
    %1459 = vmatprep.subr.bf16.mxu0 0
    %1460 = vmatpush1.bf16.msra.mxu0 0
    %1461 = vmatprep.subr.bf16.mxu0 0
    %1462 = vmatpush1.bf16.msra.mxu0 0
    %1463 = vmatprep.subr.bf16.mxu0 0
    %1464 = vmatpush1.bf16.msra.mxu0 0
    %1465 = vmatprep.subr.bf16.mxu0 0
    %1466 = vmatpush1.bf16.msra.mxu0 0
    %1467 = vmatprep.subr.bf16.mxu0 0
    %1468 = vmatpush1.bf16.msra.mxu0 0
    %1469 = vmatprep.subr.bf16.mxu0 0
    %1470 = vmatpush1.bf16.msra.mxu0 0
    %1471 = vmatprep.subr.bf16.mxu0 0
    %1472 = vmatpush1.bf16.msra.mxu0 0
    %1473 = vmatprep.subr.bf16.mxu0 0
    %1474 = vmatpush1.bf16.msra.mxu0 0
    %1475 = vmatprep.subr.bf16.mxu0 0
    %1476 = vmatpush1.bf16.msra.mxu0 0
    %1477 = vmatprep.subr.bf16.mxu0 0
    %1478 = vmatpush1.bf16.msra.mxu0 0
    %1479 = vmatprep.subr.bf16.mxu0 0
    %1480 = vmatpush1.bf16.msra.mxu0 0
    %1481 = vmatprep.subr.bf16.mxu0 0
    %1482 = vmatpush1.bf16.msra.mxu0 0
    %1483 = vmatprep.mubr.bf16.mxu0 0
    %1484 = vmatmul.mubr.bf16.gmra.mrb[0].mxu0 %v1408
    %v1485 = vpop.f32.mrb[0].mxu0
    %v1486 = vadd.f32 0.0, %v1485
    %v1487 = vpop.f32.mrb[0].mxu0
    %v1488 = vadd.f32 0.0, %v1487
    %v1489 = vpop.f32.mrb[0].mxu0
    %v1490 = vpop.f32.mrb[0].mxu0
    %1491 = vdwg.mxu0
    %1492 = vmatprep.subr.bf16.mxu0 %v375
    %1493 = vmatpush1.bf16.msra.mxu0 %v374
    %1494 = vmatprep.subr.bf16.mxu0 %v377
    %1495 = vmatpush1.bf16.msra.mxu0 %v376
    %1496 = vmatprep.subr.bf16.mxu0 0
    %1497 = vmatpush1.bf16.msra.mxu0 0
    %1498 = vmatprep.subr.bf16.mxu0 0
    %1499 = vmatpush1.bf16.msra.mxu0 0
    %1500 = vmatprep.subr.bf16.mxu0 0
    %1501 = vmatpush1.bf16.msra.mxu0 0
    %1502 = vmatprep.subr.bf16.mxu0 0
    %1503 = vmatpush1.bf16.msra.mxu0 0
    %1504 = vmatprep.subr.bf16.mxu0 0
    %1505 = vmatpush1.bf16.msra.mxu0 0
    %1506 = vmatprep.subr.bf16.mxu0 0
    %1507 = vmatpush1.bf16.msra.mxu0 0
    %1508 = vmatprep.subr.bf16.mxu0 0
    %1509 = vmatpush1.bf16.msra.mxu0 0
    %1510 = vmatprep.subr.bf16.mxu0 0
    %1511 = vmatpush1.bf16.msra.mxu0 0
    %1512 = vmatprep.subr.bf16.mxu0 0
    %1513 = vmatpush1.bf16.msra.mxu0 0
    %1514 = vmatprep.subr.bf16.mxu0 0
    %1515 = vmatpush1.bf16.msra.mxu0 0
    %1516 = vmatprep.subr.bf16.mxu0 0
    %1517 = vmatpush1.bf16.msra.mxu0 0
    %1518 = vmatprep.subr.bf16.mxu0 0
    %1519 = vmatpush1.bf16.msra.mxu0 0
    %1520 = vmatprep.subr.bf16.mxu0 0
    %1521 = vmatpush1.bf16.msra.mxu0 0
    %1522 = vmatprep.subr.bf16.mxu0 0
    %1523 = vmatpush1.bf16.msra.mxu0 0
    %1524 = vmatprep.mubr.bf16.mxu0 0
    %1525 = vmatmul.mubr.bf16.gmra.mrb[0].mxu0 %v1348
    %v1526 = vpop.f32.mrb[0].mxu0
    %v1527 = vadd.f32 0.0, %v1526
    %v1528 = vpop.f32.mrb[0].mxu0
    %v1529 = vadd.f32 0.0, %v1528
    %v1530 = vpop.f32.mrb[0].mxu0
    %v1531 = vpop.f32.mrb[0].mxu0
    %1532 = vdwg.mxu0
    %v1534 = vrot.slane %v1445, 3
    %v1536 = vadd.f32 %v133, %v1534
    %v1538 = vrot.slane %v1527, 3
    %v1540 = vadd.f32 %v1536, %v1538
    %v1541 = vmul.f32 %v1540, 0.5
    %v1542 = vtanh.pop %v1541
    %v1543 = vmul.f32 %v1542, 0.5
    %v1544 = vadd.f32 %v1543, 0.5
    %v1546 = vrot.slane %v1447, 3
    %v1548 = vadd.f32 %v135, %v1546
    %v1550 = vrot.slane %v1529, 3
    %v1552 = vadd.f32 %v1548, %v1550
    %v1553 = vmul.f32 %v1552, 0.5
    %v1554 = vtanh.pop %v1553
    %v1555 = vmul.f32 %v1554, 0.5
    %v1556 = vadd.f32 %v1555, 0.5
    %v1558 = vrot.slane %v1486, 3
    %v1560 = vadd.f32 %v210, %v1558
    %v1561 = vtanh.pop %v1560
    %v1562 = vmul.f32 %v1561, %v1544
    %v1564 = vrot.slane %v1343, 7
    %v1566 = vmul.f32 %v1556, %v1564
    %v1567 = vadd.f32 %v1562, %v1566
    %v1568 = vpack.c.bf16 %v1567, %v1567
    %v1570 = vshrl.u32 %v1568, 16
    %v1572 = vrot.slane %v1570, 2
    %v1574 = vsel %vm276, %v1572, 0
    %1576 = vmatprep.subr.bf16.mxu0 0
    %1577 = vmatpush1.bf16.msra.mxu0 %v449
    %1578 = vmatprep.subr.bf16.mxu0 0
    %1579 = vmatpush1.bf16.msra.mxu0 %v450
    %1580 = vmatprep.subr.bf16.mxu0 0
    %1581 = vmatpush1.bf16.msra.mxu0 0
    %1582 = vmatprep.subr.bf16.mxu0 0
    %1583 = vmatpush1.bf16.msra.mxu0 0
    %1584 = vmatprep.subr.bf16.mxu0 0
    %1585 = vmatpush1.bf16.msra.mxu0 0
    %1586 = vmatprep.subr.bf16.mxu0 0
    %1587 = vmatpush1.bf16.msra.mxu0 0
    %1588 = vmatprep.subr.bf16.mxu0 0
    %1589 = vmatpush1.bf16.msra.mxu0 0
    %1590 = vmatprep.subr.bf16.mxu0 0
    %1591 = vmatpush1.bf16.msra.mxu0 0
    %1592 = vmatprep.subr.bf16.mxu0 0
    %1593 = vmatpush1.bf16.msra.mxu0 0
    %1594 = vmatprep.subr.bf16.mxu0 0
    %1595 = vmatpush1.bf16.msra.mxu0 0
    %1596 = vmatprep.subr.bf16.mxu0 0
    %1597 = vmatpush1.bf16.msra.mxu0 0
    %1598 = vmatprep.subr.bf16.mxu0 0
    %1599 = vmatpush1.bf16.msra.mxu0 0
    %1600 = vmatprep.subr.bf16.mxu0 0
    %1601 = vmatpush1.bf16.msra.mxu0 0
    %1602 = vmatprep.subr.bf16.mxu0 0
    %1603 = vmatpush1.bf16.msra.mxu0 0
    %1604 = vmatprep.subr.bf16.mxu0 0
    %1605 = vmatpush1.bf16.msra.mxu0 0
    %1606 = vmatprep.subr.bf16.mxu0 0
    %1607 = vmatpush1.bf16.msra.mxu0 0
    %1608 = vmatprep.mubr.bf16.mxu0 0
    %1609 = vmatmul.mubr.bf16.gmra.mrb[0].mxu0 %v1574
    %v1610 = vpop.f32.mrb[0].mxu0
    %v1611 = vadd.f32 0.0, %v1610
    %v1612 = vpop.f32.mrb[0].mxu0
    %v1613 = vpop.f32.mrb[0].mxu0
    %v1614 = vpop.f32.mrb[0].mxu0
    %1615 = vdwg.mxu0
    %v1617 = vrot.slane %v1488, 3
    %v1619 = vadd.f32 %v212, %v1617
    %v1621 = vrot.slane %v1611, 3
    %v1623 = vadd.f32 %v1619, %v1621
    %v1624 = vmul.f32 %v1623, 0.5
    %v1625 = vtanh.pop %v1624
    %v1626 = vmul.f32 %v1625, 0.5
    %v1627 = vadd.f32 %v1626, 0.5
    %v1628 = vtanh.pop %v1567
    %v1629 = vmul.f32 %v1627, %v1628
    %v1630 = vpack.c.bf16 %v1629, %v1629
    %v1632 = vshrl.u32 %v1630, 16
    %v1634 = vrot.slane %v1632, 2
    %v1636 = vsel %vm276, %v1634, 0
    %1638 = vmatprep.subr.bf16.mxu0 %v261
    %1639 = vmatpush1.bf16.msra.mxu0 %v260
    %1640 = vmatprep.subr.bf16.mxu0 %v265
    %1641 = vmatpush1.bf16.msra.mxu0 %v264
    %1642 = vmatprep.subr.bf16.mxu0 0
    %1643 = vmatpush1.bf16.msra.mxu0 0
    %1644 = vmatprep.subr.bf16.mxu0 0
    %1645 = vmatpush1.bf16.msra.mxu0 0
    %1646 = vmatprep.subr.bf16.mxu0 0
    %1647 = vmatpush1.bf16.msra.mxu0 0
    %1648 = vmatprep.subr.bf16.mxu0 0
    %1649 = vmatpush1.bf16.msra.mxu0 0
    %1650 = vmatprep.subr.bf16.mxu0 0
    %1651 = vmatpush1.bf16.msra.mxu0 0
    %1652 = vmatprep.subr.bf16.mxu0 0
    %1653 = vmatpush1.bf16.msra.mxu0 0
    %1654 = vmatprep.subr.bf16.mxu0 0
    %1655 = vmatpush1.bf16.msra.mxu0 0
    %1656 = vmatprep.subr.bf16.mxu0 0
    %1657 = vmatpush1.bf16.msra.mxu0 0
    %1658 = vmatprep.subr.bf16.mxu0 0
    %1659 = vmatpush1.bf16.msra.mxu0 0
    %1660 = vmatprep.subr.bf16.mxu0 0
    %1661 = vmatpush1.bf16.msra.mxu0 0
    %1662 = vmatprep.subr.bf16.mxu0 0
    %1663 = vmatpush1.bf16.msra.mxu0 0
    %1664 = vmatprep.subr.bf16.mxu0 0
    %1665 = vmatpush1.bf16.msra.mxu0 0
    %1666 = vmatprep.subr.bf16.mxu0 0
    %1667 = vmatpush1.bf16.msra.mxu0 0
    %1668 = vmatprep.subr.bf16.mxu0 0
    %1669 = vmatpush1.bf16.msra.mxu0 0
    %1670 = vmatprep.mubr.bf16.mxu0 0
    %1671 = vmatmul.mubr.bf16.gmra.mrb[0].mxu0 %v1636
    %v1672 = vpop.f32.mrb[0].mxu0
    %v1673 = vadd.f32 0.0, %v1672
    %v1674 = vpop.f32.mrb[0].mxu0
    %v1675 = vadd.f32 0.0, %v1674
    %v1676 = vpop.f32.mrb[0].mxu0
    %v1677 = vpop.f32.mrb[0].mxu0
    %1678 = vdwg.mxu0
    %1679 = vmatprep.subr.bf16.mxu0 %v263
    %1680 = vmatpush1.bf16.msra.mxu0 %v262
    %1681 = vmatprep.subr.bf16.mxu0 %v267
    %1682 = vmatpush1.bf16.msra.mxu0 %v266
    %1683 = vmatprep.subr.bf16.mxu0 0
    %1684 = vmatpush1.bf16.msra.mxu0 0
    %1685 = vmatprep.subr.bf16.mxu0 0
    %1686 = vmatpush1.bf16.msra.mxu0 0
    %1687 = vmatprep.subr.bf16.mxu0 0
    %1688 = vmatpush1.bf16.msra.mxu0 0
    %1689 = vmatprep.subr.bf16.mxu0 0
    %1690 = vmatpush1.bf16.msra.mxu0 0
    %1691 = vmatprep.subr.bf16.mxu0 0
    %1692 = vmatpush1.bf16.msra.mxu0 0
    %1693 = vmatprep.subr.bf16.mxu0 0
    %1694 = vmatpush1.bf16.msra.mxu0 0
    %1695 = vmatprep.subr.bf16.mxu0 0
    %1696 = vmatpush1.bf16.msra.mxu0 0
    %1697 = vmatprep.subr.bf16.mxu0 0
    %1698 = vmatpush1.bf16.msra.mxu0 0
    %1699 = vmatprep.subr.bf16.mxu0 0
    %1700 = vmatpush1.bf16.msra.mxu0 0
    %1701 = vmatprep.subr.bf16.mxu0 0
    %1702 = vmatpush1.bf16.msra.mxu0 0
    %1703 = vmatprep.subr.bf16.mxu0 0
    %1704 = vmatpush1.bf16.msra.mxu0 0
    %1705 = vmatprep.subr.bf16.mxu0 0
    %1706 = vmatpush1.bf16.msra.mxu0 0
    %1707 = vmatprep.subr.bf16.mxu0 0
    %1708 = vmatpush1.bf16.msra.mxu0 0
    %1709 = vmatprep.subr.bf16.mxu0 0
    %1710 = vmatpush1.bf16.msra.mxu0 0
    %1711 = vmatprep.mubr.bf16.mxu0 0
    %1712 = vmatmul.mubr.bf16.gmra.mrb[0].mxu0 %v1636
    %v1713 = vpop.f32.mrb[0].mxu0
    %v1714 = vadd.f32 0.0, %v1713
    %v1715 = vpop.f32.mrb[0].mxu0
    %v1716 = vadd.f32 0.0, %v1715
    %v1717 = vpop.f32.mrb[0].mxu0
    %v1718 = vpop.f32.mrb[0].mxu0
    %1719 = vdwg.mxu0
    %1720 = vmatprep.subr.bf16.mxu0 %v375
    %1721 = vmatpush1.bf16.msra.mxu0 %v374
    %1722 = vmatprep.subr.bf16.mxu0 %v377
    %1723 = vmatpush1.bf16.msra.mxu0 %v376
    %1724 = vmatprep.subr.bf16.mxu0 0
    %1725 = vmatpush1.bf16.msra.mxu0 0
    %1726 = vmatprep.subr.bf16.mxu0 0
    %1727 = vmatpush1.bf16.msra.mxu0 0
    %1728 = vmatprep.subr.bf16.mxu0 0
    %1729 = vmatpush1.bf16.msra.mxu0 0
    %1730 = vmatprep.subr.bf16.mxu0 0
    %1731 = vmatpush1.bf16.msra.mxu0 0
    %1732 = vmatprep.subr.bf16.mxu0 0
    %1733 = vmatpush1.bf16.msra.mxu0 0
    %1734 = vmatprep.subr.bf16.mxu0 0
    %1735 = vmatpush1.bf16.msra.mxu0 0
    %1736 = vmatprep.subr.bf16.mxu0 0
    %1737 = vmatpush1.bf16.msra.mxu0 0
    %1738 = vmatprep.subr.bf16.mxu0 0
    %1739 = vmatpush1.bf16.msra.mxu0 0
    %1740 = vmatprep.subr.bf16.mxu0 0
    %1741 = vmatpush1.bf16.msra.mxu0 0
    %1742 = vmatprep.subr.bf16.mxu0 0
    %1743 = vmatpush1.bf16.msra.mxu0 0
    %1744 = vmatprep.subr.bf16.mxu0 0
    %1745 = vmatpush1.bf16.msra.mxu0 0
    %1746 = vmatprep.subr.bf16.mxu0 0
    %1747 = vmatpush1.bf16.msra.mxu0 0
    %1748 = vmatprep.subr.bf16.mxu0 0
    %1749 = vmatpush1.bf16.msra.mxu0 0
    %1750 = vmatprep.subr.bf16.mxu0 0
    %1751 = vmatpush1.bf16.msra.mxu0 0
    %1752 = vmatprep.mubr.bf16.mxu0 0
    %1753 = vmatmul.mubr.bf16.gmra.mrb[0].mxu0 %v1574
    %v1754 = vpop.f32.mrb[0].mxu0
    %v1755 = vadd.f32 0.0, %v1754
    %v1756 = vpop.f32.mrb[0].mxu0
    %v1757 = vadd.f32 0.0, %v1756
    %v1758 = vpop.f32.mrb[0].mxu0
    %v1759 = vpop.f32.mrb[0].mxu0
    %1760 = vdwg.mxu0
    %v1762 = vrot.slane %v1673, 2
    %v1764 = vadd.f32 %v133, %v1762
    %v1766 = vrot.slane %v1755, 2
    %v1768 = vadd.f32 %v1764, %v1766
    %v1769 = vmul.f32 %v1768, 0.5
    %v1770 = vtanh.pop %v1769
    %v1771 = vmul.f32 %v1770, 0.5
    %v1772 = vadd.f32 %v1771, 0.5
    %v1774 = vrot.slane %v1675, 2
    %v1776 = vadd.f32 %v135, %v1774
    %v1778 = vrot.slane %v1757, 2
    %v1780 = vadd.f32 %v1776, %v1778
    %v1781 = vmul.f32 %v1780, 0.5
    %v1782 = vtanh.pop %v1781
    %v1783 = vmul.f32 %v1782, 0.5
    %v1784 = vadd.f32 %v1783, 0.5
    %v1786 = vrot.slane %v1714, 2
    %v1788 = vadd.f32 %v210, %v1786
    %v1789 = vtanh.pop %v1788
    %v1790 = vmul.f32 %v1789, %v1772
    %v1792 = vrot.slane %v1567, 7
    %v1794 = vmul.f32 %v1784, %v1792
    %v1795 = vadd.f32 %v1790, %v1794
    %v1796 = vpack.c.bf16 %v1795, %v1795
    %v1798 = vrot.slane %v1796, 3
    %v1800 = vsel %vm276, %v1798, 0
    %1802 = vmatprep.subr.bf16.mxu0 0
    %1803 = vmatpush1.bf16.msra.mxu0 %v449
    %1804 = vmatprep.subr.bf16.mxu0 0
    %1805 = vmatpush1.bf16.msra.mxu0 %v450
    %1806 = vmatprep.subr.bf16.mxu0 0
    %1807 = vmatpush1.bf16.msra.mxu0 0
    %1808 = vmatprep.subr.bf16.mxu0 0
    %1809 = vmatpush1.bf16.msra.mxu0 0
    %1810 = vmatprep.subr.bf16.mxu0 0
    %1811 = vmatpush1.bf16.msra.mxu0 0
    %1812 = vmatprep.subr.bf16.mxu0 0
    %1813 = vmatpush1.bf16.msra.mxu0 0
    %1814 = vmatprep.subr.bf16.mxu0 0
    %1815 = vmatpush1.bf16.msra.mxu0 0
    %1816 = vmatprep.subr.bf16.mxu0 0
    %1817 = vmatpush1.bf16.msra.mxu0 0
    %1818 = vmatprep.subr.bf16.mxu0 0
    %1819 = vmatpush1.bf16.msra.mxu0 0
    %1820 = vmatprep.subr.bf16.mxu0 0
    %1821 = vmatpush1.bf16.msra.mxu0 0
    %1822 = vmatprep.subr.bf16.mxu0 0
    %1823 = vmatpush1.bf16.msra.mxu0 0
    %1824 = vmatprep.subr.bf16.mxu0 0
    %1825 = vmatpush1.bf16.msra.mxu0 0
    %1826 = vmatprep.subr.bf16.mxu0 0
    %1827 = vmatpush1.bf16.msra.mxu0 0
    %1828 = vmatprep.subr.bf16.mxu0 0
    %1829 = vmatpush1.bf16.msra.mxu0 0
    %1830 = vmatprep.subr.bf16.mxu0 0
    %1831 = vmatpush1.bf16.msra.mxu0 0
    %1832 = vmatprep.subr.bf16.mxu0 0
    %1833 = vmatpush1.bf16.msra.mxu0 0
    %1834 = vmatprep.mubr.bf16.mxu0 0
    %1835 = vmatmul.mubr.bf16.gmra.mrb[0].mxu0 %v1800
    %v1836 = vpop.f32.mrb[0].mxu0
    %v1837 = vadd.f32 0.0, %v1836
    %v1838 = vpop.f32.mrb[0].mxu0
    %v1839 = vpop.f32.mrb[0].mxu0
    %v1840 = vpop.f32.mrb[0].mxu0
    %1841 = vdwg.mxu0
    %v1843 = vrot.slane %v1716, 2
    %v1845 = vadd.f32 %v212, %v1843
    %v1847 = vrot.slane %v1837, 2
    %v1849 = vadd.f32 %v1845, %v1847
    %v1850 = vmul.f32 %v1849, 0.5
    %v1851 = vtanh.pop %v1850
    %v1852 = vmul.f32 %v1851, 0.5
    %v1853 = vadd.f32 %v1852, 0.5
    %v1854 = vtanh.pop %v1795
    %v1855 = vmul.f32 %v1853, %v1854
    %v1856 = vpack.c.bf16 %v1855, %v1855
    %v1858 = vrot.slane %v1856, 3
    %v1860 = vsel %vm276, %v1858, 0
    %1862 = vmatprep.subr.bf16.mxu0 %v261
    %1863 = vmatpush1.bf16.msra.mxu0 %v260
    %1864 = vmatprep.subr.bf16.mxu0 %v265
    %1865 = vmatpush1.bf16.msra.mxu0 %v264
    %1866 = vmatprep.subr.bf16.mxu0 0
    %1867 = vmatpush1.bf16.msra.mxu0 0
    %1868 = vmatprep.subr.bf16.mxu0 0
    %1869 = vmatpush1.bf16.msra.mxu0 0
    %1870 = vmatprep.subr.bf16.mxu0 0
    %1871 = vmatpush1.bf16.msra.mxu0 0
    %1872 = vmatprep.subr.bf16.mxu0 0
    %1873 = vmatpush1.bf16.msra.mxu0 0
    %1874 = vmatprep.subr.bf16.mxu0 0
    %1875 = vmatpush1.bf16.msra.mxu0 0
    %1876 = vmatprep.subr.bf16.mxu0 0
    %1877 = vmatpush1.bf16.msra.mxu0 0
    %1878 = vmatprep.subr.bf16.mxu0 0
    %1879 = vmatpush1.bf16.msra.mxu0 0
    %1880 = vmatprep.subr.bf16.mxu0 0
    %1881 = vmatpush1.bf16.msra.mxu0 0
    %1882 = vmatprep.subr.bf16.mxu0 0
    %1883 = vmatpush1.bf16.msra.mxu0 0
    %1884 = vmatprep.subr.bf16.mxu0 0
    %1885 = vmatpush1.bf16.msra.mxu0 0
    %1886 = vmatprep.subr.bf16.mxu0 0
    %1887 = vmatpush1.bf16.msra.mxu0 0
    %1888 = vmatprep.subr.bf16.mxu0 0
    %1889 = vmatpush1.bf16.msra.mxu0 0
    %1890 = vmatprep.subr.bf16.mxu0 0
    %1891 = vmatpush1.bf16.msra.mxu0 0
    %1892 = vmatprep.subr.bf16.mxu0 0
    %1893 = vmatpush1.bf16.msra.mxu0 0
    %1894 = vmatprep.mubr.bf16.mxu0 0
    %1895 = vmatmul.mubr.bf16.gmra.mrb[0].mxu0 %v1860
    %v1896 = vpop.f32.mrb[0].mxu0
    %v1897 = vadd.f32 0.0, %v1896
    %v1898 = vpop.f32.mrb[0].mxu0
    %v1899 = vadd.f32 0.0, %v1898
    %v1900 = vpop.f32.mrb[0].mxu0
    %v1901 = vpop.f32.mrb[0].mxu0
    %1902 = vdwg.mxu0
    %1903 = vmatprep.subr.bf16.mxu0 %v263
    %1904 = vmatpush1.bf16.msra.mxu0 %v262
    %1905 = vmatprep.subr.bf16.mxu0 %v267
    %1906 = vmatpush1.bf16.msra.mxu0 %v266
    %1907 = vmatprep.subr.bf16.mxu0 0
    %1908 = vmatpush1.bf16.msra.mxu0 0
    %1909 = vmatprep.subr.bf16.mxu0 0
    %1910 = vmatpush1.bf16.msra.mxu0 0
    %1911 = vmatprep.subr.bf16.mxu0 0
    %1912 = vmatpush1.bf16.msra.mxu0 0
    %1913 = vmatprep.subr.bf16.mxu0 0
    %1914 = vmatpush1.bf16.msra.mxu0 0
    %1915 = vmatprep.subr.bf16.mxu0 0
    %1916 = vmatpush1.bf16.msra.mxu0 0
    %1917 = vmatprep.subr.bf16.mxu0 0
    %1918 = vmatpush1.bf16.msra.mxu0 0
    %1919 = vmatprep.subr.bf16.mxu0 0
    %1920 = vmatpush1.bf16.msra.mxu0 0
    %1921 = vmatprep.subr.bf16.mxu0 0
    %1922 = vmatpush1.bf16.msra.mxu0 0
    %1923 = vmatprep.subr.bf16.mxu0 0
    %1924 = vmatpush1.bf16.msra.mxu0 0
    %1925 = vmatprep.subr.bf16.mxu0 0
    %1926 = vmatpush1.bf16.msra.mxu0 0
    %1927 = vmatprep.subr.bf16.mxu0 0
    %1928 = vmatpush1.bf16.msra.mxu0 0
    %1929 = vmatprep.subr.bf16.mxu0 0
    %1930 = vmatpush1.bf16.msra.mxu0 0
    %1931 = vmatprep.subr.bf16.mxu0 0
    %1932 = vmatpush1.bf16.msra.mxu0 0
    %1933 = vmatprep.subr.bf16.mxu0 0
    %1934 = vmatpush1.bf16.msra.mxu0 0
    %1935 = vmatprep.mubr.bf16.mxu0 0
    %1936 = vmatmul.mubr.bf16.gmra.mrb[0].mxu0 %v1860
    %v1937 = vpop.f32.mrb[0].mxu0
    %v1938 = vadd.f32 0.0, %v1937
    %v1939 = vpop.f32.mrb[0].mxu0
    %v1940 = vadd.f32 0.0, %v1939
    %v1941 = vpop.f32.mrb[0].mxu0
    %v1942 = vpop.f32.mrb[0].mxu0
    %1943 = vdwg.mxu0
    %1944 = vmatprep.subr.bf16.mxu0 %v375
    %1945 = vmatpush1.bf16.msra.mxu0 %v374
    %1946 = vmatprep.subr.bf16.mxu0 %v377
    %1947 = vmatpush1.bf16.msra.mxu0 %v376
    %1948 = vmatprep.subr.bf16.mxu0 0
    %1949 = vmatpush1.bf16.msra.mxu0 0
    %1950 = vmatprep.subr.bf16.mxu0 0
    %1951 = vmatpush1.bf16.msra.mxu0 0
    %1952 = vmatprep.subr.bf16.mxu0 0
    %1953 = vmatpush1.bf16.msra.mxu0 0
    %1954 = vmatprep.subr.bf16.mxu0 0
    %1955 = vmatpush1.bf16.msra.mxu0 0
    %1956 = vmatprep.subr.bf16.mxu0 0
    %1957 = vmatpush1.bf16.msra.mxu0 0
    %1958 = vmatprep.subr.bf16.mxu0 0
    %1959 = vmatpush1.bf16.msra.mxu0 0
    %1960 = vmatprep.subr.bf16.mxu0 0
    %1961 = vmatpush1.bf16.msra.mxu0 0
    %1962 = vmatprep.subr.bf16.mxu0 0
    %1963 = vmatpush1.bf16.msra.mxu0 0
    %1964 = vmatprep.subr.bf16.mxu0 0
    %1965 = vmatpush1.bf16.msra.mxu0 0
    %1966 = vmatprep.subr.bf16.mxu0 0
    %1967 = vmatpush1.bf16.msra.mxu0 0
    %1968 = vmatprep.subr.bf16.mxu0 0
    %1969 = vmatpush1.bf16.msra.mxu0 0
    %1970 = vmatprep.subr.bf16.mxu0 0
    %1971 = vmatpush1.bf16.msra.mxu0 0
    %1972 = vmatprep.subr.bf16.mxu0 0
    %1973 = vmatpush1.bf16.msra.mxu0 0
    %1974 = vmatprep.subr.bf16.mxu0 0
    %1975 = vmatpush1.bf16.msra.mxu0 0
    %1976 = vmatprep.mubr.bf16.mxu0 0
    %1977 = vmatmul.mubr.bf16.gmra.mrb[0].mxu0 %v1800
    %v1978 = vpop.f32.mrb[0].mxu0
    %v1979 = vadd.f32 0.0, %v1978
    %v1980 = vpop.f32.mrb[0].mxu0
    %v1981 = vadd.f32 0.0, %v1980
    %v1982 = vpop.f32.mrb[0].mxu0
    %v1983 = vpop.f32.mrb[0].mxu0
    %1984 = vdwg.mxu0
    %v1986 = vrot.slane %v1897, 1
    %v1988 = vadd.f32 %v133, %v1986
    %v1990 = vrot.slane %v1979, 1
    %v1992 = vadd.f32 %v1988, %v1990
    %v1993 = vmul.f32 %v1992, 0.5
    %v1994 = vtanh.pop %v1993
    %v1995 = vmul.f32 %v1994, 0.5
    %v1996 = vadd.f32 %v1995, 0.5
    %v1998 = vrot.slane %v1899, 1
    %v2000 = vadd.f32 %v135, %v1998
    %v2002 = vrot.slane %v1981, 1
    %v2004 = vadd.f32 %v2000, %v2002
    %v2005 = vmul.f32 %v2004, 0.5
    %v2006 = vtanh.pop %v2005
    %v2007 = vmul.f32 %v2006, 0.5
    %v2008 = vadd.f32 %v2007, 0.5
    %v2010 = vrot.slane %v1938, 1
    %v2012 = vadd.f32 %v210, %v2010
    %v2013 = vtanh.pop %v2012
    %v2014 = vmul.f32 %v2013, %v1996
    %v2016 = vrot.slane %v1795, 7
    %v2018 = vmul.f32 %v2008, %v2016
    %v2019 = vadd.f32 %v2014, %v2018
    %v2020 = vpack.c.bf16 %v2019, %v2019
    %v2022 = vshrl.u32 %v2020, 16
    %v2024 = vrot.slane %v2022, 3
    %v2026 = vsel %vm276, %v2024, 0
    %2028 = vmatprep.subr.bf16.mxu0 0
    %2029 = vmatpush1.bf16.msra.mxu0 %v449
    %2030 = vmatprep.subr.bf16.mxu0 0
    %2031 = vmatpush1.bf16.msra.mxu0 %v450
    %2032 = vmatprep.subr.bf16.mxu0 0
    %2033 = vmatpush1.bf16.msra.mxu0 0
    %2034 = vmatprep.subr.bf16.mxu0 0
    %2035 = vmatpush1.bf16.msra.mxu0 0
    %2036 = vmatprep.subr.bf16.mxu0 0
    %2037 = vmatpush1.bf16.msra.mxu0 0
    %2038 = vmatprep.subr.bf16.mxu0 0
    %2039 = vmatpush1.bf16.msra.mxu0 0
    %2040 = vmatprep.subr.bf16.mxu0 0
    %2041 = vmatpush1.bf16.msra.mxu0 0
    %2042 = vmatprep.subr.bf16.mxu0 0
    %2043 = vmatpush1.bf16.msra.mxu0 0
    %2044 = vmatprep.subr.bf16.mxu0 0
    %2045 = vmatpush1.bf16.msra.mxu0 0
    %2046 = vmatprep.subr.bf16.mxu0 0
    %2047 = vmatpush1.bf16.msra.mxu0 0
    %2048 = vmatprep.subr.bf16.mxu0 0
    %2049 = vmatpush1.bf16.msra.mxu0 0
    %2050 = vmatprep.subr.bf16.mxu0 0
    %2051 = vmatpush1.bf16.msra.mxu0 0
    %2052 = vmatprep.subr.bf16.mxu0 0
    %2053 = vmatpush1.bf16.msra.mxu0 0
    %2054 = vmatprep.subr.bf16.mxu0 0
    %2055 = vmatpush1.bf16.msra.mxu0 0
    %2056 = vmatprep.subr.bf16.mxu0 0
    %2057 = vmatpush1.bf16.msra.mxu0 0
    %2058 = vmatprep.subr.bf16.mxu0 0
    %2059 = vmatpush1.bf16.msra.mxu0 0
    %2060 = vmatprep.mubr.bf16.mxu0 0
    %2061 = vmatmul.mubr.bf16.gmra.mrb[0].mxu0 %v2026
    %v2062 = vpop.f32.mrb[0].mxu0
    %v2063 = vadd.f32 0.0, %v2062
    %v2064 = vpop.f32.mrb[0].mxu0
    %v2065 = vpop.f32.mrb[0].mxu0
    %v2066 = vpop.f32.mrb[0].mxu0
    %2067 = vdwg.mxu0
    %v2069 = vrot.slane %v1940, 1
    %v2071 = vadd.f32 %v212, %v2069
    %v2073 = vrot.slane %v2063, 1
    %v2075 = vadd.f32 %v2071, %v2073
    %v2076 = vmul.f32 %v2075, 0.5
    %v2077 = vtanh.pop %v2076
    %v2078 = vmul.f32 %v2077, 0.5
    %v2079 = vadd.f32 %v2078, 0.5
    %v2080 = vtanh.pop %v2019
    %v2081 = vmul.f32 %v2079, %v2080
    %v2082 = vpack.c.bf16 %v2081, %v2081
    %v2084 = vshrl.u32 %v2082, 16
    %v2086 = vrot.slane %v2084, 3
    %v2088 = vsel %vm276, %v2086, 0
    %2090 = vmatprep.subr.bf16.mxu0 %v261
    %2091 = vmatpush1.bf16.msra.mxu0 %v260
    %2092 = vmatprep.subr.bf16.mxu0 %v265
    %2093 = vmatpush1.bf16.msra.mxu0 %v264
    %2094 = vmatprep.subr.bf16.mxu0 0
    %2095 = vmatpush1.bf16.msra.mxu0 0
    %2096 = vmatprep.subr.bf16.mxu0 0
    %2097 = vmatpush1.bf16.msra.mxu0 0
    %2098 = vmatprep.subr.bf16.mxu0 0
    %2099 = vmatpush1.bf16.msra.mxu0 0
    %2100 = vmatprep.subr.bf16.mxu0 0
    %2101 = vmatpush1.bf16.msra.mxu0 0
    %2102 = vmatprep.subr.bf16.mxu0 0
    %2103 = vmatpush1.bf16.msra.mxu0 0
    %2104 = vmatprep.subr.bf16.mxu0 0
    %2105 = vmatpush1.bf16.msra.mxu0 0
    %2106 = vmatprep.subr.bf16.mxu0 0
    %2107 = vmatpush1.bf16.msra.mxu0 0
    %2108 = vmatprep.subr.bf16.mxu0 0
    %2109 = vmatpush1.bf16.msra.mxu0 0
    %2110 = vmatprep.subr.bf16.mxu0 0
    %2111 = vmatpush1.bf16.msra.mxu0 0
    %2112 = vmatprep.subr.bf16.mxu0 0
    %2113 = vmatpush1.bf16.msra.mxu0 0
    %2114 = vmatprep.subr.bf16.mxu0 0
    %2115 = vmatpush1.bf16.msra.mxu0 0
    %2116 = vmatprep.subr.bf16.mxu0 0
    %2117 = vmatpush1.bf16.msra.mxu0 0
    %2118 = vmatprep.subr.bf16.mxu0 0
    %2119 = vmatpush1.bf16.msra.mxu0 0
    %2120 = vmatprep.subr.bf16.mxu0 0
    %2121 = vmatpush1.bf16.msra.mxu0 0
    %2122 = vmatprep.mubr.bf16.mxu0 0
    %2123 = vmatmul.mubr.bf16.gmra.mrb[0].mxu0 %v2088
    %v2124 = vpop.f32.mrb[0].mxu0
    %v2125 = vadd.f32 0.0, %v2124
    %v2126 = vpop.f32.mrb[0].mxu0
    %v2127 = vadd.f32 0.0, %v2126
    %v2128 = vpop.f32.mrb[0].mxu0
    %v2129 = vpop.f32.mrb[0].mxu0
    %2130 = vdwg.mxu0
    %2131 = vmatprep.subr.bf16.mxu0 %v263
    %2132 = vmatpush1.bf16.msra.mxu0 %v262
    %2133 = vmatprep.subr.bf16.mxu0 %v267
    %2134 = vmatpush1.bf16.msra.mxu0 %v266
    %2135 = vmatprep.subr.bf16.mxu0 0
    %2136 = vmatpush1.bf16.msra.mxu0 0
    %2137 = vmatprep.subr.bf16.mxu0 0
    %2138 = vmatpush1.bf16.msra.mxu0 0
    %2139 = vmatprep.subr.bf16.mxu0 0
    %2140 = vmatpush1.bf16.msra.mxu0 0
    %2141 = vmatprep.subr.bf16.mxu0 0
    %2142 = vmatpush1.bf16.msra.mxu0 0
    %2143 = vmatprep.subr.bf16.mxu0 0
    %2144 = vmatpush1.bf16.msra.mxu0 0
    %2145 = vmatprep.subr.bf16.mxu0 0
    %2146 = vmatpush1.bf16.msra.mxu0 0
    %2147 = vmatprep.subr.bf16.mxu0 0
    %2148 = vmatpush1.bf16.msra.mxu0 0
    %2149 = vmatprep.subr.bf16.mxu0 0
    %2150 = vmatpush1.bf16.msra.mxu0 0
    %2151 = vmatprep.subr.bf16.mxu0 0
    %2152 = vmatpush1.bf16.msra.mxu0 0
    %2153 = vmatprep.subr.bf16.mxu0 0
    %2154 = vmatpush1.bf16.msra.mxu0 0
    %2155 = vmatprep.subr.bf16.mxu0 0
    %2156 = vmatpush1.bf16.msra.mxu0 0
    %2157 = vmatprep.subr.bf16.mxu0 0
    %2158 = vmatpush1.bf16.msra.mxu0 0
    %2159 = vmatprep.subr.bf16.mxu0 0
    %2160 = vmatpush1.bf16.msra.mxu0 0
    %2161 = vmatprep.subr.bf16.mxu0 0
    %2162 = vmatpush1.bf16.msra.mxu0 0
    %2163 = vmatprep.mubr.bf16.mxu0 0
    %2164 = vmatmul.mubr.bf16.gmra.mrb[0].mxu0 %v2088
    %v2165 = vpop.f32.mrb[0].mxu0
    %v2166 = vadd.f32 0.0, %v2165
    %v2167 = vpop.f32.mrb[0].mxu0
    %v2168 = vadd.f32 0.0, %v2167
    %v2169 = vpop.f32.mrb[0].mxu0
    %v2170 = vpop.f32.mrb[0].mxu0
    %2171 = vdwg.mxu0
    %2172 = vmatprep.subr.bf16.mxu0 %v375
    %2173 = vmatpush1.bf16.msra.mxu0 %v374
    %2174 = vmatprep.subr.bf16.mxu0 %v377
    %2175 = vmatpush1.bf16.msra.mxu0 %v376
    %2176 = vmatprep.subr.bf16.mxu0 0
    %2177 = vmatpush1.bf16.msra.mxu0 0
    %2178 = vmatprep.subr.bf16.mxu0 0
    %2179 = vmatpush1.bf16.msra.mxu0 0
    %2180 = vmatprep.subr.bf16.mxu0 0
    %2181 = vmatpush1.bf16.msra.mxu0 0
    %2182 = vmatprep.subr.bf16.mxu0 0
    %2183 = vmatpush1.bf16.msra.mxu0 0
    %2184 = vmatprep.subr.bf16.mxu0 0
    %2185 = vmatpush1.bf16.msra.mxu0 0
    %2186 = vmatprep.subr.bf16.mxu0 0
    %2187 = vmatpush1.bf16.msra.mxu0 0
    %2188 = vmatprep.subr.bf16.mxu0 0
    %2189 = vmatpush1.bf16.msra.mxu0 0
    %2190 = vmatprep.subr.bf16.mxu0 0
    %2191 = vmatpush1.bf16.msra.mxu0 0
    %2192 = vmatprep.subr.bf16.mxu0 0
    %2193 = vmatpush1.bf16.msra.mxu0 0
    %2194 = vmatprep.subr.bf16.mxu0 0
    %2195 = vmatpush1.bf16.msra.mxu0 0
    %2196 = vmatprep.subr.bf16.mxu0 0
    %2197 = vmatpush1.bf16.msra.mxu0 0
    %2198 = vmatprep.subr.bf16.mxu0 0
    %2199 = vmatpush1.bf16.msra.mxu0 0
    %2200 = vmatprep.subr.bf16.mxu0 0
    %2201 = vmatpush1.bf16.msra.mxu0 0
    %2202 = vmatprep.subr.bf16.mxu0 0
    %2203 = vmatpush1.bf16.msra.mxu0 0
    %2204 = vmatprep.mubr.bf16.mxu0 0
    %2205 = vmatmul.mubr.bf16.gmra.mrb[0].mxu0 %v2026
    %v2206 = vpop.f32.mrb[0].mxu0
    %v2207 = vadd.f32 0.0, %v2206
    %v2208 = vpop.f32.mrb[0].mxu0
    %v2209 = vadd.f32 0.0, %v2208
    %v2210 = vpop.f32.mrb[0].mxu0
    %v2211 = vpop.f32.mrb[0].mxu0
    %2212 = vdwg.mxu0
    %v2213 = vadd.f32 %v139, %v2125
    %v2214 = vadd.f32 %v2213, %v2207
    %v2215 = vmul.f32 %v2214, 0.5
    %v2216 = vtanh.pop %v2215
    %v2217 = vmul.f32 %v2216, 0.5
    %v2218 = vadd.f32 %v2217, 0.5
    %v2219 = vadd.f32 %v141, %v2127
    %v2220 = vadd.f32 %v2219, %v2209
    %v2221 = vmul.f32 %v2220, 0.5
    %v2222 = vtanh.pop %v2221
    %v2223 = vmul.f32 %v2222, 0.5
    %v2224 = vadd.f32 %v2223, 0.5
    %v2225 = vadd.f32 %v216, %v2166
    %v2226 = vtanh.pop %v2225
    %v2227 = vmul.f32 %v2226, %v2218
    %v2229 = vrot.slane %v2019, 7
    %v2231 = vmul.f32 %v2224, %v2229
    %v2232 = vadd.f32 %v2227, %v2231
    %v2233 = vpack.c.bf16 %v2232, %v2232
    %v2235 = vsel %vm276, %v2233, 0
    %2237 = vmatprep.subr.bf16.mxu0 0
    %2238 = vmatpush1.bf16.msra.mxu0 %v449
    %2239 = vmatprep.subr.bf16.mxu0 0
    %2240 = vmatpush1.bf16.msra.mxu0 %v450
    %2241 = vmatprep.subr.bf16.mxu0 0
    %2242 = vmatpush1.bf16.msra.mxu0 0
    %2243 = vmatprep.subr.bf16.mxu0 0
    %2244 = vmatpush1.bf16.msra.mxu0 0
    %2245 = vmatprep.subr.bf16.mxu0 0
    %2246 = vmatpush1.bf16.msra.mxu0 0
    %2247 = vmatprep.subr.bf16.mxu0 0
    %2248 = vmatpush1.bf16.msra.mxu0 0
    %2249 = vmatprep.subr.bf16.mxu0 0
    %2250 = vmatpush1.bf16.msra.mxu0 0
    %2251 = vmatprep.subr.bf16.mxu0 0
    %2252 = vmatpush1.bf16.msra.mxu0 0
    %2253 = vmatprep.subr.bf16.mxu0 0
    %2254 = vmatpush1.bf16.msra.mxu0 0
    %2255 = vmatprep.subr.bf16.mxu0 0
    %2256 = vmatpush1.bf16.msra.mxu0 0
    %2257 = vmatprep.subr.bf16.mxu0 0
    %2258 = vmatpush1.bf16.msra.mxu0 0
    %2259 = vmatprep.subr.bf16.mxu0 0
    %2260 = vmatpush1.bf16.msra.mxu0 0
    %2261 = vmatprep.subr.bf16.mxu0 0
    %2262 = vmatpush1.bf16.msra.mxu0 0
    %2263 = vmatprep.subr.bf16.mxu0 0
    %2264 = vmatpush1.bf16.msra.mxu0 0
    %2265 = vmatprep.subr.bf16.mxu0 0
    %2266 = vmatpush1.bf16.msra.mxu0 0
    %2267 = vmatprep.subr.bf16.mxu0 0
    %2268 = vmatpush1.bf16.msra.mxu0 0
    %2269 = vmatprep.mubr.bf16.mxu0 0
    %2270 = vmatmul.mubr.bf16.gmra.mrb[0].mxu0 %v2235
    %v2271 = vpop.f32.mrb[0].mxu0
    %v2272 = vadd.f32 0.0, %v2271
    %v2273 = vpop.f32.mrb[0].mxu0
    %v2274 = vpop.f32.mrb[0].mxu0
    %v2275 = vpop.f32.mrb[0].mxu0
    %2276 = vdwg.mxu0
    %v2277 = vadd.f32 %v218, %v2168
    %v2278 = vadd.f32 %v2277, %v2272
    %v2279 = vmul.f32 %v2278, 0.5
    %v2280 = vtanh.pop %v2279
    %v2281 = vmul.f32 %v2280, 0.5
    %v2282 = vadd.f32 %v2281, 0.5
    %v2283 = vtanh.pop %v2232
    %v2284 = vmul.f32 %v2282, %v2283
    %v2285 = vpack.c.bf16 %v2284, %v2284
    %v2287 = vsel %vm276, %v2285, 0
    %2289 = vmatprep.subr.bf16.mxu0 %v261
    %2290 = vmatpush1.bf16.msra.mxu0 %v260
    %2291 = vmatprep.subr.bf16.mxu0 %v265
    %2292 = vmatpush1.bf16.msra.mxu0 %v264
    %2293 = vmatprep.subr.bf16.mxu0 0
    %2294 = vmatpush1.bf16.msra.mxu0 0
    %2295 = vmatprep.subr.bf16.mxu0 0
    %2296 = vmatpush1.bf16.msra.mxu0 0
    %2297 = vmatprep.subr.bf16.mxu0 0
    %2298 = vmatpush1.bf16.msra.mxu0 0
    %2299 = vmatprep.subr.bf16.mxu0 0
    %2300 = vmatpush1.bf16.msra.mxu0 0
    %2301 = vmatprep.subr.bf16.mxu0 0
    %2302 = vmatpush1.bf16.msra.mxu0 0
    %2303 = vmatprep.subr.bf16.mxu0 0
    %2304 = vmatpush1.bf16.msra.mxu0 0
    %2305 = vmatprep.subr.bf16.mxu0 0
    %2306 = vmatpush1.bf16.msra.mxu0 0
    %2307 = vmatprep.subr.bf16.mxu0 0
    %2308 = vmatpush1.bf16.msra.mxu0 0
    %2309 = vmatprep.subr.bf16.mxu0 0
    %2310 = vmatpush1.bf16.msra.mxu0 0
    %2311 = vmatprep.subr.bf16.mxu0 0
    %2312 = vmatpush1.bf16.msra.mxu0 0
    %2313 = vmatprep.subr.bf16.mxu0 0
    %2314 = vmatpush1.bf16.msra.mxu0 0
    %2315 = vmatprep.subr.bf16.mxu0 0
    %2316 = vmatpush1.bf16.msra.mxu0 0
    %2317 = vmatprep.subr.bf16.mxu0 0
    %2318 = vmatpush1.bf16.msra.mxu0 0
    %2319 = vmatprep.subr.bf16.mxu0 0
    %2320 = vmatpush1.bf16.msra.mxu0 0
    %2321 = vmatprep.mubr.bf16.mxu0 0
    %2322 = vmatmul.mubr.bf16.gmra.mrb[0].mxu0 %v2287
    %v2323 = vpop.f32.mrb[0].mxu0
    %v2324 = vadd.f32 0.0, %v2323
    %v2325 = vpop.f32.mrb[0].mxu0
    %v2326 = vadd.f32 0.0, %v2325
    %v2327 = vpop.f32.mrb[0].mxu0
    %v2328 = vpop.f32.mrb[0].mxu0
    %2329 = vdwg.mxu0
    %2330 = vmatprep.subr.bf16.mxu0 %v263
    %2331 = vmatpush1.bf16.msra.mxu0 %v262
    %2332 = vmatprep.subr.bf16.mxu0 %v267
    %2333 = vmatpush1.bf16.msra.mxu0 %v266
    %2334 = vmatprep.subr.bf16.mxu0 0
    %2335 = vmatpush1.bf16.msra.mxu0 0
    %2336 = vmatprep.subr.bf16.mxu0 0
    %2337 = vmatpush1.bf16.msra.mxu0 0
    %2338 = vmatprep.subr.bf16.mxu0 0
    %2339 = vmatpush1.bf16.msra.mxu0 0
    %2340 = vmatprep.subr.bf16.mxu0 0
    %2341 = vmatpush1.bf16.msra.mxu0 0
    %2342 = vmatprep.subr.bf16.mxu0 0
    %2343 = vmatpush1.bf16.msra.mxu0 0
    %2344 = vmatprep.subr.bf16.mxu0 0
    %2345 = vmatpush1.bf16.msra.mxu0 0
    %2346 = vmatprep.subr.bf16.mxu0 0
    %2347 = vmatpush1.bf16.msra.mxu0 0
    %2348 = vmatprep.subr.bf16.mxu0 0
    %2349 = vmatpush1.bf16.msra.mxu0 0
    %2350 = vmatprep.subr.bf16.mxu0 0
    %2351 = vmatpush1.bf16.msra.mxu0 0
    %2352 = vmatprep.subr.bf16.mxu0 0
    %2353 = vmatpush1.bf16.msra.mxu0 0
    %2354 = vmatprep.subr.bf16.mxu0 0
    %2355 = vmatpush1.bf16.msra.mxu0 0
    %2356 = vmatprep.subr.bf16.mxu0 0
    %2357 = vmatpush1.bf16.msra.mxu0 0
    %2358 = vmatprep.subr.bf16.mxu0 0
    %2359 = vmatpush1.bf16.msra.mxu0 0
    %2360 = vmatprep.subr.bf16.mxu0 0
    %2361 = vmatpush1.bf16.msra.mxu0 0
    %2362 = vmatprep.mubr.bf16.mxu0 0
    %2363 = vmatmul.mubr.bf16.gmra.mrb[0].mxu0 %v2287
    %v2364 = vpop.f32.mrb[0].mxu0
    %v2365 = vadd.f32 0.0, %v2364
    %v2366 = vpop.f32.mrb[0].mxu0
    %v2367 = vadd.f32 0.0, %v2366
    %v2368 = vpop.f32.mrb[0].mxu0
    %v2369 = vpop.f32.mrb[0].mxu0
    %2370 = vdwg.mxu0
    %2371 = vmatprep.subr.bf16.mxu0 %v375
    %2372 = vmatpush1.bf16.msra.mxu0 %v374
    %2373 = vmatprep.subr.bf16.mxu0 %v377
    %2374 = vmatpush1.bf16.msra.mxu0 %v376
    %2375 = vmatprep.subr.bf16.mxu0 0
    %2376 = vmatpush1.bf16.msra.mxu0 0
    %2377 = vmatprep.subr.bf16.mxu0 0
    %2378 = vmatpush1.bf16.msra.mxu0 0
    %2379 = vmatprep.subr.bf16.mxu0 0
    %2380 = vmatpush1.bf16.msra.mxu0 0
    %2381 = vmatprep.subr.bf16.mxu0 0
    %2382 = vmatpush1.bf16.msra.mxu0 0
    %2383 = vmatprep.subr.bf16.mxu0 0
    %2384 = vmatpush1.bf16.msra.mxu0 0
    %2385 = vmatprep.subr.bf16.mxu0 0
    %2386 = vmatpush1.bf16.msra.mxu0 0
    %2387 = vmatprep.subr.bf16.mxu0 0
    %2388 = vmatpush1.bf16.msra.mxu0 0
    %2389 = vmatprep.subr.bf16.mxu0 0
    %2390 = vmatpush1.bf16.msra.mxu0 0
    %2391 = vmatprep.subr.bf16.mxu0 0
    %2392 = vmatpush1.bf16.msra.mxu0 0
    %2393 = vmatprep.subr.bf16.mxu0 0
    %2394 = vmatpush1.bf16.msra.mxu0 0
    %2395 = vmatprep.subr.bf16.mxu0 0
    %2396 = vmatpush1.bf16.msra.mxu0 0
    %2397 = vmatprep.subr.bf16.mxu0 0
    %2398 = vmatpush1.bf16.msra.mxu0 0
    %2399 = vmatprep.subr.bf16.mxu0 0
    %2400 = vmatpush1.bf16.msra.mxu0 0
    %2401 = vmatprep.subr.bf16.mxu0 0
    %2402 = vmatpush1.bf16.msra.mxu0 0
    %2403 = vmatprep.mubr.bf16.mxu0 0
    %2404 = vmatmul.mubr.bf16.gmra.mrb[0].mxu0 %v2235
    %v2405 = vpop.f32.mrb[0].mxu0
    %v2406 = vadd.f32 0.0, %v2405
    %v2407 = vpop.f32.mrb[0].mxu0
    %v2408 = vadd.f32 0.0, %v2407
    %v2409 = vpop.f32.mrb[0].mxu0
    %v2410 = vpop.f32.mrb[0].mxu0
    %2411 = vdwg.mxu0
    %v2413 = vrot.slane %v2324, 7
    %v2415 = vadd.f32 %v139, %v2413
    %v2417 = vrot.slane %v2406, 7
    %v2419 = vadd.f32 %v2415, %v2417
    %v2420 = vmul.f32 %v2419, 0.5
    %v2421 = vtanh.pop %v2420
    %v2422 = vmul.f32 %v2421, 0.5
    %v2423 = vadd.f32 %v2422, 0.5
    %v2425 = vrot.slane %v2326, 7
    %v2427 = vadd.f32 %v141, %v2425
    %v2429 = vrot.slane %v2408, 7
    %v2431 = vadd.f32 %v2427, %v2429
    %v2432 = vmul.f32 %v2431, 0.5
    %v2433 = vtanh.pop %v2432
    %v2434 = vmul.f32 %v2433, 0.5
    %v2435 = vadd.f32 %v2434, 0.5
    %v2437 = vrot.slane %v2365, 7
    %v2439 = vadd.f32 %v216, %v2437
    %v2440 = vtanh.pop %v2439
    %v2441 = vmul.f32 %v2440, %v2423
    %v2443 = vrot.slane %v2232, 7
    %v2445 = vmul.f32 %v2435, %v2443
    %v2446 = vadd.f32 %v2441, %v2445
    %v2447 = vpack.c.bf16 %v2446, %v2446
    %v2449 = vshrl.u32 %v2447, 16
    %v2452 = vsel %vm276, %v2449, 0
    %2454 = vmatprep.subr.bf16.mxu0 0
    %2455 = vmatpush1.bf16.msra.mxu0 %v449
    %2456 = vmatprep.subr.bf16.mxu0 0
    %2457 = vmatpush1.bf16.msra.mxu0 %v450
    %2458 = vmatprep.subr.bf16.mxu0 0
    %2459 = vmatpush1.bf16.msra.mxu0 0
    %2460 = vmatprep.subr.bf16.mxu0 0
    %2461 = vmatpush1.bf16.msra.mxu0 0
    %2462 = vmatprep.subr.bf16.mxu0 0
    %2463 = vmatpush1.bf16.msra.mxu0 0
    %2464 = vmatprep.subr.bf16.mxu0 0
    %2465 = vmatpush1.bf16.msra.mxu0 0
    %2466 = vmatprep.subr.bf16.mxu0 0
    %2467 = vmatpush1.bf16.msra.mxu0 0
    %2468 = vmatprep.subr.bf16.mxu0 0
    %2469 = vmatpush1.bf16.msra.mxu0 0
    %2470 = vmatprep.subr.bf16.mxu0 0
    %2471 = vmatpush1.bf16.msra.mxu0 0
    %2472 = vmatprep.subr.bf16.mxu0 0
    %2473 = vmatpush1.bf16.msra.mxu0 0
    %2474 = vmatprep.subr.bf16.mxu0 0
    %2475 = vmatpush1.bf16.msra.mxu0 0
    %2476 = vmatprep.subr.bf16.mxu0 0
    %2477 = vmatpush1.bf16.msra.mxu0 0
    %2478 = vmatprep.subr.bf16.mxu0 0
    %2479 = vmatpush1.bf16.msra.mxu0 0
    %2480 = vmatprep.subr.bf16.mxu0 0
    %2481 = vmatpush1.bf16.msra.mxu0 0
    %2482 = vmatprep.subr.bf16.mxu0 0
    %2483 = vmatpush1.bf16.msra.mxu0 0
    %2484 = vmatprep.subr.bf16.mxu0 0
    %2485 = vmatpush1.bf16.msra.mxu0 0
    %2486 = vmatprep.mubr.bf16.mxu0 0
    %2487 = vmatmul.mubr.bf16.gmra.mrb[0].mxu0 %v2452
    %v2488 = vpop.f32.mrb[0].mxu0
    %v2489 = vadd.f32 0.0, %v2488
    %v2490 = vpop.f32.mrb[0].mxu0
    %v2491 = vpop.f32.mrb[0].mxu0
    %v2492 = vpop.f32.mrb[0].mxu0
    %2493 = vdwg.mxu0
    %v2495 = vrot.slane %v2367, 7
    %v2497 = vadd.f32 %v218, %v2495
    %v2499 = vrot.slane %v2489, 7
    %v2501 = vadd.f32 %v2497, %v2499
    %v2502 = vmul.f32 %v2501, 0.5
    %v2503 = vtanh.pop %v2502
    %v2504 = vmul.f32 %v2503, 0.5
    %v2505 = vadd.f32 %v2504, 0.5
    %v2506 = vtanh.pop %v2446
    %v2507 = vmul.f32 %v2505, %v2506
    %v2508 = vpack.c.bf16 %v2507, %v2507
    %v2510 = vshrl.u32 %v2508, 16
    %v2513 = vsel %vm276, %v2510, 0
    %2515 = vmatprep.subr.bf16.mxu0 %v261
    %2516 = vmatpush1.bf16.msra.mxu0 %v260
    %2517 = vmatprep.subr.bf16.mxu0 %v265
    %2518 = vmatpush1.bf16.msra.mxu0 %v264
    %2519 = vmatprep.subr.bf16.mxu0 0
    %2520 = vmatpush1.bf16.msra.mxu0 0
    %2521 = vmatprep.subr.bf16.mxu0 0
    %2522 = vmatpush1.bf16.msra.mxu0 0
    %2523 = vmatprep.subr.bf16.mxu0 0
    %2524 = vmatpush1.bf16.msra.mxu0 0
    %2525 = vmatprep.subr.bf16.mxu0 0
    %2526 = vmatpush1.bf16.msra.mxu0 0
    %2527 = vmatprep.subr.bf16.mxu0 0
    %2528 = vmatpush1.bf16.msra.mxu0 0
    %2529 = vmatprep.subr.bf16.mxu0 0
    %2530 = vmatpush1.bf16.msra.mxu0 0
    %2531 = vmatprep.subr.bf16.mxu0 0
    %2532 = vmatpush1.bf16.msra.mxu0 0
    %2533 = vmatprep.subr.bf16.mxu0 0
    %2534 = vmatpush1.bf16.msra.mxu0 0
    %2535 = vmatprep.subr.bf16.mxu0 0
    %2536 = vmatpush1.bf16.msra.mxu0 0
    %2537 = vmatprep.subr.bf16.mxu0 0
    %2538 = vmatpush1.bf16.msra.mxu0 0
    %2539 = vmatprep.subr.bf16.mxu0 0
    %2540 = vmatpush1.bf16.msra.mxu0 0
    %2541 = vmatprep.subr.bf16.mxu0 0
    %2542 = vmatpush1.bf16.msra.mxu0 0
    %2543 = vmatprep.subr.bf16.mxu0 0
    %2544 = vmatpush1.bf16.msra.mxu0 0
    %2545 = vmatprep.subr.bf16.mxu0 0
    %2546 = vmatpush1.bf16.msra.mxu0 0
    %2547 = vmatprep.mubr.bf16.mxu0 0
    %2548 = vmatmul.mubr.bf16.gmra.mrb[0].mxu0 %v2513
    %v2549 = vpop.f32.mrb[0].mxu0
    %v2550 = vadd.f32 0.0, %v2549
    %v2551 = vpop.f32.mrb[0].mxu0
    %v2552 = vadd.f32 0.0, %v2551
    %v2553 = vpop.f32.mrb[0].mxu0
    %v2554 = vpop.f32.mrb[0].mxu0
    %2555 = vdwg.mxu0
    %2556 = vmatprep.subr.bf16.mxu0 %v263
    %2557 = vmatpush1.bf16.msra.mxu0 %v262
    %2558 = vmatprep.subr.bf16.mxu0 %v267
    %2559 = vmatpush1.bf16.msra.mxu0 %v266
    %2560 = vmatprep.subr.bf16.mxu0 0
    %2561 = vmatpush1.bf16.msra.mxu0 0
    %2562 = vmatprep.subr.bf16.mxu0 0
    %2563 = vmatpush1.bf16.msra.mxu0 0
    %2564 = vmatprep.subr.bf16.mxu0 0
    %2565 = vmatpush1.bf16.msra.mxu0 0
    %2566 = vmatprep.subr.bf16.mxu0 0
    %2567 = vmatpush1.bf16.msra.mxu0 0
    %2568 = vmatprep.subr.bf16.mxu0 0
    %2569 = vmatpush1.bf16.msra.mxu0 0
    %2570 = vmatprep.subr.bf16.mxu0 0
    %2571 = vmatpush1.bf16.msra.mxu0 0
    %2572 = vmatprep.subr.bf16.mxu0 0
    %2573 = vmatpush1.bf16.msra.mxu0 0
    %2574 = vmatprep.subr.bf16.mxu0 0
    %2575 = vmatpush1.bf16.msra.mxu0 0
    %2576 = vmatprep.subr.bf16.mxu0 0
    %2577 = vmatpush1.bf16.msra.mxu0 0
    %2578 = vmatprep.subr.bf16.mxu0 0
    %2579 = vmatpush1.bf16.msra.mxu0 0
    %2580 = vmatprep.subr.bf16.mxu0 0
    %2581 = vmatpush1.bf16.msra.mxu0 0
    %2582 = vmatprep.subr.bf16.mxu0 0
    %2583 = vmatpush1.bf16.msra.mxu0 0
    %2584 = vmatprep.subr.bf16.mxu0 0
    %2585 = vmatpush1.bf16.msra.mxu0 0
    %2586 = vmatprep.subr.bf16.mxu0 0
    %2587 = vmatpush1.bf16.msra.mxu0 0
    %2588 = vmatprep.mubr.bf16.mxu0 0
    %2589 = vmatmul.mubr.bf16.gmra.mrb[0].mxu0 %v2513
    %v2590 = vpop.f32.mrb[0].mxu0
    %v2591 = vadd.f32 0.0, %v2590
    %v2592 = vpop.f32.mrb[0].mxu0
    %v2593 = vadd.f32 0.0, %v2592
    %v2594 = vpop.f32.mrb[0].mxu0
    %v2595 = vpop.f32.mrb[0].mxu0
    %2596 = vdwg.mxu0
    %2597 = vmatprep.subr.bf16.mxu0 %v375
    %2598 = vmatpush1.bf16.msra.mxu0 %v374
    %2599 = vmatprep.subr.bf16.mxu0 %v377
    %2600 = vmatpush1.bf16.msra.mxu0 %v376
    %2601 = vmatprep.subr.bf16.mxu0 0
    %2602 = vmatpush1.bf16.msra.mxu0 0
    %2603 = vmatprep.subr.bf16.mxu0 0
    %2604 = vmatpush1.bf16.msra.mxu0 0
    %2605 = vmatprep.subr.bf16.mxu0 0
    %2606 = vmatpush1.bf16.msra.mxu0 0
    %2607 = vmatprep.subr.bf16.mxu0 0
    %2608 = vmatpush1.bf16.msra.mxu0 0
    %2609 = vmatprep.subr.bf16.mxu0 0
    %2610 = vmatpush1.bf16.msra.mxu0 0
    %2611 = vmatprep.subr.bf16.mxu0 0
    %2612 = vmatpush1.bf16.msra.mxu0 0
    %2613 = vmatprep.subr.bf16.mxu0 0
    %2614 = vmatpush1.bf16.msra.mxu0 0
    %2615 = vmatprep.subr.bf16.mxu0 0
    %2616 = vmatpush1.bf16.msra.mxu0 0
    %2617 = vmatprep.subr.bf16.mxu0 0
    %2618 = vmatpush1.bf16.msra.mxu0 0
    %2619 = vmatprep.subr.bf16.mxu0 0
    %2620 = vmatpush1.bf16.msra.mxu0 0
    %2621 = vmatprep.subr.bf16.mxu0 0
    %2622 = vmatpush1.bf16.msra.mxu0 0
    %2623 = vmatprep.subr.bf16.mxu0 0
    %2624 = vmatpush1.bf16.msra.mxu0 0
    %2625 = vmatprep.subr.bf16.mxu0 0
    %2626 = vmatpush1.bf16.msra.mxu0 0
    %2627 = vmatprep.subr.bf16.mxu0 0
    %2628 = vmatpush1.bf16.msra.mxu0 0
    %2629 = vmatprep.mubr.bf16.mxu0 0
    %2630 = vmatmul.mubr.bf16.gmra.mrb[0].mxu0 %v2452
    %v2631 = vpop.f32.mrb[0].mxu0
    %v2632 = vadd.f32 0.0, %v2631
    %v2633 = vpop.f32.mrb[0].mxu0
    %v2634 = vadd.f32 0.0, %v2633
    %v2635 = vpop.f32.mrb[0].mxu0
    %v2636 = vpop.f32.mrb[0].mxu0
    %2637 = vdwg.mxu0
    %v2639 = vrot.slane %v2550, 6
    %v2641 = vadd.f32 %v139, %v2639
    %v2643 = vrot.slane %v2632, 6
    %v2645 = vadd.f32 %v2641, %v2643
    %v2646 = vmul.f32 %v2645, 0.5
    %v2647 = vtanh.pop %v2646
    %v2648 = vmul.f32 %v2647, 0.5
    %v2649 = vadd.f32 %v2648, 0.5
    %v2651 = vrot.slane %v2552, 6
    %v2653 = vadd.f32 %v141, %v2651
    %v2655 = vrot.slane %v2634, 6
    %v2657 = vadd.f32 %v2653, %v2655
    %v2658 = vmul.f32 %v2657, 0.5
    %v2659 = vtanh.pop %v2658
    %v2660 = vmul.f32 %v2659, 0.5
    %v2661 = vadd.f32 %v2660, 0.5
    %v2663 = vrot.slane %v2591, 6
    %v2665 = vadd.f32 %v216, %v2663
    %v2666 = vtanh.pop %v2665
    %v2667 = vmul.f32 %v2666, %v2649
    %v2669 = vrot.slane %v2446, 7
    %v2671 = vmul.f32 %v2661, %v2669
    %v2672 = vadd.f32 %v2667, %v2671
    %v2673 = vpack.c.bf16 %v2672, %v2672
    %v2675 = vrot.slane %v2673, 1
    %v2677 = vsel %vm276, %v2675, 0
    %2679 = vmatprep.subr.bf16.mxu0 0
    %2680 = vmatpush1.bf16.msra.mxu0 %v449
    %2681 = vmatprep.subr.bf16.mxu0 0
    %2682 = vmatpush1.bf16.msra.mxu0 %v450
    %2683 = vmatprep.subr.bf16.mxu0 0
    %2684 = vmatpush1.bf16.msra.mxu0 0
    %2685 = vmatprep.subr.bf16.mxu0 0
    %2686 = vmatpush1.bf16.msra.mxu0 0
    %2687 = vmatprep.subr.bf16.mxu0 0
    %2688 = vmatpush1.bf16.msra.mxu0 0
    %2689 = vmatprep.subr.bf16.mxu0 0
    %2690 = vmatpush1.bf16.msra.mxu0 0
    %2691 = vmatprep.subr.bf16.mxu0 0
    %2692 = vmatpush1.bf16.msra.mxu0 0
    %2693 = vmatprep.subr.bf16.mxu0 0
    %2694 = vmatpush1.bf16.msra.mxu0 0
    %2695 = vmatprep.subr.bf16.mxu0 0
    %2696 = vmatpush1.bf16.msra.mxu0 0
    %2697 = vmatprep.subr.bf16.mxu0 0
    %2698 = vmatpush1.bf16.msra.mxu0 0
    %2699 = vmatprep.subr.bf16.mxu0 0
    %2700 = vmatpush1.bf16.msra.mxu0 0
    %2701 = vmatprep.subr.bf16.mxu0 0
    %2702 = vmatpush1.bf16.msra.mxu0 0
    %2703 = vmatprep.subr.bf16.mxu0 0
    %2704 = vmatpush1.bf16.msra.mxu0 0
    %2705 = vmatprep.subr.bf16.mxu0 0
    %2706 = vmatpush1.bf16.msra.mxu0 0
    %2707 = vmatprep.subr.bf16.mxu0 0
    %2708 = vmatpush1.bf16.msra.mxu0 0
    %2709 = vmatprep.subr.bf16.mxu0 0
    %2710 = vmatpush1.bf16.msra.mxu0 0
    %2711 = vmatprep.mubr.bf16.mxu0 0
    %2712 = vmatmul.mubr.bf16.gmra.mrb[0].mxu0 %v2677
    %v2713 = vpop.f32.mrb[0].mxu0
    %v2714 = vadd.f32 0.0, %v2713
    %v2715 = vpop.f32.mrb[0].mxu0
    %v2716 = vpop.f32.mrb[0].mxu0
    %v2717 = vpop.f32.mrb[0].mxu0
    %2718 = vdwg.mxu0
    %v2720 = vrot.slane %v2593, 6
    %v2722 = vadd.f32 %v218, %v2720
    %v2724 = vrot.slane %v2714, 6
    %v2726 = vadd.f32 %v2722, %v2724
    %v2727 = vmul.f32 %v2726, 0.5
    %v2728 = vtanh.pop %v2727
    %v2729 = vmul.f32 %v2728, 0.5
    %v2730 = vadd.f32 %v2729, 0.5
    %v2731 = vtanh.pop %v2672
    %v2732 = vmul.f32 %v2730, %v2731
    %v2733 = vpack.c.bf16 %v2732, %v2732
    %v2735 = vrot.slane %v2733, 1
    %v2737 = vsel %vm276, %v2735, 0
    %2739 = vmatprep.subr.bf16.mxu0 %v261
    %2740 = vmatpush1.bf16.msra.mxu0 %v260
    %2741 = vmatprep.subr.bf16.mxu0 %v265
    %2742 = vmatpush1.bf16.msra.mxu0 %v264
    %2743 = vmatprep.subr.bf16.mxu0 0
    %2744 = vmatpush1.bf16.msra.mxu0 0
    %2745 = vmatprep.subr.bf16.mxu0 0
    %2746 = vmatpush1.bf16.msra.mxu0 0
    %2747 = vmatprep.subr.bf16.mxu0 0
    %2748 = vmatpush1.bf16.msra.mxu0 0
    %2749 = vmatprep.subr.bf16.mxu0 0
    %2750 = vmatpush1.bf16.msra.mxu0 0
    %2751 = vmatprep.subr.bf16.mxu0 0
    %2752 = vmatpush1.bf16.msra.mxu0 0
    %2753 = vmatprep.subr.bf16.mxu0 0
    %2754 = vmatpush1.bf16.msra.mxu0 0
    %2755 = vmatprep.subr.bf16.mxu0 0
    %2756 = vmatpush1.bf16.msra.mxu0 0
    %2757 = vmatprep.subr.bf16.mxu0 0
    %2758 = vmatpush1.bf16.msra.mxu0 0
    %2759 = vmatprep.subr.bf16.mxu0 0
    %2760 = vmatpush1.bf16.msra.mxu0 0
    %2761 = vmatprep.subr.bf16.mxu0 0
    %2762 = vmatpush1.bf16.msra.mxu0 0
    %2763 = vmatprep.subr.bf16.mxu0 0
    %2764 = vmatpush1.bf16.msra.mxu0 0
    %2765 = vmatprep.subr.bf16.mxu0 0
    %2766 = vmatpush1.bf16.msra.mxu0 0
    %2767 = vmatprep.subr.bf16.mxu0 0
    %2768 = vmatpush1.bf16.msra.mxu0 0
    %2769 = vmatprep.subr.bf16.mxu0 0
    %2770 = vmatpush1.bf16.msra.mxu0 0
    %2771 = vmatprep.mubr.bf16.mxu0 0
    %2772 = vmatmul.mubr.bf16.gmra.mrb[0].mxu0 %v2737
    %v2773 = vpop.f32.mrb[0].mxu0
    %v2774 = vadd.f32 0.0, %v2773
    %v2775 = vpop.f32.mrb[0].mxu0
    %v2776 = vadd.f32 0.0, %v2775
    %v2777 = vpop.f32.mrb[0].mxu0
    %v2778 = vpop.f32.mrb[0].mxu0
    %2779 = vdwg.mxu0
    %2780 = vmatprep.subr.bf16.mxu0 %v263
    %2781 = vmatpush1.bf16.msra.mxu0 %v262
    %2782 = vmatprep.subr.bf16.mxu0 %v267
    %2783 = vmatpush1.bf16.msra.mxu0 %v266
    %2784 = vmatprep.subr.bf16.mxu0 0
    %2785 = vmatpush1.bf16.msra.mxu0 0
    %2786 = vmatprep.subr.bf16.mxu0 0
    %2787 = vmatpush1.bf16.msra.mxu0 0
    %2788 = vmatprep.subr.bf16.mxu0 0
    %2789 = vmatpush1.bf16.msra.mxu0 0
    %2790 = vmatprep.subr.bf16.mxu0 0
    %2791 = vmatpush1.bf16.msra.mxu0 0
    %2792 = vmatprep.subr.bf16.mxu0 0
    %2793 = vmatpush1.bf16.msra.mxu0 0
    %2794 = vmatprep.subr.bf16.mxu0 0
    %2795 = vmatpush1.bf16.msra.mxu0 0
    %2796 = vmatprep.subr.bf16.mxu0 0
    %2797 = vmatpush1.bf16.msra.mxu0 0
    %2798 = vmatprep.subr.bf16.mxu0 0
    %2799 = vmatpush1.bf16.msra.mxu0 0
    %2800 = vmatprep.subr.bf16.mxu0 0
    %2801 = vmatpush1.bf16.msra.mxu0 0
    %2802 = vmatprep.subr.bf16.mxu0 0
    %2803 = vmatpush1.bf16.msra.mxu0 0
    %2804 = vmatprep.subr.bf16.mxu0 0
    %2805 = vmatpush1.bf16.msra.mxu0 0
    %2806 = vmatprep.subr.bf16.mxu0 0
    %2807 = vmatpush1.bf16.msra.mxu0 0
    %2808 = vmatprep.subr.bf16.mxu0 0
    %2809 = vmatpush1.bf16.msra.mxu0 0
    %2810 = vmatprep.subr.bf16.mxu0 0
    %2811 = vmatpush1.bf16.msra.mxu0 0
    %2812 = vmatprep.mubr.bf16.mxu0 0
    %2813 = vmatmul.mubr.bf16.gmra.mrb[0].mxu0 %v2737
    %v2814 = vpop.f32.mrb[0].mxu0
    %v2815 = vadd.f32 0.0, %v2814
    %v2816 = vpop.f32.mrb[0].mxu0
    %v2817 = vadd.f32 0.0, %v2816
    %v2818 = vpop.f32.mrb[0].mxu0
    %v2819 = vpop.f32.mrb[0].mxu0
    %2820 = vdwg.mxu0
    %2821 = vmatprep.subr.bf16.mxu0 %v375
    %2822 = vmatpush1.bf16.msra.mxu0 %v374
    %2823 = vmatprep.subr.bf16.mxu0 %v377
    %2824 = vmatpush1.bf16.msra.mxu0 %v376
    %2825 = vmatprep.subr.bf16.mxu0 0
    %2826 = vmatpush1.bf16.msra.mxu0 0
    %2827 = vmatprep.subr.bf16.mxu0 0
    %2828 = vmatpush1.bf16.msra.mxu0 0
    %2829 = vmatprep.subr.bf16.mxu0 0
    %2830 = vmatpush1.bf16.msra.mxu0 0
    %2831 = vmatprep.subr.bf16.mxu0 0
    %2832 = vmatpush1.bf16.msra.mxu0 0
    %2833 = vmatprep.subr.bf16.mxu0 0
    %2834 = vmatpush1.bf16.msra.mxu0 0
    %2835 = vmatprep.subr.bf16.mxu0 0
    %2836 = vmatpush1.bf16.msra.mxu0 0
    %2837 = vmatprep.subr.bf16.mxu0 0
    %2838 = vmatpush1.bf16.msra.mxu0 0
    %2839 = vmatprep.subr.bf16.mxu0 0
    %2840 = vmatpush1.bf16.msra.mxu0 0
    %2841 = vmatprep.subr.bf16.mxu0 0
    %2842 = vmatpush1.bf16.msra.mxu0 0
    %2843 = vmatprep.subr.bf16.mxu0 0
    %2844 = vmatpush1.bf16.msra.mxu0 0
    %2845 = vmatprep.subr.bf16.mxu0 0
    %2846 = vmatpush1.bf16.msra.mxu0 0
    %2847 = vmatprep.subr.bf16.mxu0 0
    %2848 = vmatpush1.bf16.msra.mxu0 0
    %2849 = vmatprep.subr.bf16.mxu0 0
    %2850 = vmatpush1.bf16.msra.mxu0 0
    %2851 = vmatprep.subr.bf16.mxu0 0
    %2852 = vmatpush1.bf16.msra.mxu0 0
    %2853 = vmatprep.mubr.bf16.mxu0 0
    %2854 = vmatmul.mubr.bf16.gmra.mrb[0].mxu0 %v2677
    %v2855 = vpop.f32.mrb[0].mxu0
    %v2856 = vadd.f32 0.0, %v2855
    %v2857 = vpop.f32.mrb[0].mxu0
    %v2858 = vadd.f32 0.0, %v2857
    %v2859 = vpop.f32.mrb[0].mxu0
    %v2860 = vpop.f32.mrb[0].mxu0
    %2861 = vdwg.mxu0
    %v2863 = vrot.slane %v2774, 5
    %v2865 = vadd.f32 %v139, %v2863
    %v2867 = vrot.slane %v2856, 5
    %v2869 = vadd.f32 %v2865, %v2867
    %v2870 = vmul.f32 %v2869, 0.5
    %v2871 = vtanh.pop %v2870
    %v2872 = vmul.f32 %v2871, 0.5
    %v2873 = vadd.f32 %v2872, 0.5
    %v2875 = vrot.slane %v2776, 5
    %v2877 = vadd.f32 %v141, %v2875
    %v2879 = vrot.slane %v2858, 5
    %v2881 = vadd.f32 %v2877, %v2879
    %v2882 = vmul.f32 %v2881, 0.5
    %v2883 = vtanh.pop %v2882
    %v2884 = vmul.f32 %v2883, 0.5
    %v2885 = vadd.f32 %v2884, 0.5
    %v2887 = vrot.slane %v2815, 5
    %v2889 = vadd.f32 %v216, %v2887
    %v2890 = vtanh.pop %v2889
    %v2891 = vmul.f32 %v2890, %v2873
    %v2893 = vrot.slane %v2672, 7
    %v2895 = vmul.f32 %v2885, %v2893
    %v2896 = vadd.f32 %v2891, %v2895
    %v2897 = vpack.c.bf16 %v2896, %v2896
    %v2899 = vshrl.u32 %v2897, 16
    %v2901 = vrot.slane %v2899, 1
    %v2903 = vsel %vm276, %v2901, 0
    %2905 = vmatprep.subr.bf16.mxu0 0
    %2906 = vmatpush1.bf16.msra.mxu0 %v449
    %2907 = vmatprep.subr.bf16.mxu0 0
    %2908 = vmatpush1.bf16.msra.mxu0 %v450
    %2909 = vmatprep.subr.bf16.mxu0 0
    %2910 = vmatpush1.bf16.msra.mxu0 0
    %2911 = vmatprep.subr.bf16.mxu0 0
    %2912 = vmatpush1.bf16.msra.mxu0 0
    %2913 = vmatprep.subr.bf16.mxu0 0
    %2914 = vmatpush1.bf16.msra.mxu0 0
    %2915 = vmatprep.subr.bf16.mxu0 0
    %2916 = vmatpush1.bf16.msra.mxu0 0
    %2917 = vmatprep.subr.bf16.mxu0 0
    %2918 = vmatpush1.bf16.msra.mxu0 0
    %2919 = vmatprep.subr.bf16.mxu0 0
    %2920 = vmatpush1.bf16.msra.mxu0 0
    %2921 = vmatprep.subr.bf16.mxu0 0
    %2922 = vmatpush1.bf16.msra.mxu0 0
    %2923 = vmatprep.subr.bf16.mxu0 0
    %2924 = vmatpush1.bf16.msra.mxu0 0
    %2925 = vmatprep.subr.bf16.mxu0 0
    %2926 = vmatpush1.bf16.msra.mxu0 0
    %2927 = vmatprep.subr.bf16.mxu0 0
    %2928 = vmatpush1.bf16.msra.mxu0 0
    %2929 = vmatprep.subr.bf16.mxu0 0
    %2930 = vmatpush1.bf16.msra.mxu0 0
    %2931 = vmatprep.subr.bf16.mxu0 0
    %2932 = vmatpush1.bf16.msra.mxu0 0
    %2933 = vmatprep.subr.bf16.mxu0 0
    %2934 = vmatpush1.bf16.msra.mxu0 0
    %2935 = vmatprep.subr.bf16.mxu0 0
    %2936 = vmatpush1.bf16.msra.mxu0 0
    %2937 = vmatprep.mubr.bf16.mxu0 0
    %2938 = vmatmul.mubr.bf16.gmra.mrb[0].mxu0 %v2903
    %v2939 = vpop.f32.mrb[0].mxu0
    %v2940 = vadd.f32 0.0, %v2939
    %v2941 = vpop.f32.mrb[0].mxu0
    %v2942 = vpop.f32.mrb[0].mxu0
    %v2943 = vpop.f32.mrb[0].mxu0
    %2944 = vdwg.mxu0
    %v2946 = vrot.slane %v2817, 5
    %v2948 = vadd.f32 %v218, %v2946
    %v2950 = vrot.slane %v2940, 5
    %v2952 = vadd.f32 %v2948, %v2950
    %v2953 = vmul.f32 %v2952, 0.5
    %v2954 = vtanh.pop %v2953
    %v2955 = vmul.f32 %v2954, 0.5
    %v2956 = vadd.f32 %v2955, 0.5
    %v2957 = vtanh.pop %v2896
    %v2958 = vmul.f32 %v2956, %v2957
    %v2959 = vpack.c.bf16 %v2958, %v2958
    %v2961 = vshrl.u32 %v2959, 16
    %v2963 = vrot.slane %v2961, 1
    %v2965 = vsel %vm276, %v2963, 0
    %2967 = vmatprep.subr.bf16.mxu0 %v261
    %2968 = vmatpush1.bf16.msra.mxu0 %v260
    %2969 = vmatprep.subr.bf16.mxu0 %v265
    %2970 = vmatpush1.bf16.msra.mxu0 %v264
    %2971 = vmatprep.subr.bf16.mxu0 0
    %2972 = vmatpush1.bf16.msra.mxu0 0
    %2973 = vmatprep.subr.bf16.mxu0 0
    %2974 = vmatpush1.bf16.msra.mxu0 0
    %2975 = vmatprep.subr.bf16.mxu0 0
    %2976 = vmatpush1.bf16.msra.mxu0 0
    %2977 = vmatprep.subr.bf16.mxu0 0
    %2978 = vmatpush1.bf16.msra.mxu0 0
    %2979 = vmatprep.subr.bf16.mxu0 0
    %2980 = vmatpush1.bf16.msra.mxu0 0
    %2981 = vmatprep.subr.bf16.mxu0 0
    %2982 = vmatpush1.bf16.msra.mxu0 0
    %2983 = vmatprep.subr.bf16.mxu0 0
    %2984 = vmatpush1.bf16.msra.mxu0 0
    %2985 = vmatprep.subr.bf16.mxu0 0
    %2986 = vmatpush1.bf16.msra.mxu0 0
    %2987 = vmatprep.subr.bf16.mxu0 0
    %2988 = vmatpush1.bf16.msra.mxu0 0
    %2989 = vmatprep.subr.bf16.mxu0 0
    %2990 = vmatpush1.bf16.msra.mxu0 0
    %2991 = vmatprep.subr.bf16.mxu0 0
    %2992 = vmatpush1.bf16.msra.mxu0 0
    %2993 = vmatprep.subr.bf16.mxu0 0
    %2994 = vmatpush1.bf16.msra.mxu0 0
    %2995 = vmatprep.subr.bf16.mxu0 0
    %2996 = vmatpush1.bf16.msra.mxu0 0
    %2997 = vmatprep.subr.bf16.mxu0 0
    %2998 = vmatpush1.bf16.msra.mxu0 0
    %2999 = vmatprep.mubr.bf16.mxu0 0
    %3000 = vmatmul.mubr.bf16.gmra.mrb[0].mxu0 %v2965
    %v3001 = vpop.f32.mrb[0].mxu0
    %v3002 = vadd.f32 0.0, %v3001
    %v3003 = vpop.f32.mrb[0].mxu0
    %v3004 = vadd.f32 0.0, %v3003
    %v3005 = vpop.f32.mrb[0].mxu0
    %v3006 = vpop.f32.mrb[0].mxu0
    %3007 = vdwg.mxu0
    %3008 = vmatprep.subr.bf16.mxu0 %v263
    %3009 = vmatpush1.bf16.msra.mxu0 %v262
    %3010 = vmatprep.subr.bf16.mxu0 %v267
    %3011 = vmatpush1.bf16.msra.mxu0 %v266
    %3012 = vmatprep.subr.bf16.mxu0 0
    %3013 = vmatpush1.bf16.msra.mxu0 0
    %3014 = vmatprep.subr.bf16.mxu0 0
    %3015 = vmatpush1.bf16.msra.mxu0 0
    %3016 = vmatprep.subr.bf16.mxu0 0
    %3017 = vmatpush1.bf16.msra.mxu0 0
    %3018 = vmatprep.subr.bf16.mxu0 0
    %3019 = vmatpush1.bf16.msra.mxu0 0
    %3020 = vmatprep.subr.bf16.mxu0 0
    %3021 = vmatpush1.bf16.msra.mxu0 0
    %3022 = vmatprep.subr.bf16.mxu0 0
    %3023 = vmatpush1.bf16.msra.mxu0 0
    %3024 = vmatprep.subr.bf16.mxu0 0
    %3025 = vmatpush1.bf16.msra.mxu0 0
    %3026 = vmatprep.subr.bf16.mxu0 0
    %3027 = vmatpush1.bf16.msra.mxu0 0
    %3028 = vmatprep.subr.bf16.mxu0 0
    %3029 = vmatpush1.bf16.msra.mxu0 0
    %3030 = vmatprep.subr.bf16.mxu0 0
    %3031 = vmatpush1.bf16.msra.mxu0 0
    %3032 = vmatprep.subr.bf16.mxu0 0
    %3033 = vmatpush1.bf16.msra.mxu0 0
    %3034 = vmatprep.subr.bf16.mxu0 0
    %3035 = vmatpush1.bf16.msra.mxu0 0
    %3036 = vmatprep.subr.bf16.mxu0 0
    %3037 = vmatpush1.bf16.msra.mxu0 0
    %3038 = vmatprep.subr.bf16.mxu0 0
    %3039 = vmatpush1.bf16.msra.mxu0 0
    %3040 = vmatprep.mubr.bf16.mxu0 0
    %3041 = vmatmul.mubr.bf16.gmra.mrb[0].mxu0 %v2965
    %v3042 = vpop.f32.mrb[0].mxu0
    %v3043 = vadd.f32 0.0, %v3042
    %v3044 = vpop.f32.mrb[0].mxu0
    %v3045 = vadd.f32 0.0, %v3044
    %v3046 = vpop.f32.mrb[0].mxu0
    %v3047 = vpop.f32.mrb[0].mxu0
    %3048 = vdwg.mxu0
    %3049 = vmatprep.subr.bf16.mxu0 %v375
    %3050 = vmatpush1.bf16.msra.mxu0 %v374
    %3051 = vmatprep.subr.bf16.mxu0 %v377
    %3052 = vmatpush1.bf16.msra.mxu0 %v376
    %3053 = vmatprep.subr.bf16.mxu0 0
    %3054 = vmatpush1.bf16.msra.mxu0 0
    %3055 = vmatprep.subr.bf16.mxu0 0
    %3056 = vmatpush1.bf16.msra.mxu0 0
    %3057 = vmatprep.subr.bf16.mxu0 0
    %3058 = vmatpush1.bf16.msra.mxu0 0
    %3059 = vmatprep.subr.bf16.mxu0 0
    %3060 = vmatpush1.bf16.msra.mxu0 0
    %3061 = vmatprep.subr.bf16.mxu0 0
    %3062 = vmatpush1.bf16.msra.mxu0 0
    %3063 = vmatprep.subr.bf16.mxu0 0
    %3064 = vmatpush1.bf16.msra.mxu0 0
    %3065 = vmatprep.subr.bf16.mxu0 0
    %3066 = vmatpush1.bf16.msra.mxu0 0
    %3067 = vmatprep.subr.bf16.mxu0 0
    %3068 = vmatpush1.bf16.msra.mxu0 0
    %3069 = vmatprep.subr.bf16.mxu0 0
    %3070 = vmatpush1.bf16.msra.mxu0 0
    %3071 = vmatprep.subr.bf16.mxu0 0
    %3072 = vmatpush1.bf16.msra.mxu0 0
    %3073 = vmatprep.subr.bf16.mxu0 0
    %3074 = vmatpush1.bf16.msra.mxu0 0
    %3075 = vmatprep.subr.bf16.mxu0 0
    %3076 = vmatpush1.bf16.msra.mxu0 0
    %3077 = vmatprep.subr.bf16.mxu0 0
    %3078 = vmatpush1.bf16.msra.mxu0 0
    %3079 = vmatprep.subr.bf16.mxu0 0
    %3080 = vmatpush1.bf16.msra.mxu0 0
    %3081 = vmatprep.mubr.bf16.mxu0 0
    %3082 = vmatmul.mubr.bf16.gmra.mrb[0].mxu0 %v2903
    %v3083 = vpop.f32.mrb[0].mxu0
    %v3084 = vadd.f32 0.0, %v3083
    %v3085 = vpop.f32.mrb[0].mxu0
    %v3086 = vadd.f32 0.0, %v3085
    %v3087 = vpop.f32.mrb[0].mxu0
    %v3088 = vpop.f32.mrb[0].mxu0
    %3089 = vdwg.mxu0
    %v3091 = vrot.slane %v3002, 4
    %v3093 = vadd.f32 %v139, %v3091
    %v3095 = vrot.slane %v3084, 4
    %v3097 = vadd.f32 %v3093, %v3095
    %v3098 = vmul.f32 %v3097, 0.5
    %v3099 = vtanh.pop %v3098
    %v3100 = vmul.f32 %v3099, 0.5
    %v3101 = vadd.f32 %v3100, 0.5
    %v3103 = vrot.slane %v3004, 4
    %v3105 = vadd.f32 %v141, %v3103
    %v3107 = vrot.slane %v3086, 4
    %v3109 = vadd.f32 %v3105, %v3107
    %v3110 = vmul.f32 %v3109, 0.5
    %v3111 = vtanh.pop %v3110
    %v3112 = vmul.f32 %v3111, 0.5
    %v3113 = vadd.f32 %v3112, 0.5
    %v3115 = vrot.slane %v3043, 4
    %v3117 = vadd.f32 %v216, %v3115
    %v3118 = vtanh.pop %v3117
    %v3119 = vmul.f32 %v3118, %v3101
    %v3121 = vrot.slane %v2896, 7
    %v3123 = vmul.f32 %v3113, %v3121
    %v3124 = vadd.f32 %v3119, %v3123
    %v3125 = vpack.c.bf16 %v3124, %v3124
    %v3127 = vrot.slane %v3125, 2
    %v3129 = vsel %vm276, %v3127, 0
    %3131 = vmatprep.subr.bf16.mxu0 0
    %3132 = vmatpush1.bf16.msra.mxu0 %v449
    %3133 = vmatprep.subr.bf16.mxu0 0
    %3134 = vmatpush1.bf16.msra.mxu0 %v450
    %3135 = vmatprep.subr.bf16.mxu0 0
    %3136 = vmatpush1.bf16.msra.mxu0 0
    %3137 = vmatprep.subr.bf16.mxu0 0
    %3138 = vmatpush1.bf16.msra.mxu0 0
    %3139 = vmatprep.subr.bf16.mxu0 0
    %3140 = vmatpush1.bf16.msra.mxu0 0
    %3141 = vmatprep.subr.bf16.mxu0 0
    %3142 = vmatpush1.bf16.msra.mxu0 0
    %3143 = vmatprep.subr.bf16.mxu0 0
    %3144 = vmatpush1.bf16.msra.mxu0 0
    %3145 = vmatprep.subr.bf16.mxu0 0
    %3146 = vmatpush1.bf16.msra.mxu0 0
    %3147 = vmatprep.subr.bf16.mxu0 0
    %3148 = vmatpush1.bf16.msra.mxu0 0
    %3149 = vmatprep.subr.bf16.mxu0 0
    %3150 = vmatpush1.bf16.msra.mxu0 0
    %3151 = vmatprep.subr.bf16.mxu0 0
    %3152 = vmatpush1.bf16.msra.mxu0 0
    %3153 = vmatprep.subr.bf16.mxu0 0
    %3154 = vmatpush1.bf16.msra.mxu0 0
    %3155 = vmatprep.subr.bf16.mxu0 0
    %3156 = vmatpush1.bf16.msra.mxu0 0
    %3157 = vmatprep.subr.bf16.mxu0 0
    %3158 = vmatpush1.bf16.msra.mxu0 0
    %3159 = vmatprep.subr.bf16.mxu0 0
    %3160 = vmatpush1.bf16.msra.mxu0 0
    %3161 = vmatprep.subr.bf16.mxu0 0
    %3162 = vmatpush1.bf16.msra.mxu0 0
    %3163 = vmatprep.mubr.bf16.mxu0 0
    %3164 = vmatmul.mubr.bf16.gmra.mrb[0].mxu0 %v3129
    %v3165 = vpop.f32.mrb[0].mxu0
    %v3166 = vadd.f32 0.0, %v3165
    %v3167 = vpop.f32.mrb[0].mxu0
    %v3168 = vpop.f32.mrb[0].mxu0
    %v3169 = vpop.f32.mrb[0].mxu0
    %3170 = vdwg.mxu0
    %v3172 = vrot.slane %v3045, 4
    %v3174 = vadd.f32 %v218, %v3172
    %v3176 = vrot.slane %v3166, 4
    %v3178 = vadd.f32 %v3174, %v3176
    %v3179 = vmul.f32 %v3178, 0.5
    %v3180 = vtanh.pop %v3179
    %v3181 = vmul.f32 %v3180, 0.5
    %v3182 = vadd.f32 %v3181, 0.5
    %v3183 = vtanh.pop %v3124
    %v3184 = vmul.f32 %v3182, %v3183
    %v3185 = vpack.c.bf16 %v3184, %v3184
    %v3187 = vrot.slane %v3185, 2
    %v3189 = vsel %vm276, %v3187, 0
    %3191 = vmatprep.subr.bf16.mxu0 %v261
    %3192 = vmatpush1.bf16.msra.mxu0 %v260
    %3193 = vmatprep.subr.bf16.mxu0 %v265
    %3194 = vmatpush1.bf16.msra.mxu0 %v264
    %3195 = vmatprep.subr.bf16.mxu0 0
    %3196 = vmatpush1.bf16.msra.mxu0 0
    %3197 = vmatprep.subr.bf16.mxu0 0
    %3198 = vmatpush1.bf16.msra.mxu0 0
    %3199 = vmatprep.subr.bf16.mxu0 0
    %3200 = vmatpush1.bf16.msra.mxu0 0
    %3201 = vmatprep.subr.bf16.mxu0 0
    %3202 = vmatpush1.bf16.msra.mxu0 0
    %3203 = vmatprep.subr.bf16.mxu0 0
    %3204 = vmatpush1.bf16.msra.mxu0 0
    %3205 = vmatprep.subr.bf16.mxu0 0
    %3206 = vmatpush1.bf16.msra.mxu0 0
    %3207 = vmatprep.subr.bf16.mxu0 0
    %3208 = vmatpush1.bf16.msra.mxu0 0
    %3209 = vmatprep.subr.bf16.mxu0 0
    %3210 = vmatpush1.bf16.msra.mxu0 0
    %3211 = vmatprep.subr.bf16.mxu0 0
    %3212 = vmatpush1.bf16.msra.mxu0 0
    %3213 = vmatprep.subr.bf16.mxu0 0
    %3214 = vmatpush1.bf16.msra.mxu0 0
    %3215 = vmatprep.subr.bf16.mxu0 0
    %3216 = vmatpush1.bf16.msra.mxu0 0
    %3217 = vmatprep.subr.bf16.mxu0 0
    %3218 = vmatpush1.bf16.msra.mxu0 0
    %3219 = vmatprep.subr.bf16.mxu0 0
    %3220 = vmatpush1.bf16.msra.mxu0 0
    %3221 = vmatprep.subr.bf16.mxu0 0
    %3222 = vmatpush1.bf16.msra.mxu0 0
    %3223 = vmatprep.mubr.bf16.mxu0 0
    %3224 = vmatmul.mubr.bf16.gmra.mrb[0].mxu0 %v3189
    %v3225 = vpop.f32.mrb[0].mxu0
    %v3226 = vadd.f32 0.0, %v3225
    %v3227 = vpop.f32.mrb[0].mxu0
    %v3228 = vadd.f32 0.0, %v3227
    %v3229 = vpop.f32.mrb[0].mxu0
    %v3230 = vpop.f32.mrb[0].mxu0
    %3231 = vdwg.mxu0
    %3232 = vmatprep.subr.bf16.mxu0 %v263
    %3233 = vmatpush1.bf16.msra.mxu0 %v262
    %3234 = vmatprep.subr.bf16.mxu0 %v267
    %3235 = vmatpush1.bf16.msra.mxu0 %v266
    %3236 = vmatprep.subr.bf16.mxu0 0
    %3237 = vmatpush1.bf16.msra.mxu0 0
    %3238 = vmatprep.subr.bf16.mxu0 0
    %3239 = vmatpush1.bf16.msra.mxu0 0
    %3240 = vmatprep.subr.bf16.mxu0 0
    %3241 = vmatpush1.bf16.msra.mxu0 0
    %3242 = vmatprep.subr.bf16.mxu0 0
    %3243 = vmatpush1.bf16.msra.mxu0 0
    %3244 = vmatprep.subr.bf16.mxu0 0
    %3245 = vmatpush1.bf16.msra.mxu0 0
    %3246 = vmatprep.subr.bf16.mxu0 0
    %3247 = vmatpush1.bf16.msra.mxu0 0
    %3248 = vmatprep.subr.bf16.mxu0 0
    %3249 = vmatpush1.bf16.msra.mxu0 0
    %3250 = vmatprep.subr.bf16.mxu0 0
    %3251 = vmatpush1.bf16.msra.mxu0 0
    %3252 = vmatprep.subr.bf16.mxu0 0
    %3253 = vmatpush1.bf16.msra.mxu0 0
    %3254 = vmatprep.subr.bf16.mxu0 0
    %3255 = vmatpush1.bf16.msra.mxu0 0
    %3256 = vmatprep.subr.bf16.mxu0 0
    %3257 = vmatpush1.bf16.msra.mxu0 0
    %3258 = vmatprep.subr.bf16.mxu0 0
    %3259 = vmatpush1.bf16.msra.mxu0 0
    %3260 = vmatprep.subr.bf16.mxu0 0
    %3261 = vmatpush1.bf16.msra.mxu0 0
    %3262 = vmatprep.subr.bf16.mxu0 0
    %3263 = vmatpush1.bf16.msra.mxu0 0
    %3264 = vmatprep.mubr.bf16.mxu0 0
    %3265 = vmatmul.mubr.bf16.gmra.mrb[0].mxu0 %v3189
    %v3266 = vpop.f32.mrb[0].mxu0
    %v3267 = vadd.f32 0.0, %v3266
    %v3268 = vpop.f32.mrb[0].mxu0
    %v3269 = vadd.f32 0.0, %v3268
    %v3270 = vpop.f32.mrb[0].mxu0
    %v3271 = vpop.f32.mrb[0].mxu0
    %3272 = vdwg.mxu0
    %3273 = vmatprep.subr.bf16.mxu0 %v375
    %3274 = vmatpush1.bf16.msra.mxu0 %v374
    %3275 = vmatprep.subr.bf16.mxu0 %v377
    %3276 = vmatpush1.bf16.msra.mxu0 %v376
    %3277 = vmatprep.subr.bf16.mxu0 0
    %3278 = vmatpush1.bf16.msra.mxu0 0
    %3279 = vmatprep.subr.bf16.mxu0 0
    %3280 = vmatpush1.bf16.msra.mxu0 0
    %3281 = vmatprep.subr.bf16.mxu0 0
    %3282 = vmatpush1.bf16.msra.mxu0 0
    %3283 = vmatprep.subr.bf16.mxu0 0
    %3284 = vmatpush1.bf16.msra.mxu0 0
    %3285 = vmatprep.subr.bf16.mxu0 0
    %3286 = vmatpush1.bf16.msra.mxu0 0
    %3287 = vmatprep.subr.bf16.mxu0 0
    %3288 = vmatpush1.bf16.msra.mxu0 0
    %3289 = vmatprep.subr.bf16.mxu0 0
    %3290 = vmatpush1.bf16.msra.mxu0 0
    %3291 = vmatprep.subr.bf16.mxu0 0
    %3292 = vmatpush1.bf16.msra.mxu0 0
    %3293 = vmatprep.subr.bf16.mxu0 0
    %3294 = vmatpush1.bf16.msra.mxu0 0
    %3295 = vmatprep.subr.bf16.mxu0 0
    %3296 = vmatpush1.bf16.msra.mxu0 0
    %3297 = vmatprep.subr.bf16.mxu0 0
    %3298 = vmatpush1.bf16.msra.mxu0 0
    %3299 = vmatprep.subr.bf16.mxu0 0
    %3300 = vmatpush1.bf16.msra.mxu0 0
    %3301 = vmatprep.subr.bf16.mxu0 0
    %3302 = vmatpush1.bf16.msra.mxu0 0
    %3303 = vmatprep.subr.bf16.mxu0 0
    %3304 = vmatpush1.bf16.msra.mxu0 0
    %3305 = vmatprep.mubr.bf16.mxu0 0
    %3306 = vmatmul.mubr.bf16.gmra.mrb[0].mxu0 %v3129
    %v3307 = vpop.f32.mrb[0].mxu0
    %v3308 = vadd.f32 0.0, %v3307
    %v3309 = vpop.f32.mrb[0].mxu0
    %v3310 = vadd.f32 0.0, %v3309
    %v3311 = vpop.f32.mrb[0].mxu0
    %v3312 = vpop.f32.mrb[0].mxu0
    %3313 = vdwg.mxu0
    %v3315 = vrot.slane %v3226, 3
    %v3317 = vadd.f32 %v139, %v3315
    %v3319 = vrot.slane %v3308, 3
    %v3321 = vadd.f32 %v3317, %v3319
    %v3322 = vmul.f32 %v3321, 0.5
    %v3323 = vtanh.pop %v3322
    %v3324 = vmul.f32 %v3323, 0.5
    %v3325 = vadd.f32 %v3324, 0.5
    %v3327 = vrot.slane %v3228, 3
    %v3329 = vadd.f32 %v141, %v3327
    %v3331 = vrot.slane %v3310, 3
    %v3333 = vadd.f32 %v3329, %v3331
    %v3334 = vmul.f32 %v3333, 0.5
    %v3335 = vtanh.pop %v3334
    %v3336 = vmul.f32 %v3335, 0.5
    %v3337 = vadd.f32 %v3336, 0.5
    %v3339 = vrot.slane %v3267, 3
    %v3341 = vadd.f32 %v216, %v3339
    %v3342 = vtanh.pop %v3341
    %v3343 = vmul.f32 %v3342, %v3325
    %v3345 = vrot.slane %v3124, 7
    %v3347 = vmul.f32 %v3337, %v3345
    %v3348 = vadd.f32 %v3343, %v3347
    %v3349 = vpack.c.bf16 %v3348, %v3348
    %v3351 = vshrl.u32 %v3349, 16
    %v3353 = vrot.slane %v3351, 2
    %v3355 = vsel %vm276, %v3353, 0
    %3357 = vmatprep.subr.bf16.mxu0 0
    %3358 = vmatpush1.bf16.msra.mxu0 %v449
    %3359 = vmatprep.subr.bf16.mxu0 0
    %3360 = vmatpush1.bf16.msra.mxu0 %v450
    %3361 = vmatprep.subr.bf16.mxu0 0
    %3362 = vmatpush1.bf16.msra.mxu0 0
    %3363 = vmatprep.subr.bf16.mxu0 0
    %3364 = vmatpush1.bf16.msra.mxu0 0
    %3365 = vmatprep.subr.bf16.mxu0 0
    %3366 = vmatpush1.bf16.msra.mxu0 0
    %3367 = vmatprep.subr.bf16.mxu0 0
    %3368 = vmatpush1.bf16.msra.mxu0 0
    %3369 = vmatprep.subr.bf16.mxu0 0
    %3370 = vmatpush1.bf16.msra.mxu0 0
    %3371 = vmatprep.subr.bf16.mxu0 0
    %3372 = vmatpush1.bf16.msra.mxu0 0
    %3373 = vmatprep.subr.bf16.mxu0 0
    %3374 = vmatpush1.bf16.msra.mxu0 0
    %3375 = vmatprep.subr.bf16.mxu0 0
    %3376 = vmatpush1.bf16.msra.mxu0 0
    %3377 = vmatprep.subr.bf16.mxu0 0
    %3378 = vmatpush1.bf16.msra.mxu0 0
    %3379 = vmatprep.subr.bf16.mxu0 0
    %3380 = vmatpush1.bf16.msra.mxu0 0
    %3381 = vmatprep.subr.bf16.mxu0 0
    %3382 = vmatpush1.bf16.msra.mxu0 0
    %3383 = vmatprep.subr.bf16.mxu0 0
    %3384 = vmatpush1.bf16.msra.mxu0 0
    %3385 = vmatprep.subr.bf16.mxu0 0
    %3386 = vmatpush1.bf16.msra.mxu0 0
    %3387 = vmatprep.subr.bf16.mxu0 0
    %3388 = vmatpush1.bf16.msra.mxu0 0
    %3389 = vmatprep.mubr.bf16.mxu0 0
    %3390 = vmatmul.mubr.bf16.gmra.mrb[0].mxu0 %v3355
    %v3391 = vpop.f32.mrb[0].mxu0
    %v3392 = vadd.f32 0.0, %v3391
    %v3393 = vpop.f32.mrb[0].mxu0
    %v3394 = vpop.f32.mrb[0].mxu0
    %v3395 = vpop.f32.mrb[0].mxu0
    %3396 = vdwg.mxu0
    %v3398 = vrot.slane %v3269, 3
    %v3400 = vadd.f32 %v218, %v3398
    %v3402 = vrot.slane %v3392, 3
    %v3404 = vadd.f32 %v3400, %v3402
    %v3405 = vmul.f32 %v3404, 0.5
    %v3406 = vtanh.pop %v3405
    %v3407 = vmul.f32 %v3406, 0.5
    %v3408 = vadd.f32 %v3407, 0.5
    %v3409 = vtanh.pop %v3348
    %v3410 = vmul.f32 %v3408, %v3409
    %v3411 = vpack.c.bf16 %v3410, %v3410
    %v3413 = vshrl.u32 %v3411, 16
    %v3415 = vrot.slane %v3413, 2
    %v3417 = vsel %vm276, %v3415, 0
    %3419 = vmatprep.subr.bf16.mxu0 %v261
    %3420 = vmatpush1.bf16.msra.mxu0 %v260
    %3421 = vmatprep.subr.bf16.mxu0 %v265
    %3422 = vmatpush1.bf16.msra.mxu0 %v264
    %3423 = vmatprep.subr.bf16.mxu0 0
    %3424 = vmatpush1.bf16.msra.mxu0 0
    %3425 = vmatprep.subr.bf16.mxu0 0
    %3426 = vmatpush1.bf16.msra.mxu0 0
    %3427 = vmatprep.subr.bf16.mxu0 0
    %3428 = vmatpush1.bf16.msra.mxu0 0
    %3429 = vmatprep.subr.bf16.mxu0 0
    %3430 = vmatpush1.bf16.msra.mxu0 0
    %3431 = vmatprep.subr.bf16.mxu0 0
    %3432 = vmatpush1.bf16.msra.mxu0 0
    %3433 = vmatprep.subr.bf16.mxu0 0
    %3434 = vmatpush1.bf16.msra.mxu0 0
    %3435 = vmatprep.subr.bf16.mxu0 0
    %3436 = vmatpush1.bf16.msra.mxu0 0
    %3437 = vmatprep.subr.bf16.mxu0 0
    %3438 = vmatpush1.bf16.msra.mxu0 0
    %3439 = vmatprep.subr.bf16.mxu0 0
    %3440 = vmatpush1.bf16.msra.mxu0 0
    %3441 = vmatprep.subr.bf16.mxu0 0
    %3442 = vmatpush1.bf16.msra.mxu0 0
    %3443 = vmatprep.subr.bf16.mxu0 0
    %3444 = vmatpush1.bf16.msra.mxu0 0
    %3445 = vmatprep.subr.bf16.mxu0 0
    %3446 = vmatpush1.bf16.msra.mxu0 0
    %3447 = vmatprep.subr.bf16.mxu0 0
    %3448 = vmatpush1.bf16.msra.mxu0 0
    %3449 = vmatprep.subr.bf16.mxu0 0
    %3450 = vmatpush1.bf16.msra.mxu0 0
    %3451 = vmatprep.mubr.bf16.mxu0 0
    %3452 = vmatmul.mubr.bf16.gmra.mrb[0].mxu0 %v3417
    %v3453 = vpop.f32.mrb[0].mxu0
    %v3454 = vadd.f32 0.0, %v3453
    %v3455 = vpop.f32.mrb[0].mxu0
    %v3456 = vadd.f32 0.0, %v3455
    %v3457 = vpop.f32.mrb[0].mxu0
    %v3458 = vpop.f32.mrb[0].mxu0
    %3459 = vdwg.mxu0
    %3460 = vmatprep.subr.bf16.mxu0 %v263
    %3461 = vmatpush1.bf16.msra.mxu0 %v262
    %3462 = vmatprep.subr.bf16.mxu0 %v267
    %3463 = vmatpush1.bf16.msra.mxu0 %v266
    %3464 = vmatprep.subr.bf16.mxu0 0
    %3465 = vmatpush1.bf16.msra.mxu0 0
    %3466 = vmatprep.subr.bf16.mxu0 0
    %3467 = vmatpush1.bf16.msra.mxu0 0
    %3468 = vmatprep.subr.bf16.mxu0 0
    %3469 = vmatpush1.bf16.msra.mxu0 0
    %3470 = vmatprep.subr.bf16.mxu0 0
    %3471 = vmatpush1.bf16.msra.mxu0 0
    %3472 = vmatprep.subr.bf16.mxu0 0
    %3473 = vmatpush1.bf16.msra.mxu0 0
    %3474 = vmatprep.subr.bf16.mxu0 0
    %3475 = vmatpush1.bf16.msra.mxu0 0
    %3476 = vmatprep.subr.bf16.mxu0 0
    %3477 = vmatpush1.bf16.msra.mxu0 0
    %3478 = vmatprep.subr.bf16.mxu0 0
    %3479 = vmatpush1.bf16.msra.mxu0 0
    %3480 = vmatprep.subr.bf16.mxu0 0
    %3481 = vmatpush1.bf16.msra.mxu0 0
    %3482 = vmatprep.subr.bf16.mxu0 0
    %3483 = vmatpush1.bf16.msra.mxu0 0
    %3484 = vmatprep.subr.bf16.mxu0 0
    %3485 = vmatpush1.bf16.msra.mxu0 0
    %3486 = vmatprep.subr.bf16.mxu0 0
    %3487 = vmatpush1.bf16.msra.mxu0 0
    %3488 = vmatprep.subr.bf16.mxu0 0
    %3489 = vmatpush1.bf16.msra.mxu0 0
    %3490 = vmatprep.subr.bf16.mxu0 0
    %3491 = vmatpush1.bf16.msra.mxu0 0
    %3492 = vmatprep.mubr.bf16.mxu0 0
    %3493 = vmatmul.mubr.bf16.gmra.mrb[0].mxu0 %v3417
    %v3494 = vpop.f32.mrb[0].mxu0
    %v3495 = vadd.f32 0.0, %v3494
    %v3496 = vpop.f32.mrb[0].mxu0
    %v3497 = vadd.f32 0.0, %v3496
    %v3498 = vpop.f32.mrb[0].mxu0
    %v3499 = vpop.f32.mrb[0].mxu0
    %3500 = vdwg.mxu0
    %3501 = vmatprep.subr.bf16.mxu0 %v375
    %3502 = vmatpush1.bf16.msra.mxu0 %v374
    %3503 = vmatprep.subr.bf16.mxu0 %v377
    %3504 = vmatpush1.bf16.msra.mxu0 %v376
    %3505 = vmatprep.subr.bf16.mxu0 0
    %3506 = vmatpush1.bf16.msra.mxu0 0
    %3507 = vmatprep.subr.bf16.mxu0 0
    %3508 = vmatpush1.bf16.msra.mxu0 0
    %3509 = vmatprep.subr.bf16.mxu0 0
    %3510 = vmatpush1.bf16.msra.mxu0 0
    %3511 = vmatprep.subr.bf16.mxu0 0
    %3512 = vmatpush1.bf16.msra.mxu0 0
    %3513 = vmatprep.subr.bf16.mxu0 0
    %3514 = vmatpush1.bf16.msra.mxu0 0
    %3515 = vmatprep.subr.bf16.mxu0 0
    %3516 = vmatpush1.bf16.msra.mxu0 0
    %3517 = vmatprep.subr.bf16.mxu0 0
    %3518 = vmatpush1.bf16.msra.mxu0 0
    %3519 = vmatprep.subr.bf16.mxu0 0
    %3520 = vmatpush1.bf16.msra.mxu0 0
    %3521 = vmatprep.subr.bf16.mxu0 0
    %3522 = vmatpush1.bf16.msra.mxu0 0
    %3523 = vmatprep.subr.bf16.mxu0 0
    %3524 = vmatpush1.bf16.msra.mxu0 0
    %3525 = vmatprep.subr.bf16.mxu0 0
    %3526 = vmatpush1.bf16.msra.mxu0 0
    %3527 = vmatprep.subr.bf16.mxu0 0
    %3528 = vmatpush1.bf16.msra.mxu0 0
    %3529 = vmatprep.subr.bf16.mxu0 0
    %3530 = vmatpush1.bf16.msra.mxu0 0
    %3531 = vmatprep.subr.bf16.mxu0 0
    %3532 = vmatpush1.bf16.msra.mxu0 0
    %3533 = vmatprep.mubr.bf16.mxu0 0
    %3534 = vmatmul.mubr.bf16.gmra.mrb[0].mxu0 %v3355
    %v3535 = vpop.f32.mrb[0].mxu0
    %v3536 = vadd.f32 0.0, %v3535
    %v3537 = vpop.f32.mrb[0].mxu0
    %v3538 = vadd.f32 0.0, %v3537
    %v3539 = vpop.f32.mrb[0].mxu0
    %v3540 = vpop.f32.mrb[0].mxu0
    %3541 = vdwg.mxu0
    %v3543 = vrot.slane %v3454, 2
    %v3545 = vadd.f32 %v139, %v3543
    %v3547 = vrot.slane %v3536, 2
    %v3549 = vadd.f32 %v3545, %v3547
    %v3550 = vmul.f32 %v3549, 0.5
    %v3551 = vtanh.pop %v3550
    %v3552 = vmul.f32 %v3551, 0.5
    %v3553 = vadd.f32 %v3552, 0.5
    %v3555 = vrot.slane %v3456, 2
    %v3557 = vadd.f32 %v141, %v3555
    %v3559 = vrot.slane %v3538, 2
    %v3561 = vadd.f32 %v3557, %v3559
    %v3562 = vmul.f32 %v3561, 0.5
    %v3563 = vtanh.pop %v3562
    %v3564 = vmul.f32 %v3563, 0.5
    %v3565 = vadd.f32 %v3564, 0.5
    %v3567 = vrot.slane %v3495, 2
    %v3569 = vadd.f32 %v216, %v3567
    %v3570 = vtanh.pop %v3569
    %v3571 = vmul.f32 %v3570, %v3553
    %v3573 = vrot.slane %v3348, 7
    %v3575 = vmul.f32 %v3565, %v3573
    %v3576 = vadd.f32 %v3571, %v3575
    %v3577 = vpack.c.bf16 %v3576, %v3576
    %v3579 = vrot.slane %v3577, 3
    %v3581 = vsel %vm276, %v3579, 0
    %3583 = vmatprep.subr.bf16.mxu0 0
    %3584 = vmatpush1.bf16.msra.mxu0 %v449
    %3585 = vmatprep.subr.bf16.mxu0 0
    %3586 = vmatpush1.bf16.msra.mxu0 %v450
    %3587 = vmatprep.subr.bf16.mxu0 0
    %3588 = vmatpush1.bf16.msra.mxu0 0
    %3589 = vmatprep.subr.bf16.mxu0 0
    %3590 = vmatpush1.bf16.msra.mxu0 0
    %3591 = vmatprep.subr.bf16.mxu0 0
    %3592 = vmatpush1.bf16.msra.mxu0 0
    %3593 = vmatprep.subr.bf16.mxu0 0
    %3594 = vmatpush1.bf16.msra.mxu0 0
    %3595 = vmatprep.subr.bf16.mxu0 0
    %3596 = vmatpush1.bf16.msra.mxu0 0
    %3597 = vmatprep.subr.bf16.mxu0 0
    %3598 = vmatpush1.bf16.msra.mxu0 0
    %3599 = vmatprep.subr.bf16.mxu0 0
    %3600 = vmatpush1.bf16.msra.mxu0 0
    %3601 = vmatprep.subr.bf16.mxu0 0
    %3602 = vmatpush1.bf16.msra.mxu0 0
    %3603 = vmatprep.subr.bf16.mxu0 0
    %3604 = vmatpush1.bf16.msra.mxu0 0
    %3605 = vmatprep.subr.bf16.mxu0 0
    %3606 = vmatpush1.bf16.msra.mxu0 0
    %3607 = vmatprep.subr.bf16.mxu0 0
    %3608 = vmatpush1.bf16.msra.mxu0 0
    %3609 = vmatprep.subr.bf16.mxu0 0
    %3610 = vmatpush1.bf16.msra.mxu0 0
    %3611 = vmatprep.subr.bf16.mxu0 0
    %3612 = vmatpush1.bf16.msra.mxu0 0
    %3613 = vmatprep.subr.bf16.mxu0 0
    %3614 = vmatpush1.bf16.msra.mxu0 0
    %3615 = vmatprep.mubr.bf16.mxu0 0
    %3616 = vmatmul.mubr.bf16.gmra.mrb[0].mxu0 %v3581
    %v3617 = vpop.f32.mrb[0].mxu0
    %v3618 = vadd.f32 0.0, %v3617
    %v3619 = vpop.f32.mrb[0].mxu0
    %v3620 = vpop.f32.mrb[0].mxu0
    %v3621 = vpop.f32.mrb[0].mxu0
    %3622 = vdwg.mxu0
    %v3624 = vrot.slane %v3497, 2
    %v3626 = vadd.f32 %v218, %v3624
    %v3628 = vrot.slane %v3618, 2
    %v3630 = vadd.f32 %v3626, %v3628
    %v3631 = vmul.f32 %v3630, 0.5
    %v3632 = vtanh.pop %v3631
    %v3633 = vmul.f32 %v3632, 0.5
    %v3634 = vadd.f32 %v3633, 0.5
    %v3635 = vtanh.pop %v3576
    %v3636 = vmul.f32 %v3634, %v3635
    %v3637 = vpack.c.bf16 %v3636, %v3636
    %v3639 = vrot.slane %v3637, 3
    %v3641 = vsel %vm276, %v3639, 0
    %3643 = vmatprep.subr.bf16.mxu0 %v261
    %3644 = vmatpush1.bf16.msra.mxu0 %v260
    %3645 = vmatprep.subr.bf16.mxu0 %v265
    %3646 = vmatpush1.bf16.msra.mxu0 %v264
    %3647 = vmatprep.subr.bf16.mxu0 0
    %3648 = vmatpush1.bf16.msra.mxu0 0
    %3649 = vmatprep.subr.bf16.mxu0 0
    %3650 = vmatpush1.bf16.msra.mxu0 0
    %3651 = vmatprep.subr.bf16.mxu0 0
    %3652 = vmatpush1.bf16.msra.mxu0 0
    %3653 = vmatprep.subr.bf16.mxu0 0
    %3654 = vmatpush1.bf16.msra.mxu0 0
    %3655 = vmatprep.subr.bf16.mxu0 0
    %3656 = vmatpush1.bf16.msra.mxu0 0
    %3657 = vmatprep.subr.bf16.mxu0 0
    %3658 = vmatpush1.bf16.msra.mxu0 0
    %3659 = vmatprep.subr.bf16.mxu0 0
    %3660 = vmatpush1.bf16.msra.mxu0 0
    %3661 = vmatprep.subr.bf16.mxu0 0
    %3662 = vmatpush1.bf16.msra.mxu0 0
    %3663 = vmatprep.subr.bf16.mxu0 0
    %3664 = vmatpush1.bf16.msra.mxu0 0
    %3665 = vmatprep.subr.bf16.mxu0 0
    %3666 = vmatpush1.bf16.msra.mxu0 0
    %3667 = vmatprep.subr.bf16.mxu0 0
    %3668 = vmatpush1.bf16.msra.mxu0 0
    %3669 = vmatprep.subr.bf16.mxu0 0
    %3670 = vmatpush1.bf16.msra.mxu0 0
    %3671 = vmatprep.subr.bf16.mxu0 0
    %3672 = vmatpush1.bf16.msra.mxu0 0
    %3673 = vmatprep.subr.bf16.mxu0 0
    %3674 = vmatpush1.bf16.msra.mxu0 0
    %3675 = vmatprep.mubr.bf16.mxu0 0
    %3676 = vmatmul.mubr.bf16.gmra.mrb[0].mxu0 %v3641
    %v3677 = vpop.f32.mrb[0].mxu0
    %v3678 = vadd.f32 0.0, %v3677
    %v3679 = vpop.f32.mrb[0].mxu0
    %v3680 = vadd.f32 0.0, %v3679
    %v3681 = vpop.f32.mrb[0].mxu0
    %v3682 = vpop.f32.mrb[0].mxu0
    %3683 = vdwg.mxu0
    %3684 = vmatprep.subr.bf16.mxu0 %v263
    %3685 = vmatpush1.bf16.msra.mxu0 %v262
    %3686 = vmatprep.subr.bf16.mxu0 %v267
    %3687 = vmatpush1.bf16.msra.mxu0 %v266
    %3688 = vmatprep.subr.bf16.mxu0 0
    %3689 = vmatpush1.bf16.msra.mxu0 0
    %3690 = vmatprep.subr.bf16.mxu0 0
    %3691 = vmatpush1.bf16.msra.mxu0 0
    %3692 = vmatprep.subr.bf16.mxu0 0
    %3693 = vmatpush1.bf16.msra.mxu0 0
    %3694 = vmatprep.subr.bf16.mxu0 0
    %3695 = vmatpush1.bf16.msra.mxu0 0
    %3696 = vmatprep.subr.bf16.mxu0 0
    %3697 = vmatpush1.bf16.msra.mxu0 0
    %3698 = vmatprep.subr.bf16.mxu0 0
    %3699 = vmatpush1.bf16.msra.mxu0 0
    %3700 = vmatprep.subr.bf16.mxu0 0
    %3701 = vmatpush1.bf16.msra.mxu0 0
    %3702 = vmatprep.subr.bf16.mxu0 0
    %3703 = vmatpush1.bf16.msra.mxu0 0
    %3704 = vmatprep.subr.bf16.mxu0 0
    %3705 = vmatpush1.bf16.msra.mxu0 0
    %3706 = vmatprep.subr.bf16.mxu0 0
    %3707 = vmatpush1.bf16.msra.mxu0 0
    %3708 = vmatprep.subr.bf16.mxu0 0
    %3709 = vmatpush1.bf16.msra.mxu0 0
    %3710 = vmatprep.subr.bf16.mxu0 0
    %3711 = vmatpush1.bf16.msra.mxu0 0
    %3712 = vmatprep.subr.bf16.mxu0 0
    %3713 = vmatpush1.bf16.msra.mxu0 0
    %3714 = vmatprep.subr.bf16.mxu0 0
    %3715 = vmatpush1.bf16.msra.mxu0 0
    %3716 = vmatprep.mubr.bf16.mxu0 0
    %3717 = vmatmul.mubr.bf16.gmra.mrb[0].mxu0 %v3641
    %v3718 = vpop.f32.mrb[0].mxu0
    %v3719 = vadd.f32 0.0, %v3718
    %v3720 = vpop.f32.mrb[0].mxu0
    %v3721 = vadd.f32 0.0, %v3720
    %v3722 = vpop.f32.mrb[0].mxu0
    %v3723 = vpop.f32.mrb[0].mxu0
    %3724 = vdwg.mxu0
    %3725 = vmatprep.subr.bf16.mxu0 %v375
    %3726 = vmatpush1.bf16.msra.mxu0 %v374
    %3727 = vmatprep.subr.bf16.mxu0 %v377
    %3728 = vmatpush1.bf16.msra.mxu0 %v376
    %3729 = vmatprep.subr.bf16.mxu0 0
    %3730 = vmatpush1.bf16.msra.mxu0 0
    %3731 = vmatprep.subr.bf16.mxu0 0
    %3732 = vmatpush1.bf16.msra.mxu0 0
    %3733 = vmatprep.subr.bf16.mxu0 0
    %3734 = vmatpush1.bf16.msra.mxu0 0
    %3735 = vmatprep.subr.bf16.mxu0 0
    %3736 = vmatpush1.bf16.msra.mxu0 0
    %3737 = vmatprep.subr.bf16.mxu0 0
    %3738 = vmatpush1.bf16.msra.mxu0 0
    %3739 = vmatprep.subr.bf16.mxu0 0
    %3740 = vmatpush1.bf16.msra.mxu0 0
    %3741 = vmatprep.subr.bf16.mxu0 0
    %3742 = vmatpush1.bf16.msra.mxu0 0
    %3743 = vmatprep.subr.bf16.mxu0 0
    %3744 = vmatpush1.bf16.msra.mxu0 0
    %3745 = vmatprep.subr.bf16.mxu0 0
    %3746 = vmatpush1.bf16.msra.mxu0 0
    %3747 = vmatprep.subr.bf16.mxu0 0
    %3748 = vmatpush1.bf16.msra.mxu0 0
    %3749 = vmatprep.subr.bf16.mxu0 0
    %3750 = vmatpush1.bf16.msra.mxu0 0
    %3751 = vmatprep.subr.bf16.mxu0 0
    %3752 = vmatpush1.bf16.msra.mxu0 0
    %3753 = vmatprep.subr.bf16.mxu0 0
    %3754 = vmatpush1.bf16.msra.mxu0 0
    %3755 = vmatprep.subr.bf16.mxu0 0
    %3756 = vmatpush1.bf16.msra.mxu0 0
    %3757 = vmatprep.mubr.bf16.mxu0 0
    %3758 = vmatmul.mubr.bf16.gmra.mrb[0].mxu0 %v3581
    %v3759 = vpop.f32.mrb[0].mxu0
    %v3760 = vadd.f32 0.0, %v3759
    %v3761 = vpop.f32.mrb[0].mxu0
    %v3762 = vadd.f32 0.0, %v3761
    %v3763 = vpop.f32.mrb[0].mxu0
    %v3764 = vpop.f32.mrb[0].mxu0
    %3765 = vdwg.mxu0
    %v3767 = vrot.slane %v3678, 1
    %v3769 = vadd.f32 %v139, %v3767
    %v3771 = vrot.slane %v3760, 1
    %v3773 = vadd.f32 %v3769, %v3771
    %v3774 = vmul.f32 %v3773, 0.5
    %v3775 = vtanh.pop %v3774
    %v3776 = vmul.f32 %v3775, 0.5
    %v3777 = vadd.f32 %v3776, 0.5
    %v3779 = vrot.slane %v3680, 1
    %v3781 = vadd.f32 %v141, %v3779
    %v3783 = vrot.slane %v3762, 1
    %v3785 = vadd.f32 %v3781, %v3783
    %v3786 = vmul.f32 %v3785, 0.5
    %v3787 = vtanh.pop %v3786
    %v3788 = vmul.f32 %v3787, 0.5
    %v3789 = vadd.f32 %v3788, 0.5
    %v3791 = vrot.slane %v3719, 1
    %v3793 = vadd.f32 %v216, %v3791
    %v3794 = vtanh.pop %v3793
    %v3795 = vmul.f32 %v3794, %v3777
    %v3797 = vrot.slane %v3576, 7
    %v3799 = vmul.f32 %v3789, %v3797
    %v3800 = vadd.f32 %v3795, %v3799
    %v3801 = vpack.c.bf16 %v3800, %v3800
    %v3803 = vshrl.u32 %v3801, 16
    %v3805 = vrot.slane %v3803, 3
    %v3807 = vsel %vm276, %v3805, 0
    %3809 = vmatprep.subr.bf16.mxu0 0
    %3810 = vmatpush1.bf16.msra.mxu0 %v449
    %3811 = vmatprep.subr.bf16.mxu0 0
    %3812 = vmatpush1.bf16.msra.mxu0 %v450
    %3813 = vmatprep.subr.bf16.mxu0 0
    %3814 = vmatpush1.bf16.msra.mxu0 0
    %3815 = vmatprep.subr.bf16.mxu0 0
    %3816 = vmatpush1.bf16.msra.mxu0 0
    %3817 = vmatprep.subr.bf16.mxu0 0
    %3818 = vmatpush1.bf16.msra.mxu0 0
    %3819 = vmatprep.subr.bf16.mxu0 0
    %3820 = vmatpush1.bf16.msra.mxu0 0
    %3821 = vmatprep.subr.bf16.mxu0 0
    %3822 = vmatpush1.bf16.msra.mxu0 0
    %3823 = vmatprep.subr.bf16.mxu0 0
    %3824 = vmatpush1.bf16.msra.mxu0 0
    %3825 = vmatprep.subr.bf16.mxu0 0
    %3826 = vmatpush1.bf16.msra.mxu0 0
    %3827 = vmatprep.subr.bf16.mxu0 0
    %3828 = vmatpush1.bf16.msra.mxu0 0
    %3829 = vmatprep.subr.bf16.mxu0 0
    %3830 = vmatpush1.bf16.msra.mxu0 0
    %3831 = vmatprep.subr.bf16.mxu0 0
    %3832 = vmatpush1.bf16.msra.mxu0 0
    %3833 = vmatprep.subr.bf16.mxu0 0
    %3834 = vmatpush1.bf16.msra.mxu0 0
    %3835 = vmatprep.subr.bf16.mxu0 0
    %3836 = vmatpush1.bf16.msra.mxu0 0
    %3837 = vmatprep.subr.bf16.mxu0 0
    %3838 = vmatpush1.bf16.msra.mxu0 0
    %3839 = vmatprep.subr.bf16.mxu0 0
    %3840 = vmatpush1.bf16.msra.mxu0 0
    %3841 = vmatprep.mubr.bf16.mxu0 0
    %3842 = vmatmul.mubr.bf16.gmra.mrb[0].mxu0 %v3807
    %v3843 = vpop.f32.mrb[0].mxu0
    %v3844 = vadd.f32 0.0, %v3843
    %v3845 = vpop.f32.mrb[0].mxu0
    %v3846 = vpop.f32.mrb[0].mxu0
    %v3847 = vpop.f32.mrb[0].mxu0
    %3848 = vdwg.mxu0
    %v3850 = vrot.slane %v3721, 1
    %v3852 = vadd.f32 %v218, %v3850
    %v3854 = vrot.slane %v3844, 1
    %v3856 = vadd.f32 %v3852, %v3854
    %v3857 = vmul.f32 %v3856, 0.5
    %v3858 = vtanh.pop %v3857
    %v3859 = vmul.f32 %v3858, 0.5
    %v3860 = vadd.f32 %v3859, 0.5
    %v3861 = vtanh.pop %v3800
    %v3862 = vmul.f32 %v3860, %v3861
    %v3864 = vrot.slane %v2081, 7
    %v3867 = vrot.slane %v3862, 6
    %vm3869 = vcmask 1040384
    %v3870 = vsel %vm3869, %v3864, %v3867
    %v3871 = vld [vmem:[%s5] sm:$0xff]
    %v3872 = vld [vmem:[%s5 + $0x8] sm:$0xff]
    %v3873 = vld [vmem:[%s5 + $0x10] sm:$0xff]
    %v3874 = vld [vmem:[%s5 + $0x18] sm:$0xff]
    %v3875 = vld [vmem:[%s6] sm:$0x1]
    %v3877 = vlaneseq
    %v3878 = vshrl.u32 %v3877, 7
    %v3879 = vsub.s32 0, %v3878
    %v3880 = vrot.slane %v3875, %v3879
    %v3883 = vsel %vm276, %v3870, 0
    %3885 = vmatprep.subr.mxu0 0.0
    %3886 = vmatpush1.msra.mxu0 %v3871
    %3887 = vmatprep.subr.mxu0 0.0
    %3888 = vmatpush1.msra.mxu0 %v3872
    %3889 = vmatprep.subr.mxu0 0.0
    %3890 = vmatpush1.msra.mxu0 %v3873
    %3891 = vmatprep.subr.mxu0 0.0
    %3892 = vmatpush1.msra.mxu0 %v3874
    %3893 = vmatprep.subr.mxu0 0.0
    %3894 = vmatpush1.msra.mxu0 0.0
    %3895 = vmatprep.subr.mxu0 0.0
    %3896 = vmatpush1.msra.mxu0 0.0
    %3897 = vmatprep.subr.mxu0 0.0
    %3898 = vmatpush1.msra.mxu0 0.0
    %3899 = vmatprep.subr.mxu0 0.0
    %3900 = vmatpush1.msra.mxu0 0.0
    %3901 = vmatprep.subr.mxu0 0.0
    %3902 = vmatpush1.msra.mxu0 0.0
    %3903 = vmatprep.subr.mxu0 0.0
    %3904 = vmatpush1.msra.mxu0 0.0
    %3905 = vmatprep.subr.mxu0 0.0
    %3906 = vmatpush1.msra.mxu0 0.0
    %3907 = vmatprep.subr.mxu0 0.0
    %3908 = vmatpush1.msra.mxu0 0.0
    %3909 = vmatprep.subr.mxu0 0.0
    %3910 = vmatpush1.msra.mxu0 0.0
    %3911 = vmatprep.subr.mxu0 0.0
    %3912 = vmatpush1.msra.mxu0 0.0
    %3913 = vmatprep.subr.mxu0 0.0
    %3914 = vmatpush1.msra.mxu0 0.0
    %3915 = vmatprep.subr.mxu0 0.0
    %3916 = vmatpush1.msra.mxu0 0.0
    %3917 = vmatprep.subr.mxu0 0.0
    %3918 = vmatpush1.msra.mxu0 0.0
    %3919 = vmatprep.subr.mxu0 0.0
    %3920 = vmatpush1.msra.mxu0 0.0
    %3921 = vmatprep.subr.mxu0 0.0
    %3922 = vmatpush1.msra.mxu0 0.0
    %3923 = vmatprep.subr.mxu0 0.0
    %3924 = vmatpush1.msra.mxu0 0.0
    %3925 = vmatprep.subr.mxu0 0.0
    %3926 = vmatpush1.msra.mxu0 0.0
    %3927 = vmatprep.subr.mxu0 0.0
    %3928 = vmatpush1.msra.mxu0 0.0
    %3929 = vmatprep.subr.mxu0 0.0
    %3930 = vmatpush1.msra.mxu0 0.0
    %3931 = vmatprep.subr.mxu0 0.0
    %3932 = vmatpush1.msra.mxu0 0.0
    %3933 = vmatprep.subr.mxu0 0.0
    %3934 = vmatpush1.msra.mxu0 0.0
    %3935 = vmatprep.subr.mxu0 0.0
    %3936 = vmatpush1.msra.mxu0 0.0
    %3937 = vmatprep.subr.mxu0 0.0
    %3938 = vmatpush1.msra.mxu0 0.0
    %3939 = vmatprep.subr.mxu0 0.0
    %3940 = vmatpush1.msra.mxu0 0.0
    %3941 = vmatprep.subr.mxu0 0.0
    %3942 = vmatpush1.msra.mxu0 0.0
    %3943 = vmatprep.subr.mxu0 0.0
    %3944 = vmatpush1.msra.mxu0 0.0
    %3945 = vmatprep.subr.mxu0 0.0
    %3946 = vmatpush1.msra.mxu0 0.0
    %3947 = vmatprep.subr.mxu0 0.0
    %3948 = vmatpush1.msra.mxu0 0.0
    %3949 = vmatprep.mubr.f32.mxu0 0.0
    %3950 = vmatmul.mubr.f32.gmra.mrb[0].mxu0 %v3883
    %v3951 = vpop.f32.mrb[0].mxu0
    %v3952 = vadd.f32 %v3880, %v3951
    %v3953 = vpop.f32.mrb[0].mxu0
    %3954 = vdwg.mxu0
    %vm3955 = vcmask 17408
    %3956 = vst.msk [vmem:[#allocation5] sm:$0x3] %vm3955, %v3952
    // Predicated region
    $region34: #{tpu_custom_call.1} parent=1 // pred_check
      _
    $region35: #{tpu_custom_call.1} parent=1 // pred_check_branch
      %3958 = sbr.rel (0) target = $region37
    $region36: #{tpu_custom_call.1} parent=1 // pred_region
      %s3960 = ssub.s32 32, 32
      %3961 = vsyncadd [#allocation4], %s3960
      %s3963 = sshll.u32 [#allocation5], 4
      %s3964 = int_to_ptr.vmem [resolvable:$true] %s3963
      %3966 = dma.vmem_to_hbm [thread:$0]  %s3964, 32, %s7, [#allocation4]
    $region37: #{tpu_custom_call.1} parent=1 // pred_fallthru
      _
    // Predicated region
    $region38: #{tpu_custom_call.1} parent=1 // pred_check
      _
    $region39: #{tpu_custom_call.1} parent=1 // pred_check_branch
      %3968 = sbr.rel (0) target = $region41
    $region40: #{tpu_custom_call.1} parent=1 // pred_region
      %3969 = dma.done [#allocation4], 32
    $region41: #{tpu_custom_call.1} parent=1 // pred_fallthru
      _
    %3970 = vsyncpa [#allocation3], 1
    %3971 = vsyncpa [#allocation4], 1

</llo_original>
